<compile_context>
chip_gen: v7x
topology: tpu7x:2x2x1
jax: 0.10.0
libtpu: 0.0.40
codegen_flags: <defaults>
</compile_context>

<pallas_src>
import functools

import jax
import jax.numpy as jnp
from jax.experimental import pallas as pl
from jax.experimental.pallas import tpu as pltpu  # noqa: F401  (TPU backend import)


# ----------------------------- model config ---------------------------------
CFG = dict(
    vocab=50,
    max_pos=16,
    type_vocab=2,
    hidden=128,
    heads=2,
    intermediate=256,
    layers=2,
    n_classes=2,
    eps=1e-12,
)

CLS_PAD = 128    # pad classifier output to a full lane width (lane-dense store)
VOCAB_PAD = 64   # pad the vocab so the one-hot embedding matmul has a tidy K


def _gelu(x):
    # tanh-approximate GELU (EUP-friendly).  TODO(synk): HF BERT default is the
    # exact erf GELU; tanh approximation used here for TPU lowering.
    c = 0.7978845608028654  # sqrt(2/pi)
    return 0.5 * x * (1.0 + jnp.tanh(c * (x + 0.044715 * x * x * x)))


# ------------------------------ fused Pallas kernel --------------------------
# Packed small-parameter slab layout (rows of a (19, 3H) f32 array):
#   row 0: emb_ln_gamma   row 1: emb_ln_beta   row 2: cls_bias (lane-padded)
#   per layer l (base = 3 + 8*l):
#     +0 bqkv(3H)  +1 bo(H)  +2 ln1_g(H)  +3 ln1_b(H)
#     +4 bi(I)     +5 bd(H)  +6 ln2_g(H)  +7 ln2_b(H)
def _bert_encoder_kernel(
    ids_ref, mask_ref,
    wemb_ref, pte_ref,
    wqkv_ref, wo_ref, wi_ref, wd_ref,
    cls_w_ref, vecs_ref,
    out_ref,
    *, batch, seq, heads, eps,
):
    """Entire BERT encoder + classifier, resident in VMEM, single grid step."""
    BS = batch * seq
    H = wemb_ref.shape[1]
    hd = H // heads
    scale = 1.0 / float(hd) ** 0.5
    n_layers = wqkv_ref.shape[0]
    inter_dim = wi_ref.shape[2]
    vocab_pad = wemb_ref.shape[0]

    def vrow(row, width):
        # static (1, width) slice of the consolidated small-parameter slab
        return vecs_ref[row:row + 1, :width]

    def layer_norm(z, g, b):
        mean = jnp.mean(z, axis=-1, keepdims=True)
        zc = z - mean
        var = jnp.mean(zc * zc, axis=-1, keepdims=True)
        return zc * jax.lax.rsqrt(var + eps) * g + b

    # ---- in-kernel embedding lookup: one-hot matmul gather (bf16 MXU) ----
    ids = ids_ref[...]                                                  # (BS, 1) i32
    iota = jax.lax.broadcasted_iota(jnp.int32, (BS, vocab_pad), 1)
    onehot = jnp.where(iota == ids, 1.0, 0.0).astype(jnp.bfloat16)      # (BS, Vpad)
    emb = jnp.dot(onehot, wemb_ref[...],
                  preferred_element_type=jnp.float32)                    # (BS, H) f32
    # pos + token-type(=0) embeddings pre-summed into pte_ref (max_pos, H)
    # TODO(synk): token_type_ids assumed all-zero (matches the reference usage).
    emb = (emb.reshape(batch, seq, H) + pte_ref[0:seq, :][None, :, :]).reshape(BS, H)

    # ---- embedding LayerNorm (f32) ----
    x = layer_norm(emb, vrow(0, H), vrow(1, H))

    # ---- additive attention bias, broadcast ONCE to (B, S, S) and reused ----
    bias = jnp.broadcast_to(((1.0 - mask_ref[...]) * -10000.0)[:, None, :],
                            (batch, seq, seq))

    for l in range(n_layers):  # unrolled at trace time (2 layers)
        base = 3 + 8 * l

        # ---- fused QKV projection: bf16 operands, f32 accumulate ----
        qkv = jnp.dot(x.astype(jnp.bfloat16), wqkv_ref[l],
                      preferred_element_type=jnp.float32) + vrow(base + 0, 3 * H)
        qkvb = qkv.astype(jnp.bfloat16)

        # ---- attention, batched over the batch dim, looped over heads ----
        # TODO(synk): head_dim=64 < 128-lane width forces half-width column
        # slices; an explicit-head-axis einsum needs 2 batch dims and was
        # avoided for Mosaic lowering safety.
        ctx_parts = []
        for h in range(heads):
            q_h = qkvb[:, h * hd:(h + 1) * hd].reshape(batch, seq, hd)
            k_h = qkvb[:, H + h * hd:H + (h + 1) * hd].reshape(batch, seq, hd)
            v_h = qkvb[:, 2 * H + h * hd:2 * H + (h + 1) * hd].reshape(batch, seq, hd)

            s = jnp.einsum("bqd,bkd->bqk", q_h, k_h,
                           preferred_element_type=jnp.float32) * scale + bias
            m = jnp.max(s, axis=-1, keepdims=True)
            e = jnp.exp(s - m)
            p = e * pl.reciprocal(jnp.sum(e, axis=-1, keepdims=True), approx=True)

            ctx_h = jnp.einsum("bqk,bkd->bqd", p.astype(jnp.bfloat16), v_h,
                               preferred_element_type=jnp.float32)
            ctx_parts.append(ctx_h.reshape(BS, hd))

        # lane-dense (BS, H) context -> ONE K=H output projection dot
        ctx = jnp.concatenate(ctx_parts, axis=-1).astype(jnp.bfloat16)
        attn = jnp.dot(ctx, wo_ref[l],
                       preferred_element_type=jnp.float32) + vrow(base + 1, H)

        # ---- residual + LayerNorm (fused epilogue) ----
        x = layer_norm(attn + x, vrow(base + 2, H), vrow(base + 3, H))

        # ---- feed-forward with fused GELU + residual + LayerNorm ----
        inter = _gelu(jnp.dot(x.astype(jnp.bfloat16), wi_ref[l],
                              preferred_element_type=jnp.float32)
                      + vrow(base + 4, inter_dim))
        ffn = jnp.dot(inter.astype(jnp.bfloat16), wd_ref[l],
                      preferred_element_type=jnp.float32) + vrow(base + 5, H)
        x = layer_norm(ffn + x, vrow(base + 6, H), vrow(base + 7, H))

    # ---- classifier head on the [CLS] rows only (lane-padded to 128) ----
    x_cls = x.reshape(batch, seq, H)[:, 0, :].astype(jnp.bfloat16)      # (B, H)
    logits = jnp.dot(x_cls, cls_w_ref[...],
                     preferred_element_type=jnp.float32) + vrow(2, out_ref.shape[1])
    out_ref[...] = logits.astype(out_ref.dtype)


# ------------------------------ parameter init -------------------------------
def init_params(key, cfg):
    H = cfg["hidden"]
    I = cfg["intermediate"]

    keys = iter(jax.random.split(key, 256))

    def w(shape, scale=0.02):
        return (scale * jax.random.normal(next(keys), shape)).astype(jnp.float32)

    def zeros(shape):
        return jnp.zeros(shape, jnp.float32)

    def ones(shape):
        return jnp.ones(shape, jnp.float32)

    params = dict(
        word_emb=w((cfg["vocab"], H)),
        pos_emb=w((cfg["max_pos"], H)),
        type_emb=w((cfg["type_vocab"], H)),
        emb_ln_g=ones((1, H)),
        emb_ln_b=zeros((1, H)),
        layers=[],
        cls_w=w((H, cfg["n_classes"])),
        cls_b=zeros((1, cfg["n_classes"])),
    )
    for _ in range(cfg["layers"]):
        params["layers"].append(
            dict(
                wq=w((H, H)), bq=zeros((1, H)),
                wk=w((H, H)), bk=zeros((1, H)),
                wv=w((H, H)), bv=zeros((1, H)),
                wo=w((H, H)), bo=zeros((1, H)),
                ln1_g=ones((1, H)), ln1_b=zeros((1, H)),
                wi=w((H, I)), bi=zeros((1, I)),
                wd=w((I, H)), bd=zeros((1, H)),
                ln2_g=ones((1, H)), ln2_b=zeros((1, H)),
            )
        )
    return params


def pack_params(params, cfg):
    """Pack weights into bf16 slabs + one consolidated f32 small-param slab."""
    H = cfg["hidden"]
    n_cls = cfg["n_classes"]
    V3H = 3 * H
    layers = params["layers"]

    def pad_row(v):
        v = jnp.asarray(v, jnp.float32).reshape(1, -1)
        return jnp.pad(v, ((0, 0), (0, V3H - v.shape[1])))

    cls_b_pad = jnp.zeros((1, CLS_PAD), jnp.float32).at[:, :n_cls].set(params["cls_b"])

    rows = [pad_row(params["emb_ln_g"]), pad_row(params["emb_ln_b"]), pad_row(cls_b_pad)]
    for l in layers:
        rows += [
            pad_row(jnp.concatenate([l["bq"], l["bk"], l["bv"]], axis=1)),
            pad_row(l["bo"]), pad_row(l["ln1_g"]), pad_row(l["ln1_b"]),
            pad_row(l["bi"]), pad_row(l["bd"]), pad_row(l["ln2_g"]), pad_row(l["ln2_b"]),
        ]
    vecs = jnp.concatenate(rows, axis=0)                        # (3 + 8*L, 3H) f32

    word_emb_pad = (jnp.zeros((VOCAB_PAD, H), jnp.float32)
                    .at[:cfg["vocab"], :].set(params["word_emb"]))
    cls_w_pad = jnp.zeros((H, CLS_PAD), jnp.float32).at[:, :n_cls].set(params["cls_w"])

    bf = lambda a: a.astype(jnp.bfloat16)
    return dict(
        word_emb=bf(word_emb_pad),
        pos_type_emb=(params["pos_emb"] + params["type_emb"][0:1]).astype(jnp.float32),
        wqkv=bf(jnp.stack(
            [jnp.concatenate([l["wq"], l["wk"], l["wv"]], axis=1) for l in layers])),
        wo=bf(jnp.stack([l["wo"] for l in layers])),
        wi=bf(jnp.stack([l["wi"] for l in layers])),
        wd=bf(jnp.stack([l["wd"] for l in layers])),
        cls_w=bf(cls_w_pad),
        vecs=vecs,
    )


# ------------------------------- forward pass --------------------------------
def bert_classifier_forward(packed, input_ids, attention_mask, cfg):
    B, S = input_ids.shape

    ids = input_ids.reshape(B * S, 1).astype(jnp.int32)
    mask = attention_mask.astype(jnp.float32)

    kernel = functools.partial(
        _bert_encoder_kernel,
        batch=B, seq=S, heads=cfg["heads"], eps=cfg["eps"],
    )

    # Single gridless pallas_call: all operands placed whole in VMEM
    # (~0.6 MB bf16 weights + KB-scale activations, far under every chip's limit).
    logits_pad = pl.pallas_call(
        kernel,
        out_shape=jax.ShapeDtypeStruct((B, CLS_PAD), jnp.float32),
    )(
        ids, mask,
        packed["word_emb"], packed["pos_type_emb"],
        packed["wqkv"], packed["wo"], packed["wi"], packed["wd"],
        packed["cls_w"], packed["vecs"],
    )

    # query_cls_embeddings = hidden_states[:, 0, :]  ->  classifier logits.
    return logits_pad[:, :cfg["n_classes"]]


# ---------------------------------- main --------------------------------------
if __name__ == "__main__":
    B, S = 2, 8
    key = jax.random.PRNGKey(0)
    k_param, k_ids = jax.random.split(key)

    params = init_params(k_param, CFG)
    packed = pack_params(params, CFG)

    input_ids = jax.random.randint(k_ids, (B, S), 0, CFG["vocab"], dtype=jnp.int32)
    # second sequence has 3 padding positions masked out
    attention_mask = jnp.array(
        [[1, 1, 1, 1, 1, 1, 1, 1],
         [1, 1, 1, 1, 1, 0, 0, 0]],
        dtype=jnp.int32,
    )

    fwd = jax.jit(functools.partial(bert_classifier_forward, cfg=CFG))
    logits = fwd(packed, input_ids, attention_mask)
    jax.block_until_ready(logits)

    assert logits.shape == (B, CFG["n_classes"])
    assert bool(jnp.all(jnp.isfinite(logits)))
    print("KERNEL_OK")
</pallas_src>

<mosaic_0001>
module attributes {stable_mosaic.version = 11 : i64} {
  func.func @_bert_encoder_kernel(%arg0: memref<16x1xi32, #tpu.memory_space<vmem>>, %arg1: memref<2x8xf32, #tpu.memory_space<vmem>>, %arg2: memref<64x128xbf16, #tpu.memory_space<vmem>>, %arg3: memref<16x128xf32, #tpu.memory_space<vmem>>, %arg4: memref<2x128x384xbf16, #tpu.memory_space<vmem>>, %arg5: memref<2x128x128xbf16, #tpu.memory_space<vmem>>, %arg6: memref<2x128x256xbf16, #tpu.memory_space<vmem>>, %arg7: memref<2x256x128xbf16, #tpu.memory_space<vmem>>, %arg8: memref<128x128xbf16, #tpu.memory_space<vmem>>, %arg9: memref<19x384xf32, #tpu.memory_space<vmem>>, %arg10: memref<2x128xf32, #tpu.memory_space<vmem>>) attributes {dimension_semantics = [], scalar_prefetch = 0 : i64, scratch_operands = 0 : i64, tpu.core_type = #tpu.core_type<tc>} {
    %c0 = arith.constant 0 : index
    %c0_0 = arith.constant 0 : index
    %0 = vector.load %arg0[%c0, %c0_0] : memref<16x1xi32, #tpu.memory_space<vmem>>, vector<16x1xi32>
    %1 = tpu.iota {dimensions = array<i32: 1>} : vector<16x64xi32>
    %2 = vector.broadcast %0 : vector<16x1xi32> to vector<16x64xi32>
    %3 = arith.cmpi eq, %1, %2 : vector<16x64xi32>
    %cst = arith.constant 1.000000e+00 : f32
    %cst_1 = arith.constant 0.000000e+00 : f32
    %4 = vector.broadcast %cst : f32 to vector<16x64xf32>
    %5 = vector.broadcast %cst_1 : f32 to vector<16x64xf32>
    %6 = arith.select %3, %4, %5 : vector<16x64xi1>, vector<16x64xf32>
    %7 = arith.truncf %6 : vector<16x64xf32> to vector<16x64xbf16>
    %c0_2 = arith.constant 0 : index
    %c0_3 = arith.constant 0 : index
    %8 = vector.load %arg2[%c0_2, %c0_3] : memref<64x128xbf16, #tpu.memory_space<vmem>>, vector<64x128xbf16>
    %cst_4 = arith.constant dense<0.000000e+00> : vector<16x128xf32>
    %9 = tpu.matmul %7, %8, %cst_4 {dimension_numbers = #tpu.dot_dimension_numbers<[1], [0], [0], [1], [0, 0, 1, 1], [], []>} : vector<16x64xbf16>, vector<64x128xbf16>, vector<16x128xf32> -> vector<16x128xf32>
    %10 = vector.shape_cast %9 : vector<16x128xf32> to vector<2x8x128xf32>
    %c0_5 = arith.constant 0 : index
    %c0_6 = arith.constant 0 : index
    %11 = vector.load %arg3[%c0_5, %c0_6] : memref<16x128xf32, #tpu.memory_space<vmem>>, vector<8x128xf32>
    %12 = vector.shape_cast %11 : vector<8x128xf32> to vector<1x8x128xf32>
    %13 = vector.broadcast %12 : vector<1x8x128xf32> to vector<2x8x128xf32>
    %14 = arith.addf %10, %13 : vector<2x8x128xf32>
    %15 = vector.shape_cast %14 : vector<2x8x128xf32> to vector<16x128xf32>
    %c0_7 = arith.constant 0 : index
    %c0_8 = arith.constant 0 : index
    %16 = vector.load %arg9[%c0_7, %c0_8] : memref<19x384xf32, #tpu.memory_space<vmem>>, vector<1x128xf32>
    %c1 = arith.constant 1 : index
    %c0_9 = arith.constant 0 : index
    %17 = vector.load %arg9[%c1, %c0_9] : memref<19x384xf32, #tpu.memory_space<vmem>>, vector<1x128xf32>
    %cst_10 = arith.constant dense<0.000000e+00> : vector<16xf32>
    %18 = vector.multi_reduction <add>, %15, %cst_10 [1] : vector<16x128xf32> to vector<16xf32>
    %19 = vector.shape_cast %18 : vector<16xf32> to vector<16x1xf32>
    %cst_11 = arith.constant 1.280000e+02 : f32
    %20 = vector.broadcast %cst_11 : f32 to vector<16x1xf32>
    %21 = arith.divf %19, %20 : vector<16x1xf32>
    %22 = vector.broadcast %21 : vector<16x1xf32> to vector<16x128xf32>
    %23 = arith.subf %15, %22 : vector<16x128xf32>
    %24 = arith.mulf %23, %23 : vector<16x128xf32>
    %cst_12 = arith.constant dense<0.000000e+00> : vector<16xf32>
    %25 = vector.multi_reduction <add>, %24, %cst_12 [1] : vector<16x128xf32> to vector<16xf32>
    %26 = vector.shape_cast %25 : vector<16xf32> to vector<16x1xf32>
    %cst_13 = arith.constant 1.280000e+02 : f32
    %27 = vector.broadcast %cst_13 : f32 to vector<16x1xf32>
    %28 = arith.divf %26, %27 : vector<16x1xf32>
    %cst_14 = arith.constant 9.99999996E-13 : f32
    %29 = vector.broadcast %cst_14 : f32 to vector<16x1xf32>
    %30 = arith.addf %28, %29 : vector<16x1xf32>
    %31 = math.rsqrt %30 : vector<16x1xf32>
    %32 = vector.broadcast %31 : vector<16x1xf32> to vector<16x128xf32>
    %33 = arith.mulf %23, %32 : vector<16x128xf32>
    %34 = vector.broadcast %16 : vector<1x128xf32> to vector<16x128xf32>
    %35 = arith.mulf %33, %34 : vector<16x128xf32>
    %36 = vector.broadcast %17 : vector<1x128xf32> to vector<16x128xf32>
    %37 = arith.addf %35, %36 : vector<16x128xf32>
    %c0_15 = arith.constant 0 : index
    %c0_16 = arith.constant 0 : index
    %38 = vector.load %arg1[%c0_15, %c0_16] : memref<2x8xf32, #tpu.memory_space<vmem>>, vector<2x8xf32>
    %cst_17 = arith.constant 1.000000e+00 : f32
    %39 = vector.broadcast %cst_17 : f32 to vector<2x8xf32>
    %40 = arith.subf %39, %38 : vector<2x8xf32>
    %cst_18 = arith.constant -1.000000e+04 : f32
    %41 = vector.broadcast %cst_18 : f32 to vector<2x8xf32>
    %42 = arith.mulf %40, %41 : vector<2x8xf32>
    %43 = vector.shape_cast %42 : vector<2x8xf32> to vector<2x1x8xf32>
    %44 = vector.shape_cast %43 : vector<2x1x8xf32> to vector<2x1x8xf32>
    %45 = vector.broadcast %44 : vector<2x1x8xf32> to vector<2x8x8xf32>
    %46 = arith.truncf %37 : vector<16x128xf32> to vector<16x128xbf16>
    %c0_19 = arith.constant 0 : index
    %c0_20 = arith.constant 0 : index
    %c0_21 = arith.constant 0 : index
    %47 = vector.load %arg4[%c0_19, %c0_20, %c0_21] : memref<2x128x384xbf16, #tpu.memory_space<vmem>>, vector<1x128x384xbf16>
    %48 = vector.shape_cast %47 : vector<1x128x384xbf16> to vector<128x384xbf16>
    %cst_22 = arith.constant dense<0.000000e+00> : vector<16x384xf32>
    %49 = tpu.matmul %46, %48, %cst_22 {dimension_numbers = #tpu.dot_dimension_numbers<[1], [0], [0], [1], [0, 0, 1, 1], [], []>} : vector<16x128xbf16>, vector<128x384xbf16>, vector<16x384xf32> -> vector<16x384xf32>
    %c3 = arith.constant 3 : index
    %c0_23 = arith.constant 0 : index
    %50 = vector.load %arg9[%c3, %c0_23] : memref<19x384xf32, #tpu.memory_space<vmem>>, vector<1x384xf32>
    %51 = vector.broadcast %50 : vector<1x384xf32> to vector<16x384xf32>
    %52 = arith.addf %49, %51 : vector<16x384xf32>
    %53 = arith.truncf %52 : vector<16x384xf32> to vector<16x384xbf16>
    %54 = vector.extract_strided_slice %53 {offsets = [0, 0], sizes = [16, 64], strides = [1, 1]} : vector<16x384xbf16> to vector<16x64xbf16>
    %55 = vector.shape_cast %54 : vector<16x64xbf16> to vector<2x8x64xbf16>
    %56 = vector.extract_strided_slice %53 {offsets = [0, 128], sizes = [16, 64], strides = [1, 1]} : vector<16x384xbf16> to vector<16x64xbf16>
    %57 = vector.shape_cast %56 : vector<16x64xbf16> to vector<2x8x64xbf16>
    %58 = vector.extract_strided_slice %53 {offsets = [0, 256], sizes = [16, 64], strides = [1, 1]} : vector<16x384xbf16> to vector<16x64xbf16>
    %59 = vector.shape_cast %58 : vector<16x64xbf16> to vector<2x8x64xbf16>
    "tpu.trace_start"() <{level = 10 : i32, message = "bqd,bkd->bqk"}> : () -> ()
    %cst_24 = arith.constant dense<0.000000e+00> : vector<2x8x8xf32>
    %60 = tpu.matmul %55, %57, %cst_24 {dimension_numbers = #tpu.dot_dimension_numbers<[2], [2], [1], [1], [0, 0, 0, 1, 1, 1], [0], [0]>} : vector<2x8x64xbf16>, vector<2x8x64xbf16>, vector<2x8x8xf32> -> vector<2x8x8xf32>
    "tpu.trace_stop"() : () -> ()
    %cst_25 = arith.constant 1.250000e-01 : f32
    %61 = vector.broadcast %cst_25 : f32 to vector<2x8x8xf32>
    %62 = arith.mulf %60, %61 : vector<2x8x8xf32>
    %63 = arith.addf %62, %45 : vector<2x8x8xf32>
    %cst_26 = arith.constant dense<0xFF800000> : vector<2x8xf32>
    %64 = vector.multi_reduction <maximumf>, %63, %cst_26 [2] : vector<2x8x8xf32> to vector<2x8xf32>
    %65 = vector.shape_cast %64 : vector<2x8xf32> to vector<2x8x1xf32>
    %66 = vector.broadcast %65 : vector<2x8x1xf32> to vector<2x8x8xf32>
    %67 = arith.subf %63, %66 : vector<2x8x8xf32>
    %68 = math.exp %67 : vector<2x8x8xf32>
    %cst_27 = arith.constant dense<0.000000e+00> : vector<2x8xf32>
    %69 = vector.multi_reduction <add>, %68, %cst_27 [2] : vector<2x8x8xf32> to vector<2x8xf32>
    %70 = vector.shape_cast %69 : vector<2x8xf32> to vector<2x8x1xf32>
    %71 = tpu.reciprocal %70 {approx = true} : vector<2x8x1xf32> -> vector<2x8x1xf32>
    %72 = vector.broadcast %71 : vector<2x8x1xf32> to vector<2x8x8xf32>
    %73 = arith.mulf %68, %72 : vector<2x8x8xf32>
    %74 = arith.truncf %73 : vector<2x8x8xf32> to vector<2x8x8xbf16>
    "tpu.trace_start"() <{level = 10 : i32, message = "bqk,bkd->bqd"}> : () -> ()
    %cst_28 = arith.constant dense<0.000000e+00> : vector<2x8x64xf32>
    %75 = tpu.matmul %74, %59, %cst_28 {dimension_numbers = #tpu.dot_dimension_numbers<[2], [1], [1], [2], [0, 0, 0, 1, 1, 2], [0], [0]>} : vector<2x8x8xbf16>, vector<2x8x64xbf16>, vector<2x8x64xf32> -> vector<2x8x64xf32>
    "tpu.trace_stop"() : () -> ()
    %76 = vector.shape_cast %75 : vector<2x8x64xf32> to vector<16x64xf32>
    %77 = vector.extract_strided_slice %53 {offsets = [0, 64], sizes = [16, 64], strides = [1, 1]} : vector<16x384xbf16> to vector<16x64xbf16>
    %78 = vector.shape_cast %77 : vector<16x64xbf16> to vector<2x8x64xbf16>
    %79 = vector.extract_strided_slice %53 {offsets = [0, 192], sizes = [16, 64], strides = [1, 1]} : vector<16x384xbf16> to vector<16x64xbf16>
    %80 = vector.shape_cast %79 : vector<16x64xbf16> to vector<2x8x64xbf16>
    %81 = vector.extract_strided_slice %53 {offsets = [0, 320], sizes = [16, 64], strides = [1, 1]} : vector<16x384xbf16> to vector<16x64xbf16>
    %82 = vector.shape_cast %81 : vector<16x64xbf16> to vector<2x8x64xbf16>
    "tpu.trace_start"() <{level = 10 : i32, message = "bqd,bkd->bqk"}> : () -> ()
    %cst_29 = arith.constant dense<0.000000e+00> : vector<2x8x8xf32>
    %83 = tpu.matmul %78, %80, %cst_29 {dimension_numbers = #tpu.dot_dimension_numbers<[2], [2], [1], [1], [0, 0, 0, 1, 1, 1], [0], [0]>} : vector<2x8x64xbf16>, vector<2x8x64xbf16>, vector<2x8x8xf32> -> vector<2x8x8xf32>
    "tpu.trace_stop"() : () -> ()
    %cst_30 = arith.constant 1.250000e-01 : f32
    %84 = vector.broadcast %cst_30 : f32 to vector<2x8x8xf32>
    %85 = arith.mulf %83, %84 : vector<2x8x8xf32>
    %86 = arith.addf %85, %45 : vector<2x8x8xf32>
    %cst_31 = arith.constant dense<0xFF800000> : vector<2x8xf32>
    %87 = vector.multi_reduction <maximumf>, %86, %cst_31 [2] : vector<2x8x8xf32> to vector<2x8xf32>
    %88 = vector.shape_cast %87 : vector<2x8xf32> to vector<2x8x1xf32>
    %89 = vector.broadcast %88 : vector<2x8x1xf32> to vector<2x8x8xf32>
    %90 = arith.subf %86, %89 : vector<2x8x8xf32>
    %91 = math.exp %90 : vector<2x8x8xf32>
    %cst_32 = arith.constant dense<0.000000e+00> : vector<2x8xf32>
    %92 = vector.multi_reduction <add>, %91, %cst_32 [2] : vector<2x8x8xf32> to vector<2x8xf32>
    %93 = vector.shape_cast %92 : vector<2x8xf32> to vector<2x8x1xf32>
    %94 = tpu.reciprocal %93 {approx = true} : vector<2x8x1xf32> -> vector<2x8x1xf32>
    %95 = vector.broadcast %94 : vector<2x8x1xf32> to vector<2x8x8xf32>
    %96 = arith.mulf %91, %95 : vector<2x8x8xf32>
    %97 = arith.truncf %96 : vector<2x8x8xf32> to vector<2x8x8xbf16>
    "tpu.trace_start"() <{level = 10 : i32, message = "bqk,bkd->bqd"}> : () -> ()
    %cst_33 = arith.constant dense<0.000000e+00> : vector<2x8x64xf32>
    %98 = tpu.matmul %97, %82, %cst_33 {dimension_numbers = #tpu.dot_dimension_numbers<[2], [1], [1], [2], [0, 0, 0, 1, 1, 2], [0], [0]>} : vector<2x8x8xbf16>, vector<2x8x64xbf16>, vector<2x8x64xf32> -> vector<2x8x64xf32>
    "tpu.trace_stop"() : () -> ()
    %99 = vector.shape_cast %98 : vector<2x8x64xf32> to vector<16x64xf32>
    %100 = tpu.concatenate %76, %99 in 1 : vector<16x64xf32>, vector<16x64xf32> -> vector<16x128xf32>
    %101 = arith.truncf %100 : vector<16x128xf32> to vector<16x128xbf16>
    %c0_34 = arith.constant 0 : index
    %c0_35 = arith.constant 0 : index
    %c0_36 = arith.constant 0 : index
    %102 = vector.load %arg5[%c0_34, %c0_35, %c0_36] : memref<2x128x128xbf16, #tpu.memory_space<vmem>>, vector<1x128x128xbf16>
    %103 = vector.shape_cast %102 : vector<1x128x128xbf16> to vector<128x128xbf16>
    %cst_37 = arith.constant dense<0.000000e+00> : vector<16x128xf32>
    %104 = tpu.matmul %101, %103, %cst_37 {dimension_numbers = #tpu.dot_dimension_numbers<[1], [0], [0], [1], [0, 0, 1, 1], [], []>} : vector<16x128xbf16>, vector<128x128xbf16>, vector<16x128xf32> -> vector<16x128xf32>
    %c4 = arith.constant 4 : index
    %c0_38 = arith.constant 0 : index
    %105 = vector.load %arg9[%c4, %c0_38] : memref<19x384xf32, #tpu.memory_space<vmem>>, vector<1x128xf32>
    %106 = vector.broadcast %105 : vector<1x128xf32> to vector<16x128xf32>
    %107 = arith.addf %104, %106 : vector<16x128xf32>
    %108 = arith.addf %107, %37 : vector<16x128xf32>
    %c5 = arith.constant 5 : index
    %c0_39 = arith.constant 0 : index
    %109 = vector.load %arg9[%c5, %c0_39] : memref<19x384xf32, #tpu.memory_space<vmem>>, vector<1x128xf32>
    %c6 = arith.constant 6 : index
    %c0_40 = arith.constant 0 : index
    %110 = vector.load %arg9[%c6, %c0_40] : memref<19x384xf32, #tpu.memory_space<vmem>>, vector<1x128xf32>
    %cst_41 = arith.constant dense<0.000000e+00> : vector<16xf32>
    %111 = vector.multi_reduction <add>, %108, %cst_41 [1] : vector<16x128xf32> to vector<16xf32>
    %112 = vector.shape_cast %111 : vector<16xf32> to vector<16x1xf32>
    %cst_42 = arith.constant 1.280000e+02 : f32
    %113 = vector.broadcast %cst_42 : f32 to vector<16x1xf32>
    %114 = arith.divf %112, %113 : vector<16x1xf32>
    %115 = vector.broadcast %114 : vector<16x1xf32> to vector<16x128xf32>
    %116 = arith.subf %108, %115 : vector<16x128xf32>
    %117 = arith.mulf %116, %116 : vector<16x128xf32>
    %cst_43 = arith.constant dense<0.000000e+00> : vector<16xf32>
    %118 = vector.multi_reduction <add>, %117, %cst_43 [1] : vector<16x128xf32> to vector<16xf32>
    %119 = vector.shape_cast %118 : vector<16xf32> to vector<16x1xf32>
    %cst_44 = arith.constant 1.280000e+02 : f32
    %120 = vector.broadcast %cst_44 : f32 to vector<16x1xf32>
    %121 = arith.divf %119, %120 : vector<16x1xf32>
    %cst_45 = arith.constant 9.99999996E-13 : f32
    %122 = vector.broadcast %cst_45 : f32 to vector<16x1xf32>
    %123 = arith.addf %121, %122 : vector<16x1xf32>
    %124 = math.rsqrt %123 : vector<16x1xf32>
    %125 = vector.broadcast %124 : vector<16x1xf32> to vector<16x128xf32>
    %126 = arith.mulf %116, %125 : vector<16x128xf32>
    %127 = vector.broadcast %109 : vector<1x128xf32> to vector<16x128xf32>
    %128 = arith.mulf %126, %127 : vector<16x128xf32>
    %129 = vector.broadcast %110 : vector<1x128xf32> to vector<16x128xf32>
    %130 = arith.addf %128, %129 : vector<16x128xf32>
    %131 = arith.truncf %130 : vector<16x128xf32> to vector<16x128xbf16>
    %c0_46 = arith.constant 0 : index
    %c0_47 = arith.constant 0 : index
    %c0_48 = arith.constant 0 : index
    %132 = vector.load %arg6[%c0_46, %c0_47, %c0_48] : memref<2x128x256xbf16, #tpu.memory_space<vmem>>, vector<1x128x256xbf16>
    %133 = vector.shape_cast %132 : vector<1x128x256xbf16> to vector<128x256xbf16>
    %cst_49 = arith.constant dense<0.000000e+00> : vector<16x256xf32>
    %134 = tpu.matmul %131, %133, %cst_49 {dimension_numbers = #tpu.dot_dimension_numbers<[1], [0], [0], [1], [0, 0, 1, 1], [], []>} : vector<16x128xbf16>, vector<128x256xbf16>, vector<16x256xf32> -> vector<16x256xf32>
    %c7 = arith.constant 7 : index
    %c0_50 = arith.constant 0 : index
    %135 = vector.load %arg9[%c7, %c0_50] : memref<19x384xf32, #tpu.memory_space<vmem>>, vector<1x256xf32>
    %136 = vector.broadcast %135 : vector<1x256xf32> to vector<16x256xf32>
    %137 = arith.addf %134, %136 : vector<16x256xf32>
    %cst_51 = arith.constant 5.000000e-01 : f32
    %138 = vector.broadcast %cst_51 : f32 to vector<16x256xf32>
    %139 = arith.mulf %138, %137 : vector<16x256xf32>
    %cst_52 = arith.constant 4.471500e-02 : f32
    %140 = vector.broadcast %cst_52 : f32 to vector<16x256xf32>
    %141 = arith.mulf %140, %137 : vector<16x256xf32>
    %142 = arith.mulf %141, %137 : vector<16x256xf32>
    %143 = arith.mulf %142, %137 : vector<16x256xf32>
    %144 = arith.addf %137, %143 : vector<16x256xf32>
    %cst_53 = arith.constant 0.797884583 : f32
    %145 = vector.broadcast %cst_53 : f32 to vector<16x256xf32>
    %146 = arith.mulf %145, %144 : vector<16x256xf32>
    %147 = math.tanh %146 : vector<16x256xf32>
    %cst_54 = arith.constant 1.000000e+00 : f32
    %148 = vector.broadcast %cst_54 : f32 to vector<16x256xf32>
    %149 = arith.addf %148, %147 : vector<16x256xf32>
    %150 = arith.mulf %139, %149 : vector<16x256xf32>
    %151 = arith.truncf %150 : vector<16x256xf32> to vector<16x256xbf16>
    %c0_55 = arith.constant 0 : index
    %c0_56 = arith.constant 0 : index
    %c0_57 = arith.constant 0 : index
    %152 = vector.load %arg7[%c0_55, %c0_56, %c0_57] : memref<2x256x128xbf16, #tpu.memory_space<vmem>>, vector<1x256x128xbf16>
    %153 = vector.shape_cast %152 : vector<1x256x128xbf16> to vector<256x128xbf16>
    %cst_58 = arith.constant dense<0.000000e+00> : vector<16x128xf32>
    %154 = tpu.matmul %151, %153, %cst_58 {dimension_numbers = #tpu.dot_dimension_numbers<[1], [0], [0], [1], [0, 0, 1, 1], [], []>} : vector<16x256xbf16>, vector<256x128xbf16>, vector<16x128xf32> -> vector<16x128xf32>
    %c8 = arith.constant 8 : index
    %c0_59 = arith.constant 0 : index
    %155 = vector.load %arg9[%c8, %c0_59] : memref<19x384xf32, #tpu.memory_space<vmem>>, vector<1x128xf32>
    %156 = vector.broadcast %155 : vector<1x128xf32> to vector<16x128xf32>
    %157 = arith.addf %154, %156 : vector<16x128xf32>
    %158 = arith.addf %157, %130 : vector<16x128xf32>
    %c9 = arith.constant 9 : index
    %c0_60 = arith.constant 0 : index
    %159 = vector.load %arg9[%c9, %c0_60] : memref<19x384xf32, #tpu.memory_space<vmem>>, vector<1x128xf32>
    %c10 = arith.constant 10 : index
    %c0_61 = arith.constant 0 : index
    %160 = vector.load %arg9[%c10, %c0_61] : memref<19x384xf32, #tpu.memory_space<vmem>>, vector<1x128xf32>
    %cst_62 = arith.constant dense<0.000000e+00> : vector<16xf32>
    %161 = vector.multi_reduction <add>, %158, %cst_62 [1] : vector<16x128xf32> to vector<16xf32>
    %162 = vector.shape_cast %161 : vector<16xf32> to vector<16x1xf32>
    %cst_63 = arith.constant 1.280000e+02 : f32
    %163 = vector.broadcast %cst_63 : f32 to vector<16x1xf32>
    %164 = arith.divf %162, %163 : vector<16x1xf32>
    %165 = vector.broadcast %164 : vector<16x1xf32> to vector<16x128xf32>
    %166 = arith.subf %158, %165 : vector<16x128xf32>
    %167 = arith.mulf %166, %166 : vector<16x128xf32>
    %cst_64 = arith.constant dense<0.000000e+00> : vector<16xf32>
    %168 = vector.multi_reduction <add>, %167, %cst_64 [1] : vector<16x128xf32> to vector<16xf32>
    %169 = vector.shape_cast %168 : vector<16xf32> to vector<16x1xf32>
    %cst_65 = arith.constant 1.280000e+02 : f32
    %170 = vector.broadcast %cst_65 : f32 to vector<16x1xf32>
    %171 = arith.divf %169, %170 : vector<16x1xf32>
    %cst_66 = arith.constant 9.99999996E-13 : f32
    %172 = vector.broadcast %cst_66 : f32 to vector<16x1xf32>
    %173 = arith.addf %171, %172 : vector<16x1xf32>
    %174 = math.rsqrt %173 : vector<16x1xf32>
    %175 = vector.broadcast %174 : vector<16x1xf32> to vector<16x128xf32>
    %176 = arith.mulf %166, %175 : vector<16x128xf32>
    %177 = vector.broadcast %159 : vector<1x128xf32> to vector<16x128xf32>
    %178 = arith.mulf %176, %177 : vector<16x128xf32>
    %179 = vector.broadcast %160 : vector<1x128xf32> to vector<16x128xf32>
    %180 = arith.addf %178, %179 : vector<16x128xf32>
    %181 = arith.truncf %180 : vector<16x128xf32> to vector<16x128xbf16>
    %c1_67 = arith.constant 1 : index
    %c0_68 = arith.constant 0 : index
    %c0_69 = arith.constant 0 : index
    %182 = vector.load %arg4[%c1_67, %c0_68, %c0_69] : memref<2x128x384xbf16, #tpu.memory_space<vmem>>, vector<1x128x384xbf16>
    %183 = vector.shape_cast %182 : vector<1x128x384xbf16> to vector<128x384xbf16>
    %cst_70 = arith.constant dense<0.000000e+00> : vector<16x384xf32>
    %184 = tpu.matmul %181, %183, %cst_70 {dimension_numbers = #tpu.dot_dimension_numbers<[1], [0], [0], [1], [0, 0, 1, 1], [], []>} : vector<16x128xbf16>, vector<128x384xbf16>, vector<16x384xf32> -> vector<16x384xf32>
    %c11 = arith.constant 11 : index
    %c0_71 = arith.constant 0 : index
    %185 = vector.load %arg9[%c11, %c0_71] : memref<19x384xf32, #tpu.memory_space<vmem>>, vector<1x384xf32>
    %186 = vector.broadcast %185 : vector<1x384xf32> to vector<16x384xf32>
    %187 = arith.addf %184, %186 : vector<16x384xf32>
    %188 = arith.truncf %187 : vector<16x384xf32> to vector<16x384xbf16>
    %189 = vector.extract_strided_slice %188 {offsets = [0, 0], sizes = [16, 64], strides = [1, 1]} : vector<16x384xbf16> to vector<16x64xbf16>
    %190 = vector.shape_cast %189 : vector<16x64xbf16> to vector<2x8x64xbf16>
    %191 = vector.extract_strided_slice %188 {offsets = [0, 128], sizes = [16, 64], strides = [1, 1]} : vector<16x384xbf16> to vector<16x64xbf16>
    %192 = vector.shape_cast %191 : vector<16x64xbf16> to vector<2x8x64xbf16>
    %193 = vector.extract_strided_slice %188 {offsets = [0, 256], sizes = [16, 64], strides = [1, 1]} : vector<16x384xbf16> to vector<16x64xbf16>
    %194 = vector.shape_cast %193 : vector<16x64xbf16> to vector<2x8x64xbf16>
    "tpu.trace_start"() <{level = 10 : i32, message = "bqd,bkd->bqk"}> : () -> ()
    %cst_72 = arith.constant dense<0.000000e+00> : vector<2x8x8xf32>
    %195 = tpu.matmul %190, %192, %cst_72 {dimension_numbers = #tpu.dot_dimension_numbers<[2], [2], [1], [1], [0, 0, 0, 1, 1, 1], [0], [0]>} : vector<2x8x64xbf16>, vector<2x8x64xbf16>, vector<2x8x8xf32> -> vector<2x8x8xf32>
    "tpu.trace_stop"() : () -> ()
    %cst_73 = arith.constant 1.250000e-01 : f32
    %196 = vector.broadcast %cst_73 : f32 to vector<2x8x8xf32>
    %197 = arith.mulf %195, %196 : vector<2x8x8xf32>
    %198 = arith.addf %197, %45 : vector<2x8x8xf32>
    %cst_74 = arith.constant dense<0xFF800000> : vector<2x8xf32>
    %199 = vector.multi_reduction <maximumf>, %198, %cst_74 [2] : vector<2x8x8xf32> to vector<2x8xf32>
    %200 = vector.shape_cast %199 : vector<2x8xf32> to vector<2x8x1xf32>
    %201 = vector.broadcast %200 : vector<2x8x1xf32> to vector<2x8x8xf32>
    %202 = arith.subf %198, %201 : vector<2x8x8xf32>
    %203 = math.exp %202 : vector<2x8x8xf32>
    %cst_75 = arith.constant dense<0.000000e+00> : vector<2x8xf32>
    %204 = vector.multi_reduction <add>, %203, %cst_75 [2] : vector<2x8x8xf32> to vector<2x8xf32>
    %205 = vector.shape_cast %204 : vector<2x8xf32> to vector<2x8x1xf32>
    %206 = tpu.reciprocal %205 {approx = true} : vector<2x8x1xf32> -> vector<2x8x1xf32>
    %207 = vector.broadcast %206 : vector<2x8x1xf32> to vector<2x8x8xf32>
    %208 = arith.mulf %203, %207 : vector<2x8x8xf32>
    %209 = arith.truncf %208 : vector<2x8x8xf32> to vector<2x8x8xbf16>
    "tpu.trace_start"() <{level = 10 : i32, message = "bqk,bkd->bqd"}> : () -> ()
    %cst_76 = arith.constant dense<0.000000e+00> : vector<2x8x64xf32>
    %210 = tpu.matmul %209, %194, %cst_76 {dimension_numbers = #tpu.dot_dimension_numbers<[2], [1], [1], [2], [0, 0, 0, 1, 1, 2], [0], [0]>} : vector<2x8x8xbf16>, vector<2x8x64xbf16>, vector<2x8x64xf32> -> vector<2x8x64xf32>
    "tpu.trace_stop"() : () -> ()
    %211 = vector.shape_cast %210 : vector<2x8x64xf32> to vector<16x64xf32>
    %212 = vector.extract_strided_slice %188 {offsets = [0, 64], sizes = [16, 64], strides = [1, 1]} : vector<16x384xbf16> to vector<16x64xbf16>
    %213 = vector.shape_cast %212 : vector<16x64xbf16> to vector<2x8x64xbf16>
    %214 = vector.extract_strided_slice %188 {offsets = [0, 192], sizes = [16, 64], strides = [1, 1]} : vector<16x384xbf16> to vector<16x64xbf16>
    %215 = vector.shape_cast %214 : vector<16x64xbf16> to vector<2x8x64xbf16>
    %216 = vector.extract_strided_slice %188 {offsets = [0, 320], sizes = [16, 64], strides = [1, 1]} : vector<16x384xbf16> to vector<16x64xbf16>
    %217 = vector.shape_cast %216 : vector<16x64xbf16> to vector<2x8x64xbf16>
    "tpu.trace_start"() <{level = 10 : i32, message = "bqd,bkd->bqk"}> : () -> ()
    %cst_77 = arith.constant dense<0.000000e+00> : vector<2x8x8xf32>
    %218 = tpu.matmul %213, %215, %cst_77 {dimension_numbers = #tpu.dot_dimension_numbers<[2], [2], [1], [1], [0, 0, 0, 1, 1, 1], [0], [0]>} : vector<2x8x64xbf16>, vector<2x8x64xbf16>, vector<2x8x8xf32> -> vector<2x8x8xf32>
    "tpu.trace_stop"() : () -> ()
    %cst_78 = arith.constant 1.250000e-01 : f32
    %219 = vector.broadcast %cst_78 : f32 to vector<2x8x8xf32>
    %220 = arith.mulf %218, %219 : vector<2x8x8xf32>
    %221 = arith.addf %220, %45 : vector<2x8x8xf32>
    %cst_79 = arith.constant dense<0xFF800000> : vector<2x8xf32>
    %222 = vector.multi_reduction <maximumf>, %221, %cst_79 [2] : vector<2x8x8xf32> to vector<2x8xf32>
    %223 = vector.shape_cast %222 : vector<2x8xf32> to vector<2x8x1xf32>
    %224 = vector.broadcast %223 : vector<2x8x1xf32> to vector<2x8x8xf32>
    %225 = arith.subf %221, %224 : vector<2x8x8xf32>
    %226 = math.exp %225 : vector<2x8x8xf32>
    %cst_80 = arith.constant dense<0.000000e+00> : vector<2x8xf32>
    %227 = vector.multi_reduction <add>, %226, %cst_80 [2] : vector<2x8x8xf32> to vector<2x8xf32>
    %228 = vector.shape_cast %227 : vector<2x8xf32> to vector<2x8x1xf32>
    %229 = tpu.reciprocal %228 {approx = true} : vector<2x8x1xf32> -> vector<2x8x1xf32>
    %230 = vector.broadcast %229 : vector<2x8x1xf32> to vector<2x8x8xf32>
    %231 = arith.mulf %226, %230 : vector<2x8x8xf32>
    %232 = arith.truncf %231 : vector<2x8x8xf32> to vector<2x8x8xbf16>
    "tpu.trace_start"() <{level = 10 : i32, message = "bqk,bkd->bqd"}> : () -> ()
    %cst_81 = arith.constant dense<0.000000e+00> : vector<2x8x64xf32>
    %233 = tpu.matmul %232, %217, %cst_81 {dimension_numbers = #tpu.dot_dimension_numbers<[2], [1], [1], [2], [0, 0, 0, 1, 1, 2], [0], [0]>} : vector<2x8x8xbf16>, vector<2x8x64xbf16>, vector<2x8x64xf32> -> vector<2x8x64xf32>
    "tpu.trace_stop"() : () -> ()
    %234 = vector.shape_cast %233 : vector<2x8x64xf32> to vector<16x64xf32>
    %235 = tpu.concatenate %211, %234 in 1 : vector<16x64xf32>, vector<16x64xf32> -> vector<16x128xf32>
    %236 = arith.truncf %235 : vector<16x128xf32> to vector<16x128xbf16>
    %c1_82 = arith.constant 1 : index
    %c0_83 = arith.constant 0 : index
    %c0_84 = arith.constant 0 : index
    %237 = vector.load %arg5[%c1_82, %c0_83, %c0_84] : memref<2x128x128xbf16, #tpu.memory_space<vmem>>, vector<1x128x128xbf16>
    %238 = vector.shape_cast %237 : vector<1x128x128xbf16> to vector<128x128xbf16>
    %cst_85 = arith.constant dense<0.000000e+00> : vector<16x128xf32>
    %239 = tpu.matmul %236, %238, %cst_85 {dimension_numbers = #tpu.dot_dimension_numbers<[1], [0], [0], [1], [0, 0, 1, 1], [], []>} : vector<16x128xbf16>, vector<128x128xbf16>, vector<16x128xf32> -> vector<16x128xf32>
    %c12 = arith.constant 12 : index
    %c0_86 = arith.constant 0 : index
    %240 = vector.load %arg9[%c12, %c0_86] : memref<19x384xf32, #tpu.memory_space<vmem>>, vector<1x128xf32>
    %241 = vector.broadcast %240 : vector<1x128xf32> to vector<16x128xf32>
    %242 = arith.addf %239, %241 : vector<16x128xf32>
    %243 = arith.addf %242, %180 : vector<16x128xf32>
    %c13 = arith.constant 13 : index
    %c0_87 = arith.constant 0 : index
    %244 = vector.load %arg9[%c13, %c0_87] : memref<19x384xf32, #tpu.memory_space<vmem>>, vector<1x128xf32>
    %c14 = arith.constant 14 : index
    %c0_88 = arith.constant 0 : index
    %245 = vector.load %arg9[%c14, %c0_88] : memref<19x384xf32, #tpu.memory_space<vmem>>, vector<1x128xf32>
    %cst_89 = arith.constant dense<0.000000e+00> : vector<16xf32>
    %246 = vector.multi_reduction <add>, %243, %cst_89 [1] : vector<16x128xf32> to vector<16xf32>
    %247 = vector.shape_cast %246 : vector<16xf32> to vector<16x1xf32>
    %cst_90 = arith.constant 1.280000e+02 : f32
    %248 = vector.broadcast %cst_90 : f32 to vector<16x1xf32>
    %249 = arith.divf %247, %248 : vector<16x1xf32>
    %250 = vector.broadcast %249 : vector<16x1xf32> to vector<16x128xf32>
    %251 = arith.subf %243, %250 : vector<16x128xf32>
    %252 = arith.mulf %251, %251 : vector<16x128xf32>
    %cst_91 = arith.constant dense<0.000000e+00> : vector<16xf32>
    %253 = vector.multi_reduction <add>, %252, %cst_91 [1] : vector<16x128xf32> to vector<16xf32>
    %254 = vector.shape_cast %253 : vector<16xf32> to vector<16x1xf32>
    %cst_92 = arith.constant 1.280000e+02 : f32
    %255 = vector.broadcast %cst_92 : f32 to vector<16x1xf32>
    %256 = arith.divf %254, %255 : vector<16x1xf32>
    %cst_93 = arith.constant 9.99999996E-13 : f32
    %257 = vector.broadcast %cst_93 : f32 to vector<16x1xf32>
    %258 = arith.addf %256, %257 : vector<16x1xf32>
    %259 = math.rsqrt %258 : vector<16x1xf32>
    %260 = vector.broadcast %259 : vector<16x1xf32> to vector<16x128xf32>
    %261 = arith.mulf %251, %260 : vector<16x128xf32>
    %262 = vector.broadcast %244 : vector<1x128xf32> to vector<16x128xf32>
    %263 = arith.mulf %261, %262 : vector<16x128xf32>
    %264 = vector.broadcast %245 : vector<1x128xf32> to vector<16x128xf32>
    %265 = arith.addf %263, %264 : vector<16x128xf32>
    %266 = arith.truncf %265 : vector<16x128xf32> to vector<16x128xbf16>
    %c1_94 = arith.constant 1 : index
    %c0_95 = arith.constant 0 : index
    %c0_96 = arith.constant 0 : index
    %267 = vector.load %arg6[%c1_94, %c0_95, %c0_96] : memref<2x128x256xbf16, #tpu.memory_space<vmem>>, vector<1x128x256xbf16>
    %268 = vector.shape_cast %267 : vector<1x128x256xbf16> to vector<128x256xbf16>
    %cst_97 = arith.constant dense<0.000000e+00> : vector<16x256xf32>
    %269 = tpu.matmul %266, %268, %cst_97 {dimension_numbers = #tpu.dot_dimension_numbers<[1], [0], [0], [1], [0, 0, 1, 1], [], []>} : vector<16x128xbf16>, vector<128x256xbf16>, vector<16x256xf32> -> vector<16x256xf32>
    %c15 = arith.constant 15 : index
    %c0_98 = arith.constant 0 : index
    %270 = vector.load %arg9[%c15, %c0_98] : memref<19x384xf32, #tpu.memory_space<vmem>>, vector<1x256xf32>
    %271 = vector.broadcast %270 : vector<1x256xf32> to vector<16x256xf32>
    %272 = arith.addf %269, %271 : vector<16x256xf32>
    %cst_99 = arith.constant 5.000000e-01 : f32
    %273 = vector.broadcast %cst_99 : f32 to vector<16x256xf32>
    %274 = arith.mulf %273, %272 : vector<16x256xf32>
    %cst_100 = arith.constant 4.471500e-02 : f32
    %275 = vector.broadcast %cst_100 : f32 to vector<16x256xf32>
    %276 = arith.mulf %275, %272 : vector<16x256xf32>
    %277 = arith.mulf %276, %272 : vector<16x256xf32>
    %278 = arith.mulf %277, %272 : vector<16x256xf32>
    %279 = arith.addf %272, %278 : vector<16x256xf32>
    %cst_101 = arith.constant 0.797884583 : f32
    %280 = vector.broadcast %cst_101 : f32 to vector<16x256xf32>
    %281 = arith.mulf %280, %279 : vector<16x256xf32>
    %282 = math.tanh %281 : vector<16x256xf32>
    %cst_102 = arith.constant 1.000000e+00 : f32
    %283 = vector.broadcast %cst_102 : f32 to vector<16x256xf32>
    %284 = arith.addf %283, %282 : vector<16x256xf32>
    %285 = arith.mulf %274, %284 : vector<16x256xf32>
    %286 = arith.truncf %285 : vector<16x256xf32> to vector<16x256xbf16>
    %c1_103 = arith.constant 1 : index
    %c0_104 = arith.constant 0 : index
    %c0_105 = arith.constant 0 : index
    %287 = vector.load %arg7[%c1_103, %c0_104, %c0_105] : memref<2x256x128xbf16, #tpu.memory_space<vmem>>, vector<1x256x128xbf16>
    %288 = vector.shape_cast %287 : vector<1x256x128xbf16> to vector<256x128xbf16>
    %cst_106 = arith.constant dense<0.000000e+00> : vector<16x128xf32>
    %289 = tpu.matmul %286, %288, %cst_106 {dimension_numbers = #tpu.dot_dimension_numbers<[1], [0], [0], [1], [0, 0, 1, 1], [], []>} : vector<16x256xbf16>, vector<256x128xbf16>, vector<16x128xf32> -> vector<16x128xf32>
    %c16 = arith.constant 16 : index
    %c0_107 = arith.constant 0 : index
    %290 = vector.load %arg9[%c16, %c0_107] : memref<19x384xf32, #tpu.memory_space<vmem>>, vector<1x128xf32>
    %291 = vector.broadcast %290 : vector<1x128xf32> to vector<16x128xf32>
    %292 = arith.addf %289, %291 : vector<16x128xf32>
    %293 = arith.addf %292, %265 : vector<16x128xf32>
    %c17 = arith.constant 17 : index
    %c0_108 = arith.constant 0 : index
    %294 = vector.load %arg9[%c17, %c0_108] : memref<19x384xf32, #tpu.memory_space<vmem>>, vector<1x128xf32>
    %c18 = arith.constant 18 : index
    %c0_109 = arith.constant 0 : index
    %295 = vector.load %arg9[%c18, %c0_109] : memref<19x384xf32, #tpu.memory_space<vmem>>, vector<1x128xf32>
    %cst_110 = arith.constant dense<0.000000e+00> : vector<16xf32>
    %296 = vector.multi_reduction <add>, %293, %cst_110 [1] : vector<16x128xf32> to vector<16xf32>
    %297 = vector.shape_cast %296 : vector<16xf32> to vector<16x1xf32>
    %cst_111 = arith.constant 1.280000e+02 : f32
    %298 = vector.broadcast %cst_111 : f32 to vector<16x1xf32>
    %299 = arith.divf %297, %298 : vector<16x1xf32>
    %300 = vector.broadcast %299 : vector<16x1xf32> to vector<16x128xf32>
    %301 = arith.subf %293, %300 : vector<16x128xf32>
    %302 = arith.mulf %301, %301 : vector<16x128xf32>
    %cst_112 = arith.constant dense<0.000000e+00> : vector<16xf32>
    %303 = vector.multi_reduction <add>, %302, %cst_112 [1] : vector<16x128xf32> to vector<16xf32>
    %304 = vector.shape_cast %303 : vector<16xf32> to vector<16x1xf32>
    %cst_113 = arith.constant 1.280000e+02 : f32
    %305 = vector.broadcast %cst_113 : f32 to vector<16x1xf32>
    %306 = arith.divf %304, %305 : vector<16x1xf32>
    %cst_114 = arith.constant 9.99999996E-13 : f32
    %307 = vector.broadcast %cst_114 : f32 to vector<16x1xf32>
    %308 = arith.addf %306, %307 : vector<16x1xf32>
    %309 = math.rsqrt %308 : vector<16x1xf32>
    %310 = vector.broadcast %309 : vector<16x1xf32> to vector<16x128xf32>
    %311 = arith.mulf %301, %310 : vector<16x128xf32>
    %312 = vector.broadcast %294 : vector<1x128xf32> to vector<16x128xf32>
    %313 = arith.mulf %311, %312 : vector<16x128xf32>
    %314 = vector.broadcast %295 : vector<1x128xf32> to vector<16x128xf32>
    %315 = arith.addf %313, %314 : vector<16x128xf32>
    %316 = vector.shape_cast %315 : vector<16x128xf32> to vector<2x8x128xf32>
    %317 = vector.extract_strided_slice %316 {offsets = [0, 0, 0], sizes = [2, 1, 128], strides = [1, 1, 1]} : vector<2x8x128xf32> to vector<2x1x128xf32>
    %318 = vector.shape_cast %317 : vector<2x1x128xf32> to vector<2x128xf32>
    %319 = arith.truncf %318 : vector<2x128xf32> to vector<2x128xbf16>
    %c0_115 = arith.constant 0 : index
    %c0_116 = arith.constant 0 : index
    %320 = vector.load %arg8[%c0_115, %c0_116] : memref<128x128xbf16, #tpu.memory_space<vmem>>, vector<128x128xbf16>
    %cst_117 = arith.constant dense<0.000000e+00> : vector<2x128xf32>
    %321 = tpu.matmul %319, %320, %cst_117 {dimension_numbers = #tpu.dot_dimension_numbers<[1], [0], [0], [1], [0, 0, 1, 1], [], []>} : vector<2x128xbf16>, vector<128x128xbf16>, vector<2x128xf32> -> vector<2x128xf32>
    %c2 = arith.constant 2 : index
    %c0_118 = arith.constant 0 : index
    %322 = vector.load %arg9[%c2, %c0_118] : memref<19x384xf32, #tpu.memory_space<vmem>>, vector<1x128xf32>
    %323 = vector.broadcast %322 : vector<1x128xf32> to vector<2x128xf32>
    %324 = arith.addf %321, %323 : vector<2x128xf32>
    %c0_119 = arith.constant 0 : index
    %c0_120 = arith.constant 0 : index
    %325 = vector.load %arg10[%c0_119, %c0_120] : memref<2x128xf32, #tpu.memory_space<vmem>>, vector<2x128xf32>
    tpu.vector_store %arg10[%c0_119, %c0_120], %324 {strides = array<i32>} : memref<2x128xf32, #tpu.memory_space<vmem>>, vector<2x128xf32>,
    return
  }
}

</mosaic_0001>

<llo_original>
// kernel: bert_classifier_forward.1
$region0: #{bert_classifier_forward.1}
  #allocation0 [shape = 'u32[]', space=smem, size = 0x4, offset = 0x4, fixed_abs, tag = 'smem constant byte address 0x4 - core index']
  #allocation1 [shape = 'u32[144,128]{1,0:T(1,128)}', space=vmem, size = 0x12000, scoped, tag = 'internal scratch']
  %s0 = inlined_call_operand.vmem [shape: s32[16,1], index: 0, kind: input, shape index: {}]
  %s1 = inlined_call_operand.vmem [shape: f32[2,8], index: 1, kind: input, shape index: {}]
  %s2 = inlined_call_operand.vmem [shape: bf16[64,128], index: 2, kind: input, shape index: {}]
  %s3 = inlined_call_operand.hbm [shape: f32[16,128], index: 3, kind: input, shape index: {}]
  %s4 = inlined_call_operand.hbm [shape: bf16[2,128,384], index: 4, kind: input, shape index: {}]
  %s5 = inlined_call_operand.hbm [shape: bf16[2,128,128], index: 5, kind: input, shape index: {}]
  %s6 = inlined_call_operand.hbm [shape: bf16[2,128,256], index: 6, kind: input, shape index: {}]
  %s7 = inlined_call_operand.hbm [shape: bf16[2,256,128], index: 7, kind: input, shape index: {}]
  %s8 = inlined_call_operand.hbm [shape: bf16[128,128], index: 8, kind: input, shape index: {}]
  %s9 = inlined_call_operand.hbm [shape: f32[19,384], index: 9, kind: input, shape index: {}]
  %s10 = inlined_call_operand.hbm [shape: f32[2,128], index: 10, kind: output, shape index: {}]
  %s11 = sld [smem:[#allocation0]]
  $region78: #{bert_classifier_forward.1} parent=0
    _
  %s13 = ssub.s32 1, %s11
  %s14 = scalar_select 0, %s13, %s11
  $region1: #{bert_classifier_forward.1} parent=0
    #allocation2 [shape = 'u8[8192]{0}', space=vmem, size = 0x2000, scoped, tag = 'input window, operand 3, single buffered']
    #allocation3 [shape = 's32[1]{0}', space=sflag, size = 0x4, scoped, tag = 'scoped memory for bert_classifier_forward.1']
    #allocation4 [shape = 's32[1]{0}', space=sflag, size = 0x4, scoped, tag = 'scoped memory for bert_classifier_forward.1']
    #allocation5 [shape = 'u8[196608]{0}', space=vmem, size = 0x30000, scoped, tag = 'input window, operand 4, single buffered']
    #allocation6 [shape = 's32[1]{0}', space=sflag, size = 0x4, scoped, tag = 'scoped memory for bert_classifier_forward.1']
    #allocation7 [shape = 'u8[65536]{0}', space=vmem, size = 0x10000, scoped, tag = 'input window, operand 5, single buffered']
    #allocation8 [shape = 'u8[131072]{0}', space=vmem, size = 0x20000, scoped, tag = 'input window, operand 6, single buffered']
    #allocation9 [shape = 's32[1]{0}', space=sflag, size = 0x4, scoped, tag = 'scoped memory for bert_classifier_forward.1']
    #allocation10 [shape = 'u8[131072]{0}', space=vmem, size = 0x20000, scoped, tag = 'input window, operand 7, single buffered']
    #allocation11 [shape = 'u8[32768]{0}', space=vmem, size = 0x8000, scoped, tag = 'input window, operand 8, single buffered']
    #allocation12 [shape = 's32[1]{0}', space=sflag, size = 0x4, scoped, tag = 'scoped memory for bert_classifier_forward.1']
    #allocation13 [shape = 'u8[36864]{0}', space=vmem, size = 0x9000, scoped, tag = 'input window, operand 9, single buffered']
    #allocation14 [shape = 'u8[1024]{0}', space=vmem, size = 0x400, scoped, tag = 'output window, operand 0, single buffered']
    %15 = vsyncpa [#allocation3], 0
    %16 = vsyncpa [#allocation6], 0
    %17 = vsyncpa [#allocation9], 0
    %18 = vsyncpa [#allocation12], 0
    %19 = vsyncpa [#allocation4], 0
    // Predicated region
    $region2: #{bert_classifier_forward.1} parent=1 // pred_check
      _
    $region3: #{bert_classifier_forward.1} parent=1 // pred_check_branch
      %21 = sbr.rel (0) target = $region5
    $region4: #{bert_classifier_forward.1} parent=1 // pred_region
      _
    $region5: #{bert_classifier_forward.1} parent=1 // pred_fallthru
      _
    // Predicated region
    $region6: #{bert_classifier_forward.1} parent=1 // pred_check
      _
    $region7: #{bert_classifier_forward.1} parent=1 // pred_check_branch
      %23 = sbr.rel (0) target = $region9
    $region8: #{bert_classifier_forward.1} parent=1 // pred_region
      _
    $region9: #{bert_classifier_forward.1} parent=1 // pred_fallthru
      _
    // Predicated region
    $region10: #{bert_classifier_forward.1} parent=1 // pred_check
      _
    $region11: #{bert_classifier_forward.1} parent=1 // pred_check_branch
      %25 = sbr.rel (0) target = $region13
    $region12: #{bert_classifier_forward.1} parent=1 // pred_region
      _
    $region13: #{bert_classifier_forward.1} parent=1 // pred_fallthru
      _
    // Predicated region
    $region14: #{bert_classifier_forward.1} parent=1 // pred_check
      _
    $region15: #{bert_classifier_forward.1} parent=1 // pred_check_branch
      %27 = sbr.rel (0) target = $region17
    $region16: #{bert_classifier_forward.1} parent=1 // pred_region
      %s29 = ssub.s32 256, 256
      %30 = vsyncadd [#allocation3], %s29
      %s31 = sshll.u32 [#allocation2], 4
      %s32 = int_to_ptr.vmem [resolvable:$true] %s31
      %37 = dma.hbm_to_vmem [thread:$0]  %s3, 256, %s32, [#allocation3], 128, 128, 8
    $region17: #{bert_classifier_forward.1} parent=1 // pred_fallthru
      _
    // Predicated region
    $region18: #{bert_classifier_forward.1} parent=1 // pred_check
      _
    $region19: #{bert_classifier_forward.1} parent=1 // pred_check_branch
      %39 = sbr.rel (0) target = $region21
    $region20: #{bert_classifier_forward.1} parent=1 // pred_region
      %s41 = ssub.s32 6144, 6144
      %42 = vsyncadd [#allocation6], %s41
      %s43 = sshll.u32 [#allocation5], 4
      %s44 = int_to_ptr.vmem [resolvable:$true] %s43
      %49 = dma.hbm_to_vmem [thread:$0]  %s4, 6144, %s44, [#allocation6], 192, 192, 12
    $region21: #{bert_classifier_forward.1} parent=1 // pred_fallthru
      _
    // Predicated region
    $region22: #{bert_classifier_forward.1} parent=1 // pred_check
      _
    $region23: #{bert_classifier_forward.1} parent=1 // pred_check_branch
      %51 = sbr.rel (0) target = $region25
    $region24: #{bert_classifier_forward.1} parent=1 // pred_region
      %s53 = ssub.s32 2048, 2048
      %54 = vsyncadd [#allocation6], %s53
      %s55 = sshll.u32 [#allocation7], 4
      %s56 = int_to_ptr.vmem [resolvable:$true] %s55
      %61 = dma.hbm_to_vmem [thread:$0]  %s5, 2048, %s56, [#allocation6], 64, 64, 4
    $region25: #{bert_classifier_forward.1} parent=1 // pred_fallthru
      _
    // Predicated region
    $region26: #{bert_classifier_forward.1} parent=1 // pred_check
      _
    $region27: #{bert_classifier_forward.1} parent=1 // pred_check_branch
      %63 = sbr.rel (0) target = $region29
    $region28: #{bert_classifier_forward.1} parent=1 // pred_region
      %s65 = ssub.s32 4096, 4096
      %66 = vsyncadd [#allocation9], %s65
      %s67 = sshll.u32 [#allocation8], 4
      %s68 = int_to_ptr.vmem [resolvable:$true] %s67
      %73 = dma.hbm_to_vmem [thread:$0]  %s6, 4096, %s68, [#allocation9], 128, 128, 8
    $region29: #{bert_classifier_forward.1} parent=1 // pred_fallthru
      _
    // Predicated region
    $region30: #{bert_classifier_forward.1} parent=1 // pred_check
      _
    $region31: #{bert_classifier_forward.1} parent=1 // pred_check_branch
      %75 = sbr.rel (0) target = $region33
    $region32: #{bert_classifier_forward.1} parent=1 // pred_region
      %s77 = ssub.s32 4096, 4096
      %78 = vsyncadd [#allocation9], %s77
      %s79 = sshll.u32 [#allocation10], 4
      %s80 = int_to_ptr.vmem [resolvable:$true] %s79
      %85 = dma.hbm_to_vmem [thread:$0]  %s7, 4096, %s80, [#allocation9], 64, 64, 4
    $region33: #{bert_classifier_forward.1} parent=1 // pred_fallthru
      _
    // Predicated region
    $region34: #{bert_classifier_forward.1} parent=1 // pred_check
      _
    $region35: #{bert_classifier_forward.1} parent=1 // pred_check_branch
      %87 = sbr.rel (0) target = $region37
    $region36: #{bert_classifier_forward.1} parent=1 // pred_region
      %s89 = ssub.s32 1024, 1024
      %90 = vsyncadd [#allocation12], %s89
      %s91 = sshll.u32 [#allocation11], 4
      %s92 = int_to_ptr.vmem [resolvable:$true] %s91
      %97 = dma.hbm_to_vmem [thread:$0]  %s8, 1024, %s92, [#allocation12], 64, 64, 4
    $region37: #{bert_classifier_forward.1} parent=1 // pred_fallthru
      _
    // Predicated region
    $region38: #{bert_classifier_forward.1} parent=1 // pred_check
      _
    $region39: #{bert_classifier_forward.1} parent=1 // pred_check_branch
      %99 = sbr.rel (0) target = $region41
    $region40: #{bert_classifier_forward.1} parent=1 // pred_region
      %s101 = ssub.s32 1152, 1152
      %102 = vsyncadd [#allocation12], %s101
      %s103 = sshll.u32 [#allocation13], 4
      %s104 = int_to_ptr.vmem [resolvable:$true] %s103
      %109 = dma.hbm_to_vmem [thread:$0]  %s9, 1152, %s104, [#allocation12], 384, 384, 24
    $region41: #{bert_classifier_forward.1} parent=1 // pred_fallthru
      _
    // Predicated region
    $region42: #{bert_classifier_forward.1} parent=1 // pred_check
      _
    $region43: #{bert_classifier_forward.1} parent=1 // pred_check_branch
      %111 = sbr.rel (0) target = $region45
    $region44: #{bert_classifier_forward.1} parent=1 // pred_region
      %112 = dma.done [#allocation3], 256
    $region45: #{bert_classifier_forward.1} parent=1 // pred_fallthru
      _
    // Predicated region
    $region46: #{bert_classifier_forward.1} parent=1 // pred_check
      _
    $region47: #{bert_classifier_forward.1} parent=1 // pred_check_branch
      %114 = sbr.rel (0) target = $region49
    $region48: #{bert_classifier_forward.1} parent=1 // pred_region
      %115 = dma.done [#allocation6], 6144
    $region49: #{bert_classifier_forward.1} parent=1 // pred_fallthru
      _
    // Predicated region
    $region50: #{bert_classifier_forward.1} parent=1 // pred_check
      _
    $region51: #{bert_classifier_forward.1} parent=1 // pred_check_branch
      %117 = sbr.rel (0) target = $region53
    $region52: #{bert_classifier_forward.1} parent=1 // pred_region
      %118 = dma.done [#allocation6], 2048
    $region53: #{bert_classifier_forward.1} parent=1 // pred_fallthru
      _
    // Predicated region
    $region54: #{bert_classifier_forward.1} parent=1 // pred_check
      _
    $region55: #{bert_classifier_forward.1} parent=1 // pred_check_branch
      %120 = sbr.rel (0) target = $region57
    $region56: #{bert_classifier_forward.1} parent=1 // pred_region
      %121 = dma.done [#allocation9], 4096
    $region57: #{bert_classifier_forward.1} parent=1 // pred_fallthru
      _
    // Predicated region
    $region58: #{bert_classifier_forward.1} parent=1 // pred_check
      _
    $region59: #{bert_classifier_forward.1} parent=1 // pred_check_branch
      %123 = sbr.rel (0) target = $region61
    $region60: #{bert_classifier_forward.1} parent=1 // pred_region
      %124 = dma.done [#allocation9], 4096
    $region61: #{bert_classifier_forward.1} parent=1 // pred_fallthru
      _
    // Predicated region
    $region62: #{bert_classifier_forward.1} parent=1 // pred_check
      _
    $region63: #{bert_classifier_forward.1} parent=1 // pred_check_branch
      %126 = sbr.rel (0) target = $region65
    $region64: #{bert_classifier_forward.1} parent=1 // pred_region
      %127 = dma.done [#allocation12], 1024
    $region65: #{bert_classifier_forward.1} parent=1 // pred_fallthru
      _
    // Predicated region
    $region66: #{bert_classifier_forward.1} parent=1 // pred_check
      _
    $region67: #{bert_classifier_forward.1} parent=1 // pred_check_branch
      %129 = sbr.rel (0) target = $region69
    $region68: #{bert_classifier_forward.1} parent=1 // pred_region
      %130 = dma.done [#allocation12], 1152
    $region69: #{bert_classifier_forward.1} parent=1 // pred_fallthru
      _
    %v132 = vld [vmem:[%s0] sm:$0xff]
    %v133 = vld [vmem:[%s0 + $0x8] sm:$0xff]
    %v134 = vlaneseq
    %v135 = vand.u32 %v134, 127
    %136 = vset.pattern.permute.xlu0 0
    %137 = vperm.xlu0 %136, %v132
    %v138 = vpop.permute.xlu0 %137
    %139 = vset.pattern.permute.xlu0 0
    %140 = vperm.xlu0 %139, %v133
    %v141 = vpop.permute.xlu0 %140
    %vm142 = vcmp.eq.s32.totalorder %v135, %v138
    %vm143 = vcmp.eq.s32.totalorder %v135, %v141
    %v144 = vsel %vm142, 1.0, 0.0
    %v145 = vsel %vm143, 1.0, 0.0
    %v146 = vpack.c.bf16 %v145, %v144
    %v147 = vld [vmem:[%s2] sm:$0xf]
    %v148 = vld [vmem:[%s2 + $0x4] sm:$0xf]
    %v149 = vld [vmem:[%s2 + $0x8] sm:$0xf]
    %v150 = vld [vmem:[%s2 + $0xc] sm:$0xf]
    %v151 = vld [vmem:[%s2 + $0x10] sm:$0xf]
    %v152 = vld [vmem:[%s2 + $0x14] sm:$0xf]
    %v153 = vld [vmem:[%s2 + $0x18] sm:$0xf]
    %v154 = vld [vmem:[%s2 + $0x1c] sm:$0xf]
    %v163 = vunpack.c.l.b16 %v147
    %v164 = vunpack.c.l.b16 %v148
    %v165 = vunpack.c.l.b16 %v149
    %v166 = vunpack.c.l.b16 %v150
    %v167 = vunpack.c.l.b16 %v151
    %v168 = vunpack.c.l.b16 %v152
    %v169 = vunpack.c.l.b16 %v153
    %v170 = vunpack.c.l.b16 %v154
    %v171 = vpack.c.b16 %v164, %v163
    %v172 = vpack.c.b16 %v166, %v165
    %v173 = vpack.c.b16 %v168, %v167
    %v174 = vpack.c.b16 %v170, %v169
    %vm179 = vcmask 523264
    %v181 = vsel %vm179, %v146, 0
    %183 = vmatprep.subr.bf16.mxu0 0
    %184 = vmatpush1.bf16.msra.mxu0 %v171
    %185 = vmatprep.subr.bf16.mxu0 0
    %186 = vmatpush1.bf16.msra.mxu0 %v172
    %187 = vmatprep.subr.bf16.mxu0 0
    %188 = vmatpush1.bf16.msra.mxu0 %v173
    %189 = vmatprep.subr.bf16.mxu0 0
    %190 = vmatpush1.bf16.msra.mxu0 %v174
    %191 = vmatprep.subr.bf16.mxu0 0
    %192 = vmatpush1.bf16.msra.mxu0 0
    %193 = vmatprep.subr.bf16.mxu0 0
    %194 = vmatpush1.bf16.msra.mxu0 0
    %195 = vmatprep.subr.bf16.mxu0 0
    %196 = vmatpush1.bf16.msra.mxu0 0
    %197 = vmatprep.subr.bf16.mxu0 0
    %198 = vmatpush1.bf16.msra.mxu0 0
    %199 = vmatprep.subr.bf16.mxu0 0
    %200 = vmatpush1.bf16.msra.mxu0 0
    %201 = vmatprep.subr.bf16.mxu0 0
    %202 = vmatpush1.bf16.msra.mxu0 0
    %203 = vmatprep.subr.bf16.mxu0 0
    %204 = vmatpush1.bf16.msra.mxu0 0
    %205 = vmatprep.subr.bf16.mxu0 0
    %206 = vmatpush1.bf16.msra.mxu0 0
    %207 = vmatprep.subr.bf16.mxu0 0
    %208 = vmatpush1.bf16.msra.mxu0 0
    %209 = vmatprep.subr.bf16.mxu0 0
    %210 = vmatpush1.bf16.msra.mxu0 0
    %211 = vmatprep.subr.bf16.mxu0 0
    %212 = vmatpush1.bf16.msra.mxu0 0
    %213 = vmatprep.subr.bf16.mxu0 0
    %214 = vmatpush1.bf16.msra.mxu0 0
    %215 = vmatprep.mubr.bf16.mxu0 0
    %216 = vmatmul.mubr.bf16.gmra.mrb[0].mxu0 %v181
    %v217 = vpop.f32.mrb[0].mxu0
    %v218 = vadd.f32 0.0, %v217
    %v219 = vpop.f32.mrb[0].mxu0
    %v220 = vpop.f32.mrb[0].mxu0
    %v221 = vadd.f32 0.0, %v220
    %v222 = vpop.f32.mrb[0].mxu0
    %223 = vdwg.mxu0
    %v224 = vld [vmem:[#allocation2] sm:$0xff]
    %v225 = vadd.f32 %v218, %v224
    %v226 = vadd.f32 %v221, %v224
    %v227 = vld [vmem:[#allocation13] ss:$0 sm:$0xff]
    %v228 = vld [vmem:[#allocation13 + $0x1] ss:$0 sm:$0xff]
    %229 = vadd.xlane.f32.xlu0 %v225
    %v230 = vpop.xlane.xlu0 %229
    %231 = vadd.xlane.f32.xlu0 %v226
    %v232 = vpop.xlane.xlu0 %231
    %v233 = vrcp.pop 128.0
    %v234 = vmul.f32 %v230, %v233
    %v235 = vmul.f32 %v232, %v233
    %v236 = vsub.f32 %v225, %v234
    %v237 = vsub.f32 %v226, %v235
    %v238 = vmul.f32 %v236, %v236
    %v239 = vmul.f32 %v237, %v237
    %240 = vadd.xlane.f32.xlu0 %v238
    %v241 = vpop.xlane.xlu0 %240
    %242 = vadd.xlane.f32.xlu0 %v239
    %v243 = vpop.xlane.xlu0 %242
    %v244 = vmul.f32 %v241, %v233
    %v245 = vmul.f32 %v243, %v233
    %v246 = vadd.f32 %v244, 1e-12
    %v247 = vadd.f32 %v245, 1e-12
    %v248 = vrsqrt.pop %v246
    %v249 = vrsqrt.pop %v247
    %v250 = vmul.f32 %v236, %v248
    %v251 = vmul.f32 %v237, %v249
    %v252 = vmul.f32 %v250, %v227
    %v253 = vmul.f32 %v251, %v227
    %v254 = vadd.f32 %v252, %v228
    %v255 = vadd.f32 %v253, %v228
    %v256 = vld [vmem:[%s1] sm:$0x3]
    %v257 = vsub.f32 1.0, %v256
    %v258 = vmul.f32 %v257, -10000.0
    %v261 = vunpack.c.l.s4 1966171168
    %v262 = vunpack.c.0.s8 %v261
    %v263 = vlaneseq
    %v264 = vshrl.u32 %v263, 7
    %v265 = vsub.s32 %v262, %v264
    %v266 = vrot.slane %v258, %v265
    %v267 = vcombine.high %v266, %v266
    %v269 = vunpack.c.l.s4 1966171168
    %v270 = vunpack.c.0.s8 %v269
    %v271 = vlaneseq
    %v272 = vshrl.u32 %v271, 7
    %v273 = vsub.s32 %v270, %v272
    %v274 = vrot.slane %v266, %v273
    %v276 = vunpack.c.l.s4 1966171168
    %v277 = vunpack.c.0.s8 %v276
    %v278 = vlaneseq
    %v279 = vshrl.u32 %v278, 7
    %v280 = vsub.s32 %v277, %v279
    %v281 = vrot.slane %v267, %v280
    %v282 = vlaneseq
    %v283 = vshrl.u32 %v282, 7
    %v284 = vsub.s32 0, %v283
    %v285 = vrot.slane %v274, %v284
    %v286 = vlaneseq
    %v287 = vshrl.u32 %v286, 7
    %v288 = vsub.s32 0, %v287
    %v289 = vrot.slane %v281, %v288
    %v292 = vpack.c.bf16 %v255, %v254
    %v293 = vld [vmem:[#allocation5] sm:$0xff]
    %v294 = vld [vmem:[#allocation5 + $0x8] sm:$0xf]
    %v295 = vld [vmem:[#allocation5 + $0xc] sm:$0xff]
    %v296 = vld [vmem:[#allocation5 + $0x14] sm:$0xf]
    %v297 = vld [vmem:[#allocation5 + $0x18] sm:$0xff]
    %v298 = vld [vmem:[#allocation5 + $0x20] sm:$0xf]
    %v299 = vld [vmem:[#allocation5 + $0x24] sm:$0xff]
    %v300 = vld [vmem:[#allocation5 + $0x2c] sm:$0xf]
    %v301 = vld [vmem:[#allocation5 + $0x30] sm:$0xff]
    %v302 = vld [vmem:[#allocation5 + $0x38] sm:$0xf]
    %v303 = vld [vmem:[#allocation5 + $0x3c] sm:$0xff]
    %v304 = vld [vmem:[#allocation5 + $0x44] sm:$0xf]
    %v305 = vld [vmem:[#allocation5 + $0x48] sm:$0xff]
    %v306 = vld [vmem:[#allocation5 + $0x50] sm:$0xf]
    %v307 = vld [vmem:[#allocation5 + $0x54] sm:$0xff]
    %v308 = vld [vmem:[#allocation5 + $0x5c] sm:$0xf]
    %v309 = vld [vmem:[#allocation5 + $0x60] sm:$0xff]
    %v310 = vld [vmem:[#allocation5 + $0x68] sm:$0xf]
    %v311 = vld [vmem:[#allocation5 + $0x6c] sm:$0xff]
    %v312 = vld [vmem:[#allocation5 + $0x74] sm:$0xf]
    %v313 = vld [vmem:[#allocation5 + $0x78] sm:$0xff]
    %v314 = vld [vmem:[#allocation5 + $0x80] sm:$0xf]
    %v315 = vld [vmem:[#allocation5 + $0x84] sm:$0xff]
    %v316 = vld [vmem:[#allocation5 + $0x8c] sm:$0xf]
    %v317 = vld [vmem:[#allocation5 + $0x90] sm:$0xff]
    %v318 = vld [vmem:[#allocation5 + $0x98] sm:$0xf]
    %v319 = vld [vmem:[#allocation5 + $0x9c] sm:$0xff]
    %v320 = vld [vmem:[#allocation5 + $0xa4] sm:$0xf]
    %v321 = vld [vmem:[#allocation5 + $0xa8] sm:$0xff]
    %v322 = vld [vmem:[#allocation5 + $0xb0] sm:$0xf]
    %v323 = vld [vmem:[#allocation5 + $0xb4] sm:$0xff]
    %v324 = vld [vmem:[#allocation5 + $0xbc] sm:$0xf]
    %s325 = scalar_lea.vmem [#allocation13], 3
    %v326 = vld [vmem:[%s325] ss:$8 sm:$0x7]
    %v328 = vlaneseq
    %v329 = vshrl.u32 %v328, 7
    %v330 = vsub.s32 0, %v329
    %v331 = vrot.slane %v326, %v330
    %v332 = vlaneseq
    %v333 = vshrl.u32 %v332, 7
    %v334 = vsub.s32 1, %v333
    %v335 = vrot.slane %v326, %v334
    %v336 = vlaneseq
    %v337 = vshrl.u32 %v336, 7
    %v338 = vsub.s32 2, %v337
    %v339 = vrot.slane %v326, %v338
    %v375 = vunpack.c.l.b16 %v293
    %v376 = vunpack.c.h.b16 %v293
    %v377 = vunpack.c.l.b16 %v294
    %v378 = vunpack.c.l.b16 %v295
    %v379 = vunpack.c.h.b16 %v295
    %v380 = vunpack.c.l.b16 %v296
    %v381 = vunpack.c.l.b16 %v297
    %v382 = vunpack.c.h.b16 %v297
    %v383 = vunpack.c.l.b16 %v298
    %v384 = vunpack.c.l.b16 %v299
    %v385 = vunpack.c.h.b16 %v299
    %v386 = vunpack.c.l.b16 %v300
    %v387 = vunpack.c.l.b16 %v301
    %v388 = vunpack.c.h.b16 %v301
    %v389 = vunpack.c.l.b16 %v302
    %v390 = vunpack.c.l.b16 %v303
    %v391 = vunpack.c.h.b16 %v303
    %v392 = vunpack.c.l.b16 %v304
    %v393 = vunpack.c.l.b16 %v305
    %v394 = vunpack.c.h.b16 %v305
    %v395 = vunpack.c.l.b16 %v306
    %v396 = vunpack.c.l.b16 %v307
    %v397 = vunpack.c.h.b16 %v307
    %v398 = vunpack.c.l.b16 %v308
    %v399 = vunpack.c.l.b16 %v309
    %v400 = vunpack.c.h.b16 %v309
    %v401 = vunpack.c.l.b16 %v310
    %v402 = vunpack.c.l.b16 %v311
    %v403 = vunpack.c.h.b16 %v311
    %v404 = vunpack.c.l.b16 %v312
    %v405 = vunpack.c.l.b16 %v313
    %v406 = vunpack.c.h.b16 %v313
    %v407 = vunpack.c.l.b16 %v314
    %v408 = vunpack.c.l.b16 %v315
    %v409 = vunpack.c.h.b16 %v315
    %v410 = vunpack.c.l.b16 %v316
    %v411 = vunpack.c.l.b16 %v317
    %v412 = vunpack.c.h.b16 %v317
    %v413 = vunpack.c.l.b16 %v318
    %v414 = vunpack.c.l.b16 %v319
    %v415 = vunpack.c.h.b16 %v319
    %v416 = vunpack.c.l.b16 %v320
    %v417 = vunpack.c.l.b16 %v321
    %v418 = vunpack.c.h.b16 %v321
    %v419 = vunpack.c.l.b16 %v322
    %v420 = vunpack.c.l.b16 %v323
    %v421 = vunpack.c.h.b16 %v323
    %v422 = vunpack.c.l.b16 %v324
    %v423 = vpack.c.b16 %v378, %v375
    %v424 = vpack.c.b16 %v379, %v376
    %v425 = vpack.c.b16 %v380, %v377
    %v426 = vpack.c.b16 %v384, %v381
    %v427 = vpack.c.b16 %v385, %v382
    %v428 = vpack.c.b16 %v386, %v383
    %v429 = vpack.c.b16 %v390, %v387
    %v430 = vpack.c.b16 %v391, %v388
    %v431 = vpack.c.b16 %v392, %v389
    %v432 = vpack.c.b16 %v396, %v393
    %v433 = vpack.c.b16 %v397, %v394
    %v434 = vpack.c.b16 %v398, %v395
    %v435 = vpack.c.b16 %v402, %v399
    %v436 = vpack.c.b16 %v403, %v400
    %v437 = vpack.c.b16 %v404, %v401
    %v438 = vpack.c.b16 %v408, %v405
    %v439 = vpack.c.b16 %v409, %v406
    %v440 = vpack.c.b16 %v410, %v407
    %v441 = vpack.c.b16 %v414, %v411
    %v442 = vpack.c.b16 %v415, %v412
    %v443 = vpack.c.b16 %v416, %v413
    %v444 = vpack.c.b16 %v420, %v417
    %v445 = vpack.c.b16 %v421, %v418
    %v446 = vpack.c.b16 %v422, %v419
    %471 = vmatprep.subr.bf16.mxu0 %v424
    %472 = vmatpush1.bf16.msra.mxu0 %v423
    %473 = vmatprep.subr.bf16.mxu0 %v427
    %474 = vmatpush1.bf16.msra.mxu0 %v426
    %475 = vmatprep.subr.bf16.mxu0 %v430
    %476 = vmatpush1.bf16.msra.mxu0 %v429
    %477 = vmatprep.subr.bf16.mxu0 %v433
    %478 = vmatpush1.bf16.msra.mxu0 %v432
    %479 = vmatprep.subr.bf16.mxu0 %v436
    %480 = vmatpush1.bf16.msra.mxu0 %v435
    %481 = vmatprep.subr.bf16.mxu0 %v439
    %482 = vmatpush1.bf16.msra.mxu0 %v438
    %483 = vmatprep.subr.bf16.mxu0 %v442
    %484 = vmatpush1.bf16.msra.mxu0 %v441
    %485 = vmatprep.subr.bf16.mxu0 %v445
    %486 = vmatpush1.bf16.msra.mxu0 %v444
    %487 = vmatprep.subr.bf16.mxu0 0
    %488 = vmatpush1.bf16.msra.mxu0 0
    %489 = vmatprep.subr.bf16.mxu0 0
    %490 = vmatpush1.bf16.msra.mxu0 0
    %491 = vmatprep.subr.bf16.mxu0 0
    %492 = vmatpush1.bf16.msra.mxu0 0
    %493 = vmatprep.subr.bf16.mxu0 0
    %494 = vmatpush1.bf16.msra.mxu0 0
    %495 = vmatprep.subr.bf16.mxu0 0
    %496 = vmatpush1.bf16.msra.mxu0 0
    %497 = vmatprep.subr.bf16.mxu0 0
    %498 = vmatpush1.bf16.msra.mxu0 0
    %499 = vmatprep.subr.bf16.mxu0 0
    %500 = vmatpush1.bf16.msra.mxu0 0
    %501 = vmatprep.subr.bf16.mxu0 0
    %502 = vmatpush1.bf16.msra.mxu0 0
    %503 = vmatprep.mubr.bf16.mxu0 0
    %504 = vmatmul.mubr.bf16.gmra.mrb[0].mxu0 %v292
    %v505 = vpop.f32.mrb[0].mxu0
    %v506 = vadd.f32 %v331, %v505
    %v507 = vpop.f32.mrb[0].mxu0
    %v508 = vadd.f32 %v335, %v507
    %v509 = vpop.f32.mrb[0].mxu0
    %v510 = vadd.f32 %v331, %v509
    %v511 = vpop.f32.mrb[0].mxu0
    %v512 = vadd.f32 %v335, %v511
    %513 = vdwg.mxu0
    %514 = vmatprep.subr.bf16.mxu0 0
    %515 = vmatpush1.bf16.msra.mxu0 %v425
    %516 = vmatprep.subr.bf16.mxu0 0
    %517 = vmatpush1.bf16.msra.mxu0 %v428
    %518 = vmatprep.subr.bf16.mxu0 0
    %519 = vmatpush1.bf16.msra.mxu0 %v431
    %520 = vmatprep.subr.bf16.mxu0 0
    %521 = vmatpush1.bf16.msra.mxu0 %v434
    %522 = vmatprep.subr.bf16.mxu0 0
    %523 = vmatpush1.bf16.msra.mxu0 %v437
    %524 = vmatprep.subr.bf16.mxu0 0
    %525 = vmatpush1.bf16.msra.mxu0 %v440
    %526 = vmatprep.subr.bf16.mxu0 0
    %527 = vmatpush1.bf16.msra.mxu0 %v443
    %528 = vmatprep.subr.bf16.mxu0 0
    %529 = vmatpush1.bf16.msra.mxu0 %v446
    %530 = vmatprep.subr.bf16.mxu0 0
    %531 = vmatpush1.bf16.msra.mxu0 0
    %532 = vmatprep.subr.bf16.mxu0 0
    %533 = vmatpush1.bf16.msra.mxu0 0
    %534 = vmatprep.subr.bf16.mxu0 0
    %535 = vmatpush1.bf16.msra.mxu0 0
    %536 = vmatprep.subr.bf16.mxu0 0
    %537 = vmatpush1.bf16.msra.mxu0 0
    %538 = vmatprep.subr.bf16.mxu0 0
    %539 = vmatpush1.bf16.msra.mxu0 0
    %540 = vmatprep.subr.bf16.mxu0 0
    %541 = vmatpush1.bf16.msra.mxu0 0
    %542 = vmatprep.subr.bf16.mxu0 0
    %543 = vmatpush1.bf16.msra.mxu0 0
    %544 = vmatprep.subr.bf16.mxu0 0
    %545 = vmatpush1.bf16.msra.mxu0 0
    %546 = vmatprep.mubr.bf16.mxu0 0
    %547 = vmatmul.mubr.bf16.gmra.mrb[0].mxu0 %v292
    %v548 = vpop.f32.mrb[0].mxu0
    %v549 = vadd.f32 %v339, %v548
    %v550 = vpop.f32.mrb[0].mxu0
    %v551 = vpop.f32.mrb[0].mxu0
    %v552 = vadd.f32 %v339, %v551
    %v553 = vpop.f32.mrb[0].mxu0
    %554 = vdwg.mxu0
    %v555 = vpack.c.bf16 %v510, %v506
    %v556 = vpack.c.bf16 %v512, %v508
    %v557 = vpack.c.bf16 %v552, %v549
    %v559 = vunpack.c.l.b16 %v555
    %v560 = vunpack.c.h.b16 %v555
    %v561 = vpack.c.b16 %v559, %v559
    %v562 = vpack.c.b16 %v560, %v560
    %v564 = vunpack.c.l.b16 %v556
    %v565 = vunpack.c.h.b16 %v556
    %v566 = vpack.c.b16 %v564, %v564
    %v567 = vpack.c.b16 %v565, %v565
    %v569 = vunpack.c.l.b16 %v557
    %v570 = vunpack.c.h.b16 %v557
    %v571 = vpack.c.b16 %v569, %v569
    %v572 = vpack.c.b16 %v570, %v570
    %v574 = vsel %vm179, %v561, 0
    %v577 = vsel %vm179, %v566, 0
    %579 = vmatprep.subr.bf16.mxu0 0
    %580 = vmatpush1.bf16.xpose.msra.mxu0 %v577
    %581 = vmatprep.subr.bf16.mxu0 0
    %582 = vmatpush1.bf16.xpose.msra.mxu0 0
    %583 = vmatprep.subr.bf16.mxu0 0
    %584 = vmatpush1.bf16.xpose.msra.mxu0 0
    %585 = vmatprep.subr.bf16.mxu0 0
    %586 = vmatpush1.bf16.xpose.msra.mxu0 0
    %587 = vmatprep.subr.bf16.mxu0 0
    %588 = vmatpush1.bf16.xpose.msra.mxu0 0
    %589 = vmatprep.subr.bf16.mxu0 0
    %590 = vmatpush1.bf16.xpose.msra.mxu0 0
    %591 = vmatprep.subr.bf16.mxu0 0
    %592 = vmatpush1.bf16.xpose.msra.mxu0 0
    %593 = vmatprep.subr.bf16.mxu0 0
    %594 = vmatpush1.bf16.xpose.msra.mxu0 0
    %595 = vmatprep.subr.bf16.mxu0 0
    %596 = vmatpush1.bf16.xpose.msra.mxu0 0
    %597 = vmatprep.subr.bf16.mxu0 0
    %598 = vmatpush1.bf16.xpose.msra.mxu0 0
    %599 = vmatprep.subr.bf16.mxu0 0
    %600 = vmatpush1.bf16.xpose.msra.mxu0 0
    %601 = vmatprep.subr.bf16.mxu0 0
    %602 = vmatpush1.bf16.xpose.msra.mxu0 0
    %603 = vmatprep.subr.bf16.mxu0 0
    %604 = vmatpush1.bf16.xpose.msra.mxu0 0
    %605 = vmatprep.subr.bf16.mxu0 0
    %606 = vmatpush1.bf16.xpose.msra.mxu0 0
    %607 = vmatprep.subr.bf16.mxu0 0
    %608 = vmatpush1.bf16.xpose.msra.mxu0 0
    %609 = vmatprep.subr.bf16.mxu0 0
    %610 = vmatpush1.bf16.xpose.msra.mxu0 0
    %611 = vmatprep.mubr.bf16.mxu0 0
    %612 = vmatmul.mubr.bf16.gmra.mrb[0].mxu0 %v574
    %v613 = vpop.f32.mrb[0].mxu0
    %v614 = vadd.f32 0.0, %v613
    %v615 = vpop.f32.mrb[0].mxu0
    %v616 = vpop.f32.mrb[0].mxu0
    %v617 = vpop.f32.mrb[0].mxu0
    %618 = vdwg.mxu0
    %v620 = vsel %vm179, %v562, 0
    %v623 = vsel %vm179, %v567, 0
    %625 = vmatprep.subr.bf16.mxu0 0
    %626 = vmatpush1.bf16.xpose.msra.mxu0 %v623
    %627 = vmatprep.subr.bf16.mxu0 0
    %628 = vmatpush1.bf16.xpose.msra.mxu0 0
    %629 = vmatprep.subr.bf16.mxu0 0
    %630 = vmatpush1.bf16.xpose.msra.mxu0 0
    %631 = vmatprep.subr.bf16.mxu0 0
    %632 = vmatpush1.bf16.xpose.msra.mxu0 0
    %633 = vmatprep.subr.bf16.mxu0 0
    %634 = vmatpush1.bf16.xpose.msra.mxu0 0
    %635 = vmatprep.subr.bf16.mxu0 0
    %636 = vmatpush1.bf16.xpose.msra.mxu0 0
    %637 = vmatprep.subr.bf16.mxu0 0
    %638 = vmatpush1.bf16.xpose.msra.mxu0 0
    %639 = vmatprep.subr.bf16.mxu0 0
    %640 = vmatpush1.bf16.xpose.msra.mxu0 0
    %641 = vmatprep.subr.bf16.mxu0 0
    %642 = vmatpush1.bf16.xpose.msra.mxu0 0
    %643 = vmatprep.subr.bf16.mxu0 0
    %644 = vmatpush1.bf16.xpose.msra.mxu0 0
    %645 = vmatprep.subr.bf16.mxu0 0
    %646 = vmatpush1.bf16.xpose.msra.mxu0 0
    %647 = vmatprep.subr.bf16.mxu0 0
    %648 = vmatpush1.bf16.xpose.msra.mxu0 0
    %649 = vmatprep.subr.bf16.mxu0 0
    %650 = vmatpush1.bf16.xpose.msra.mxu0 0
    %651 = vmatprep.subr.bf16.mxu0 0
    %652 = vmatpush1.bf16.xpose.msra.mxu0 0
    %653 = vmatprep.subr.bf16.mxu0 0
    %654 = vmatpush1.bf16.xpose.msra.mxu0 0
    %655 = vmatprep.subr.bf16.mxu0 0
    %656 = vmatpush1.bf16.xpose.msra.mxu0 0
    %657 = vmatprep.mubr.bf16.mxu0 0
    %658 = vmatmul.mubr.bf16.gmra.mrb[0].mxu0 %v620
    %v659 = vpop.f32.mrb[0].mxu0
    %v660 = vadd.f32 0.0, %v659
    %v661 = vpop.f32.mrb[0].mxu0
    %v662 = vpop.f32.mrb[0].mxu0
    %v663 = vpop.f32.mrb[0].mxu0
    %664 = vdwg.mxu0
    %v665 = vmul.f32 %v614, 0.125
    %v666 = vmul.f32 %v660, 0.125
    %v667 = vadd.f32 %v665, %v285
    %v668 = vadd.f32 %v666, %v289
    %vm669 = vcmask 64512
    %v670 = vsel %vm669, %v667, -inf
    %671 = vmax.xlane.f32.xlu0 %v670
    %v672 = vpop.xlane.xlu0 %671
    %v673 = vsel %vm669, %v668, -inf
    %674 = vmax.xlane.f32.xlu0 %v673
    %v675 = vpop.xlane.xlu0 %674
    %v676 = vsub.f32 %v667, %v672
    %v677 = vsub.f32 %v668, %v675
    %v678 = vmul.f32 %v676, 1.442695
    %v679 = vpow.pop %v678
    %v680 = vmul.f32 %v677, 1.442695
    %v681 = vpow.pop %v680
    %v682 = vsel %vm669, %v679, 0.0
    %683 = vadd.xlane.f32.xlu0 %v682
    %v684 = vpop.xlane.xlu0 %683
    %v685 = vsel %vm669, %v681, 0.0
    %686 = vadd.xlane.f32.xlu0 %v685
    %v687 = vpop.xlane.xlu0 %686
    %v688 = vrcp.pop %v684
    %v689 = vrcp.pop %v687
    %v690 = vmul.f32 %v679, %v688
    %v691 = vmul.f32 %v681, %v689
    %v692 = vpack.c.bf16 %v690, %v690
    %v693 = vpack.c.bf16 %v691, %v691
    %v695 = vsel %vm669, %v692, 0
    %vm697 = vcmask 1043456
    %v699 = vsel %vm697, %v571, 0
    %701 = vmatprep.subr.bf16.mxu0 0
    %702 = vmatpush1.bf16.msra.mxu0 %v699
    %703 = vmatprep.subr.bf16.mxu0 0
    %704 = vmatpush1.bf16.msra.mxu0 0
    %705 = vmatprep.subr.bf16.mxu0 0
    %706 = vmatpush1.bf16.msra.mxu0 0
    %707 = vmatprep.subr.bf16.mxu0 0
    %708 = vmatpush1.bf16.msra.mxu0 0
    %709 = vmatprep.subr.bf16.mxu0 0
    %710 = vmatpush1.bf16.msra.mxu0 0
    %711 = vmatprep.subr.bf16.mxu0 0
    %712 = vmatpush1.bf16.msra.mxu0 0
    %713 = vmatprep.subr.bf16.mxu0 0
    %714 = vmatpush1.bf16.msra.mxu0 0
    %715 = vmatprep.subr.bf16.mxu0 0
    %716 = vmatpush1.bf16.msra.mxu0 0
    %717 = vmatprep.subr.bf16.mxu0 0
    %718 = vmatpush1.bf16.msra.mxu0 0
    %719 = vmatprep.subr.bf16.mxu0 0
    %720 = vmatpush1.bf16.msra.mxu0 0
    %721 = vmatprep.subr.bf16.mxu0 0
    %722 = vmatpush1.bf16.msra.mxu0 0
    %723 = vmatprep.subr.bf16.mxu0 0
    %724 = vmatpush1.bf16.msra.mxu0 0
    %725 = vmatprep.subr.bf16.mxu0 0
    %726 = vmatpush1.bf16.msra.mxu0 0
    %727 = vmatprep.subr.bf16.mxu0 0
    %728 = vmatpush1.bf16.msra.mxu0 0
    %729 = vmatprep.subr.bf16.mxu0 0
    %730 = vmatpush1.bf16.msra.mxu0 0
    %731 = vmatprep.subr.bf16.mxu0 0
    %732 = vmatpush1.bf16.msra.mxu0 0
    %733 = vmatprep.mubr.bf16.mxu0 0
    %734 = vmatmul.mubr.bf16.gmra.mrb[0].mxu0 %v695
    %v735 = vpop.f32.mrb[0].mxu0
    %v736 = vadd.f32 0.0, %v735
    %v737 = vpop.f32.mrb[0].mxu0
    %v738 = vpop.f32.mrb[0].mxu0
    %v739 = vpop.f32.mrb[0].mxu0
    %740 = vdwg.mxu0
    %v742 = vsel %vm669, %v693, 0
    %v745 = vsel %vm697, %v572, 0
    %747 = vmatprep.subr.bf16.mxu0 0
    %748 = vmatpush1.bf16.msra.mxu0 %v745
    %749 = vmatprep.subr.bf16.mxu0 0
    %750 = vmatpush1.bf16.msra.mxu0 0
    %751 = vmatprep.subr.bf16.mxu0 0
    %752 = vmatpush1.bf16.msra.mxu0 0
    %753 = vmatprep.subr.bf16.mxu0 0
    %754 = vmatpush1.bf16.msra.mxu0 0
    %755 = vmatprep.subr.bf16.mxu0 0
    %756 = vmatpush1.bf16.msra.mxu0 0
    %757 = vmatprep.subr.bf16.mxu0 0
    %758 = vmatpush1.bf16.msra.mxu0 0
    %759 = vmatprep.subr.bf16.mxu0 0
    %760 = vmatpush1.bf16.msra.mxu0 0
    %761 = vmatprep.subr.bf16.mxu0 0
    %762 = vmatpush1.bf16.msra.mxu0 0
    %763 = vmatprep.subr.bf16.mxu0 0
    %764 = vmatpush1.bf16.msra.mxu0 0
    %765 = vmatprep.subr.bf16.mxu0 0
    %766 = vmatpush1.bf16.msra.mxu0 0
    %767 = vmatprep.subr.bf16.mxu0 0
    %768 = vmatpush1.bf16.msra.mxu0 0
    %769 = vmatprep.subr.bf16.mxu0 0
    %770 = vmatpush1.bf16.msra.mxu0 0
    %771 = vmatprep.subr.bf16.mxu0 0
    %772 = vmatpush1.bf16.msra.mxu0 0
    %773 = vmatprep.subr.bf16.mxu0 0
    %774 = vmatpush1.bf16.msra.mxu0 0
    %775 = vmatprep.subr.bf16.mxu0 0
    %776 = vmatpush1.bf16.msra.mxu0 0
    %777 = vmatprep.subr.bf16.mxu0 0
    %778 = vmatpush1.bf16.msra.mxu0 0
    %779 = vmatprep.mubr.bf16.mxu0 0
    %780 = vmatmul.mubr.bf16.gmra.mrb[0].mxu0 %v742
    %v781 = vpop.f32.mrb[0].mxu0
    %v782 = vadd.f32 0.0, %v781
    %v783 = vpop.f32.mrb[0].mxu0
    %v784 = vpop.f32.mrb[0].mxu0
    %v785 = vpop.f32.mrb[0].mxu0
    %786 = vdwg.mxu0
    %787 = vrot.lane.b32.xlu0 %v561, 64
    %v788 = vpop.permute.xlu0 %787
    %789 = vrot.lane.b32.xlu0 %v566, 64
    %v790 = vpop.permute.xlu0 %789
    %v792 = vsel %vm179, %v788, 0
    %v795 = vsel %vm179, %v790, 0
    %797 = vmatprep.subr.bf16.mxu0 0
    %798 = vmatpush1.bf16.xpose.msra.mxu0 %v795
    %799 = vmatprep.subr.bf16.mxu0 0
    %800 = vmatpush1.bf16.xpose.msra.mxu0 0
    %801 = vmatprep.subr.bf16.mxu0 0
    %802 = vmatpush1.bf16.xpose.msra.mxu0 0
    %803 = vmatprep.subr.bf16.mxu0 0
    %804 = vmatpush1.bf16.xpose.msra.mxu0 0
    %805 = vmatprep.subr.bf16.mxu0 0
    %806 = vmatpush1.bf16.xpose.msra.mxu0 0
    %807 = vmatprep.subr.bf16.mxu0 0
    %808 = vmatpush1.bf16.xpose.msra.mxu0 0
    %809 = vmatprep.subr.bf16.mxu0 0
    %810 = vmatpush1.bf16.xpose.msra.mxu0 0
    %811 = vmatprep.subr.bf16.mxu0 0
    %812 = vmatpush1.bf16.xpose.msra.mxu0 0
    %813 = vmatprep.subr.bf16.mxu0 0
    %814 = vmatpush1.bf16.xpose.msra.mxu0 0
    %815 = vmatprep.subr.bf16.mxu0 0
    %816 = vmatpush1.bf16.xpose.msra.mxu0 0
    %817 = vmatprep.subr.bf16.mxu0 0
    %818 = vmatpush1.bf16.xpose.msra.mxu0 0
    %819 = vmatprep.subr.bf16.mxu0 0
    %820 = vmatpush1.bf16.xpose.msra.mxu0 0
    %821 = vmatprep.subr.bf16.mxu0 0
    %822 = vmatpush1.bf16.xpose.msra.mxu0 0
    %823 = vmatprep.subr.bf16.mxu0 0
    %824 = vmatpush1.bf16.xpose.msra.mxu0 0
    %825 = vmatprep.subr.bf16.mxu0 0
    %826 = vmatpush1.bf16.xpose.msra.mxu0 0
    %827 = vmatprep.subr.bf16.mxu0 0
    %828 = vmatpush1.bf16.xpose.msra.mxu0 0
    %829 = vmatprep.mubr.bf16.mxu0 0
    %830 = vmatmul.mubr.bf16.gmra.mrb[0].mxu0 %v792
    %v831 = vpop.f32.mrb[0].mxu0
    %v832 = vadd.f32 0.0, %v831
    %v833 = vpop.f32.mrb[0].mxu0
    %v834 = vpop.f32.mrb[0].mxu0
    %v835 = vpop.f32.mrb[0].mxu0
    %836 = vdwg.mxu0
    %837 = vrot.lane.b32.xlu0 %v562, 64
    %v838 = vpop.permute.xlu0 %837
    %839 = vrot.lane.b32.xlu0 %v567, 64
    %v840 = vpop.permute.xlu0 %839
    %v842 = vsel %vm179, %v838, 0
    %v845 = vsel %vm179, %v840, 0
    %847 = vmatprep.subr.bf16.mxu0 0
    %848 = vmatpush1.bf16.xpose.msra.mxu0 %v845
    %849 = vmatprep.subr.bf16.mxu0 0
    %850 = vmatpush1.bf16.xpose.msra.mxu0 0
    %851 = vmatprep.subr.bf16.mxu0 0
    %852 = vmatpush1.bf16.xpose.msra.mxu0 0
    %853 = vmatprep.subr.bf16.mxu0 0
    %854 = vmatpush1.bf16.xpose.msra.mxu0 0
    %855 = vmatprep.subr.bf16.mxu0 0
    %856 = vmatpush1.bf16.xpose.msra.mxu0 0
    %857 = vmatprep.subr.bf16.mxu0 0
    %858 = vmatpush1.bf16.xpose.msra.mxu0 0
    %859 = vmatprep.subr.bf16.mxu0 0
    %860 = vmatpush1.bf16.xpose.msra.mxu0 0
    %861 = vmatprep.subr.bf16.mxu0 0
    %862 = vmatpush1.bf16.xpose.msra.mxu0 0
    %863 = vmatprep.subr.bf16.mxu0 0
    %864 = vmatpush1.bf16.xpose.msra.mxu0 0
    %865 = vmatprep.subr.bf16.mxu0 0
    %866 = vmatpush1.bf16.xpose.msra.mxu0 0
    %867 = vmatprep.subr.bf16.mxu0 0
    %868 = vmatpush1.bf16.xpose.msra.mxu0 0
    %869 = vmatprep.subr.bf16.mxu0 0
    %870 = vmatpush1.bf16.xpose.msra.mxu0 0
    %871 = vmatprep.subr.bf16.mxu0 0
    %872 = vmatpush1.bf16.xpose.msra.mxu0 0
    %873 = vmatprep.subr.bf16.mxu0 0
    %874 = vmatpush1.bf16.xpose.msra.mxu0 0
    %875 = vmatprep.subr.bf16.mxu0 0
    %876 = vmatpush1.bf16.xpose.msra.mxu0 0
    %877 = vmatprep.subr.bf16.mxu0 0
    %878 = vmatpush1.bf16.xpose.msra.mxu0 0
    %879 = vmatprep.mubr.bf16.mxu0 0
    %880 = vmatmul.mubr.bf16.gmra.mrb[0].mxu0 %v842
    %v881 = vpop.f32.mrb[0].mxu0
    %v882 = vadd.f32 0.0, %v881
    %v883 = vpop.f32.mrb[0].mxu0
    %v884 = vpop.f32.mrb[0].mxu0
    %v885 = vpop.f32.mrb[0].mxu0
    %886 = vdwg.mxu0
    %v887 = vmul.f32 %v832, 0.125
    %v888 = vmul.f32 %v882, 0.125
    %v889 = vadd.f32 %v887, %v285
    %v890 = vadd.f32 %v888, %v289
    %v891 = vsel %vm669, %v889, -inf
    %892 = vmax.xlane.f32.xlu0 %v891
    %v893 = vpop.xlane.xlu0 %892
    %v894 = vsel %vm669, %v890, -inf
    %895 = vmax.xlane.f32.xlu0 %v894
    %v896 = vpop.xlane.xlu0 %895
    %v897 = vsub.f32 %v889, %v893
    %v898 = vsub.f32 %v890, %v896
    %v899 = vmul.f32 %v897, 1.442695
    %v900 = vpow.pop %v899
    %v901 = vmul.f32 %v898, 1.442695
    %v902 = vpow.pop %v901
    %v903 = vsel %vm669, %v900, 0.0
    %904 = vadd.xlane.f32.xlu0 %v903
    %v905 = vpop.xlane.xlu0 %904
    %v906 = vsel %vm669, %v902, 0.0
    %907 = vadd.xlane.f32.xlu0 %v906
    %v908 = vpop.xlane.xlu0 %907
    %v909 = vrcp.pop %v905
    %v910 = vrcp.pop %v908
    %v911 = vmul.f32 %v900, %v909
    %v912 = vmul.f32 %v902, %v910
    %v913 = vpack.c.bf16 %v911, %v911
    %v914 = vpack.c.bf16 %v912, %v912
    %915 = vrot.lane.b32.xlu0 %v571, 64
    %v916 = vpop.permute.xlu0 %915
    %v918 = vsel %vm669, %v913, 0
    %v921 = vsel %vm697, %v916, 0
    %923 = vmatprep.subr.bf16.mxu0 0
    %924 = vmatpush1.bf16.msra.mxu0 %v921
    %925 = vmatprep.subr.bf16.mxu0 0
    %926 = vmatpush1.bf16.msra.mxu0 0
    %927 = vmatprep.subr.bf16.mxu0 0
    %928 = vmatpush1.bf16.msra.mxu0 0
    %929 = vmatprep.subr.bf16.mxu0 0
    %930 = vmatpush1.bf16.msra.mxu0 0
    %931 = vmatprep.subr.bf16.mxu0 0
    %932 = vmatpush1.bf16.msra.mxu0 0
    %933 = vmatprep.subr.bf16.mxu0 0
    %934 = vmatpush1.bf16.msra.mxu0 0
    %935 = vmatprep.subr.bf16.mxu0 0
    %936 = vmatpush1.bf16.msra.mxu0 0
    %937 = vmatprep.subr.bf16.mxu0 0
    %938 = vmatpush1.bf16.msra.mxu0 0
    %939 = vmatprep.subr.bf16.mxu0 0
    %940 = vmatpush1.bf16.msra.mxu0 0
    %941 = vmatprep.subr.bf16.mxu0 0
    %942 = vmatpush1.bf16.msra.mxu0 0
    %943 = vmatprep.subr.bf16.mxu0 0
    %944 = vmatpush1.bf16.msra.mxu0 0
    %945 = vmatprep.subr.bf16.mxu0 0
    %946 = vmatpush1.bf16.msra.mxu0 0
    %947 = vmatprep.subr.bf16.mxu0 0
    %948 = vmatpush1.bf16.msra.mxu0 0
    %949 = vmatprep.subr.bf16.mxu0 0
    %950 = vmatpush1.bf16.msra.mxu0 0
    %951 = vmatprep.subr.bf16.mxu0 0
    %952 = vmatpush1.bf16.msra.mxu0 0
    %953 = vmatprep.subr.bf16.mxu0 0
    %954 = vmatpush1.bf16.msra.mxu0 0
    %955 = vmatprep.mubr.bf16.mxu0 0
    %956 = vmatmul.mubr.bf16.gmra.mrb[0].mxu0 %v918
    %v957 = vpop.f32.mrb[0].mxu0
    %v958 = vadd.f32 0.0, %v957
    %v959 = vpop.f32.mrb[0].mxu0
    %v960 = vpop.f32.mrb[0].mxu0
    %v961 = vpop.f32.mrb[0].mxu0
    %962 = vdwg.mxu0
    %963 = vrot.lane.b32.xlu0 %v572, 64
    %v964 = vpop.permute.xlu0 %963
    %v966 = vsel %vm669, %v914, 0
    %v969 = vsel %vm697, %v964, 0
    %971 = vmatprep.subr.bf16.mxu0 0
    %972 = vmatpush1.bf16.msra.mxu0 %v969
    %973 = vmatprep.subr.bf16.mxu0 0
    %974 = vmatpush1.bf16.msra.mxu0 0
    %975 = vmatprep.subr.bf16.mxu0 0
    %976 = vmatpush1.bf16.msra.mxu0 0
    %977 = vmatprep.subr.bf16.mxu0 0
    %978 = vmatpush1.bf16.msra.mxu0 0
    %979 = vmatprep.subr.bf16.mxu0 0
    %980 = vmatpush1.bf16.msra.mxu0 0
    %981 = vmatprep.subr.bf16.mxu0 0
    %982 = vmatpush1.bf16.msra.mxu0 0
    %983 = vmatprep.subr.bf16.mxu0 0
    %984 = vmatpush1.bf16.msra.mxu0 0
    %985 = vmatprep.subr.bf16.mxu0 0
    %986 = vmatpush1.bf16.msra.mxu0 0
    %987 = vmatprep.subr.bf16.mxu0 0
    %988 = vmatpush1.bf16.msra.mxu0 0
    %989 = vmatprep.subr.bf16.mxu0 0
    %990 = vmatpush1.bf16.msra.mxu0 0
    %991 = vmatprep.subr.bf16.mxu0 0
    %992 = vmatpush1.bf16.msra.mxu0 0
    %993 = vmatprep.subr.bf16.mxu0 0
    %994 = vmatpush1.bf16.msra.mxu0 0
    %995 = vmatprep.subr.bf16.mxu0 0
    %996 = vmatpush1.bf16.msra.mxu0 0
    %997 = vmatprep.subr.bf16.mxu0 0
    %998 = vmatpush1.bf16.msra.mxu0 0
    %999 = vmatprep.subr.bf16.mxu0 0
    %1000 = vmatpush1.bf16.msra.mxu0 0
    %1001 = vmatprep.subr.bf16.mxu0 0
    %1002 = vmatpush1.bf16.msra.mxu0 0
    %1003 = vmatprep.mubr.bf16.mxu0 0
    %1004 = vmatmul.mubr.bf16.gmra.mrb[0].mxu0 %v966
    %v1005 = vpop.f32.mrb[0].mxu0
    %v1006 = vadd.f32 0.0, %v1005
    %v1007 = vpop.f32.mrb[0].mxu0
    %v1008 = vpop.f32.mrb[0].mxu0
    %v1009 = vpop.f32.mrb[0].mxu0
    %1010 = vdwg.mxu0
    %1013 = vrot.lane.b32.xlu0 %v958, 64
    %v1014 = vpop.permute.xlu0 %1013
    %1015 = vrot.lane.b32.xlu0 %v1006, 64
    %v1016 = vpop.permute.xlu0 %1015
    %v1019 = vsel %vm179, %v736, %v1014
    %v1020 = vsel %vm179, %v782, %v1016
    %v1021 = vpack.c.bf16 %v1020, %v1019
    %v1022 = vld [vmem:[#allocation7] sm:$0xf]
    %v1023 = vld [vmem:[#allocation7 + $0x4] sm:$0xf]
    %v1024 = vld [vmem:[#allocation7 + $0x8] sm:$0xf]
    %v1025 = vld [vmem:[#allocation7 + $0xc] sm:$0xf]
    %v1026 = vld [vmem:[#allocation7 + $0x10] sm:$0xf]
    %v1027 = vld [vmem:[#allocation7 + $0x14] sm:$0xf]
    %v1028 = vld [vmem:[#allocation7 + $0x18] sm:$0xf]
    %v1029 = vld [vmem:[#allocation7 + $0x1c] sm:$0xf]
    %v1030 = vld [vmem:[#allocation7 + $0x20] sm:$0xf]
    %v1031 = vld [vmem:[#allocation7 + $0x24] sm:$0xf]
    %v1032 = vld [vmem:[#allocation7 + $0x28] sm:$0xf]
    %v1033 = vld [vmem:[#allocation7 + $0x2c] sm:$0xf]
    %v1034 = vld [vmem:[#allocation7 + $0x30] sm:$0xf]
    %v1035 = vld [vmem:[#allocation7 + $0x34] sm:$0xf]
    %v1036 = vld [vmem:[#allocation7 + $0x38] sm:$0xf]
    %v1037 = vld [vmem:[#allocation7 + $0x3c] sm:$0xf]
    %v1038 = vld [vmem:[#allocation13 + $0x4] ss:$0 sm:$0xff]
    %v1055 = vunpack.c.l.b16 %v1022
    %v1056 = vunpack.c.l.b16 %v1023
    %v1057 = vunpack.c.l.b16 %v1024
    %v1058 = vunpack.c.l.b16 %v1025
    %v1059 = vunpack.c.l.b16 %v1026
    %v1060 = vunpack.c.l.b16 %v1027
    %v1061 = vunpack.c.l.b16 %v1028
    %v1062 = vunpack.c.l.b16 %v1029
    %v1063 = vunpack.c.l.b16 %v1030
    %v1064 = vunpack.c.l.b16 %v1031
    %v1065 = vunpack.c.l.b16 %v1032
    %v1066 = vunpack.c.l.b16 %v1033
    %v1067 = vunpack.c.l.b16 %v1034
    %v1068 = vunpack.c.l.b16 %v1035
    %v1069 = vunpack.c.l.b16 %v1036
    %v1070 = vunpack.c.l.b16 %v1037
    %v1071 = vpack.c.b16 %v1056, %v1055
    %v1072 = vpack.c.b16 %v1058, %v1057
    %v1073 = vpack.c.b16 %v1060, %v1059
    %v1074 = vpack.c.b16 %v1062, %v1061
    %v1075 = vpack.c.b16 %v1064, %v1063
    %v1076 = vpack.c.b16 %v1066, %v1065
    %v1077 = vpack.c.b16 %v1068, %v1067
    %v1078 = vpack.c.b16 %v1070, %v1069
    %1087 = vmatprep.subr.bf16.mxu0 0
    %1088 = vmatpush1.bf16.msra.mxu0 %v1071
    %1089 = vmatprep.subr.bf16.mxu0 0
    %1090 = vmatpush1.bf16.msra.mxu0 %v1072
    %1091 = vmatprep.subr.bf16.mxu0 0
    %1092 = vmatpush1.bf16.msra.mxu0 %v1073
    %1093 = vmatprep.subr.bf16.mxu0 0
    %1094 = vmatpush1.bf16.msra.mxu0 %v1074
    %1095 = vmatprep.subr.bf16.mxu0 0
    %1096 = vmatpush1.bf16.msra.mxu0 %v1075
    %1097 = vmatprep.subr.bf16.mxu0 0
    %1098 = vmatpush1.bf16.msra.mxu0 %v1076
    %1099 = vmatprep.subr.bf16.mxu0 0
    %1100 = vmatpush1.bf16.msra.mxu0 %v1077
    %1101 = vmatprep.subr.bf16.mxu0 0
    %1102 = vmatpush1.bf16.msra.mxu0 %v1078
    %1103 = vmatprep.subr.bf16.mxu0 0
    %1104 = vmatpush1.bf16.msra.mxu0 0
    %1105 = vmatprep.subr.bf16.mxu0 0
    %1106 = vmatpush1.bf16.msra.mxu0 0
    %1107 = vmatprep.subr.bf16.mxu0 0
    %1108 = vmatpush1.bf16.msra.mxu0 0
    %1109 = vmatprep.subr.bf16.mxu0 0
    %1110 = vmatpush1.bf16.msra.mxu0 0
    %1111 = vmatprep.subr.bf16.mxu0 0
    %1112 = vmatpush1.bf16.msra.mxu0 0
    %1113 = vmatprep.subr.bf16.mxu0 0
    %1114 = vmatpush1.bf16.msra.mxu0 0
    %1115 = vmatprep.subr.bf16.mxu0 0
    %1116 = vmatpush1.bf16.msra.mxu0 0
    %1117 = vmatprep.subr.bf16.mxu0 0
    %1118 = vmatpush1.bf16.msra.mxu0 0
    %1119 = vmatprep.mubr.bf16.mxu0 0
    %1120 = vmatmul.mubr.bf16.gmra.mrb[0].mxu0 %v1021
    %v1121 = vpop.f32.mrb[0].mxu0
    %v1122 = vadd.f32 %v1038, %v1121
    %v1123 = vpop.f32.mrb[0].mxu0
    %v1124 = vpop.f32.mrb[0].mxu0
    %v1125 = vadd.f32 %v1038, %v1124
    %v1126 = vpop.f32.mrb[0].mxu0
    %1127 = vdwg.mxu0
    %v1128 = vadd.f32 %v1122, %v254
    %v1129 = vadd.f32 %v1125, %v255
    %v1130 = vld [vmem:[#allocation13 + $0x5] ss:$0 sm:$0xff]
    %v1131 = vld [vmem:[#allocation13 + $0x6] ss:$0 sm:$0xff]
    %1132 = vadd.xlane.f32.xlu0 %v1128
    %v1133 = vpop.xlane.xlu0 %1132
    %1134 = vadd.xlane.f32.xlu0 %v1129
    %v1135 = vpop.xlane.xlu0 %1134
    %v1136 = vmul.f32 %v1133, %v233
    %v1137 = vmul.f32 %v1135, %v233
    %v1138 = vsub.f32 %v1128, %v1136
    %v1139 = vsub.f32 %v1129, %v1137
    %v1140 = vmul.f32 %v1138, %v1138
    %v1141 = vmul.f32 %v1139, %v1139
    %1142 = vadd.xlane.f32.xlu0 %v1140
    %v1143 = vpop.xlane.xlu0 %1142
    %1144 = vadd.xlane.f32.xlu0 %v1141
    %v1145 = vpop.xlane.xlu0 %1144
    %v1146 = vmul.f32 %v1143, %v233
    %v1147 = vmul.f32 %v1145, %v233
    %v1148 = vadd.f32 %v1146, 1e-12
    %v1149 = vadd.f32 %v1147, 1e-12
    %v1150 = vrsqrt.pop %v1148
    %v1151 = vrsqrt.pop %v1149
    %v1152 = vmul.f32 %v1138, %v1150
    %v1153 = vmul.f32 %v1139, %v1151
    %v1154 = vmul.f32 %v1152, %v1130
    %v1155 = vmul.f32 %v1153, %v1130
    %v1156 = vadd.f32 %v1154, %v1131
    %v1157 = vadd.f32 %v1155, %v1131
    %v1158 = vpack.c.bf16 %v1157, %v1156
    %v1159 = vld [vmem:[#allocation8] sm:$0xff]
    %v1160 = vld [vmem:[#allocation8 + $0x8] sm:$0xff]
    %v1161 = vld [vmem:[#allocation8 + $0x10] sm:$0xff]
    %v1162 = vld [vmem:[#allocation8 + $0x18] sm:$0xff]
    %v1163 = vld [vmem:[#allocation8 + $0x20] sm:$0xff]
    %v1164 = vld [vmem:[#allocation8 + $0x28] sm:$0xff]
    %v1165 = vld [vmem:[#allocation8 + $0x30] sm:$0xff]
    %v1166 = vld [vmem:[#allocation8 + $0x38] sm:$0xff]
    %v1167 = vld [vmem:[#allocation8 + $0x40] sm:$0xff]
    %v1168 = vld [vmem:[#allocation8 + $0x48] sm:$0xff]
    %v1169 = vld [vmem:[#allocation8 + $0x50] sm:$0xff]
    %v1170 = vld [vmem:[#allocation8 + $0x58] sm:$0xff]
    %v1171 = vld [vmem:[#allocation8 + $0x60] sm:$0xff]
    %v1172 = vld [vmem:[#allocation8 + $0x68] sm:$0xff]
    %v1173 = vld [vmem:[#allocation8 + $0x70] sm:$0xff]
    %v1174 = vld [vmem:[#allocation8 + $0x78] sm:$0xff]
    %s1175 = scalar_lea.vmem [#allocation13], 7
    %v1176 = vld [vmem:[%s1175] ss:$8 sm:$0x3]
    %v1178 = vlaneseq
    %v1179 = vshrl.u32 %v1178, 7
    %v1180 = vsub.s32 0, %v1179
    %v1181 = vrot.slane %v1176, %v1180
    %v1182 = vlaneseq
    %v1183 = vshrl.u32 %v1182, 7
    %v1184 = vsub.s32 1, %v1183
    %v1185 = vrot.slane %v1176, %v1184
    %v1204 = vunpack.c.l.b16 %v1159
    %v1205 = vunpack.c.h.b16 %v1159
    %v1206 = vunpack.c.l.b16 %v1160
    %v1207 = vunpack.c.h.b16 %v1160
    %v1208 = vunpack.c.l.b16 %v1161
    %v1209 = vunpack.c.h.b16 %v1161
    %v1210 = vunpack.c.l.b16 %v1162
    %v1211 = vunpack.c.h.b16 %v1162
    %v1212 = vunpack.c.l.b16 %v1163
    %v1213 = vunpack.c.h.b16 %v1163
    %v1214 = vunpack.c.l.b16 %v1164
    %v1215 = vunpack.c.h.b16 %v1164
    %v1216 = vunpack.c.l.b16 %v1165
    %v1217 = vunpack.c.h.b16 %v1165
    %v1218 = vunpack.c.l.b16 %v1166
    %v1219 = vunpack.c.h.b16 %v1166
    %v1220 = vunpack.c.l.b16 %v1167
    %v1221 = vunpack.c.h.b16 %v1167
    %v1222 = vunpack.c.l.b16 %v1168
    %v1223 = vunpack.c.h.b16 %v1168
    %v1224 = vunpack.c.l.b16 %v1169
    %v1225 = vunpack.c.h.b16 %v1169
    %v1226 = vunpack.c.l.b16 %v1170
    %v1227 = vunpack.c.h.b16 %v1170
    %v1228 = vunpack.c.l.b16 %v1171
    %v1229 = vunpack.c.h.b16 %v1171
    %v1230 = vunpack.c.l.b16 %v1172
    %v1231 = vunpack.c.h.b16 %v1172
    %v1232 = vunpack.c.l.b16 %v1173
    %v1233 = vunpack.c.h.b16 %v1173
    %v1234 = vunpack.c.l.b16 %v1174
    %v1235 = vunpack.c.h.b16 %v1174
    %v1236 = vpack.c.b16 %v1206, %v1204
    %v1237 = vpack.c.b16 %v1207, %v1205
    %v1238 = vpack.c.b16 %v1210, %v1208
    %v1239 = vpack.c.b16 %v1211, %v1209
    %v1240 = vpack.c.b16 %v1214, %v1212
    %v1241 = vpack.c.b16 %v1215, %v1213
    %v1242 = vpack.c.b16 %v1218, %v1216
    %v1243 = vpack.c.b16 %v1219, %v1217
    %v1244 = vpack.c.b16 %v1222, %v1220
    %v1245 = vpack.c.b16 %v1223, %v1221
    %v1246 = vpack.c.b16 %v1226, %v1224
    %v1247 = vpack.c.b16 %v1227, %v1225
    %v1248 = vpack.c.b16 %v1230, %v1228
    %v1249 = vpack.c.b16 %v1231, %v1229
    %v1250 = vpack.c.b16 %v1234, %v1232
    %v1251 = vpack.c.b16 %v1235, %v1233
    %1268 = vmatprep.subr.bf16.mxu0 %v1237
    %1269 = vmatpush1.bf16.msra.mxu0 %v1236
    %1270 = vmatprep.subr.bf16.mxu0 %v1239
    %1271 = vmatpush1.bf16.msra.mxu0 %v1238
    %1272 = vmatprep.subr.bf16.mxu0 %v1241
    %1273 = vmatpush1.bf16.msra.mxu0 %v1240
    %1274 = vmatprep.subr.bf16.mxu0 %v1243
    %1275 = vmatpush1.bf16.msra.mxu0 %v1242
    %1276 = vmatprep.subr.bf16.mxu0 %v1245
    %1277 = vmatpush1.bf16.msra.mxu0 %v1244
    %1278 = vmatprep.subr.bf16.mxu0 %v1247
    %1279 = vmatpush1.bf16.msra.mxu0 %v1246
    %1280 = vmatprep.subr.bf16.mxu0 %v1249
    %1281 = vmatpush1.bf16.msra.mxu0 %v1248
    %1282 = vmatprep.subr.bf16.mxu0 %v1251
    %1283 = vmatpush1.bf16.msra.mxu0 %v1250
    %1284 = vmatprep.subr.bf16.mxu0 0
    %1285 = vmatpush1.bf16.msra.mxu0 0
    %1286 = vmatprep.subr.bf16.mxu0 0
    %1287 = vmatpush1.bf16.msra.mxu0 0
    %1288 = vmatprep.subr.bf16.mxu0 0
    %1289 = vmatpush1.bf16.msra.mxu0 0
    %1290 = vmatprep.subr.bf16.mxu0 0
    %1291 = vmatpush1.bf16.msra.mxu0 0
    %1292 = vmatprep.subr.bf16.mxu0 0
    %1293 = vmatpush1.bf16.msra.mxu0 0
    %1294 = vmatprep.subr.bf16.mxu0 0
    %1295 = vmatpush1.bf16.msra.mxu0 0
    %1296 = vmatprep.subr.bf16.mxu0 0
    %1297 = vmatpush1.bf16.msra.mxu0 0
    %1298 = vmatprep.subr.bf16.mxu0 0
    %1299 = vmatpush1.bf16.msra.mxu0 0
    %1300 = vmatprep.mubr.bf16.mxu0 0
    %1301 = vmatmul.mubr.bf16.gmra.mrb[0].mxu0 %v1158
    %v1302 = vpop.f32.mrb[0].mxu0
    %v1303 = vadd.f32 %v1181, %v1302
    %v1304 = vpop.f32.mrb[0].mxu0
    %v1305 = vadd.f32 %v1185, %v1304
    %v1306 = vpop.f32.mrb[0].mxu0
    %v1307 = vadd.f32 %v1181, %v1306
    %v1308 = vpop.f32.mrb[0].mxu0
    %v1309 = vadd.f32 %v1185, %v1308
    %1310 = vdwg.mxu0
    %v1311 = vmul.f32 %v1303, 0.5
    %v1312 = vmul.f32 %v1305, 0.5
    %v1313 = vmul.f32 %v1307, 0.5
    %v1314 = vmul.f32 %v1309, 0.5
    %v1315 = vmul.f32 %v1303, 0.044715
    %v1316 = vmul.f32 %v1305, 0.044715
    %v1317 = vmul.f32 %v1307, 0.044715
    %v1318 = vmul.f32 %v1309, 0.044715
    %v1319 = vmul.f32 %v1315, %v1303
    %v1320 = vmul.f32 %v1316, %v1305
    %v1321 = vmul.f32 %v1317, %v1307
    %v1322 = vmul.f32 %v1318, %v1309
    %v1323 = vmul.f32 %v1319, %v1303
    %v1324 = vmul.f32 %v1320, %v1305
    %v1325 = vmul.f32 %v1321, %v1307
    %v1326 = vmul.f32 %v1322, %v1309
    %v1327 = vadd.f32 %v1303, %v1323
    %v1328 = vadd.f32 %v1305, %v1324
    %v1329 = vadd.f32 %v1307, %v1325
    %v1330 = vadd.f32 %v1309, %v1326
    %v1331 = vmul.f32 %v1327, 0.7978846
    %v1332 = vmul.f32 %v1328, 0.7978846
    %v1333 = vmul.f32 %v1329, 0.7978846
    %v1334 = vmul.f32 %v1330, 0.7978846
    %v1335 = vtanh.pop %v1331
    %v1336 = vtanh.pop %v1332
    %v1337 = vtanh.pop %v1333
    %v1338 = vtanh.pop %v1334
    %v1339 = vadd.f32 %v1335, 1.0
    %v1340 = vadd.f32 %v1336, 1.0
    %v1341 = vadd.f32 %v1337, 1.0
    %v1342 = vadd.f32 %v1338, 1.0
    %v1343 = vmul.f32 %v1311, %v1339
    %v1344 = vmul.f32 %v1312, %v1340
    %v1345 = vmul.f32 %v1313, %v1341
    %v1346 = vmul.f32 %v1314, %v1342
    %v1347 = vpack.c.bf16 %v1345, %v1343
    %v1348 = vpack.c.bf16 %v1346, %v1344
    %v1349 = vld [vmem:[#allocation10] sm:$0xf]
    %v1350 = vld [vmem:[#allocation10 + $0x4] sm:$0xf]
    %v1351 = vld [vmem:[#allocation10 + $0x8] sm:$0xf]
    %v1352 = vld [vmem:[#allocation10 + $0xc] sm:$0xf]
    %v1353 = vld [vmem:[#allocation10 + $0x10] sm:$0xf]
    %v1354 = vld [vmem:[#allocation10 + $0x14] sm:$0xf]
    %v1355 = vld [vmem:[#allocation10 + $0x18] sm:$0xf]
    %v1356 = vld [vmem:[#allocation10 + $0x1c] sm:$0xf]
    %v1357 = vld [vmem:[#allocation10 + $0x20] sm:$0xf]
    %v1358 = vld [vmem:[#allocation10 + $0x24] sm:$0xf]
    %v1359 = vld [vmem:[#allocation10 + $0x28] sm:$0xf]
    %v1360 = vld [vmem:[#allocation10 + $0x2c] sm:$0xf]
    %v1361 = vld [vmem:[#allocation10 + $0x30] sm:$0xf]
    %v1362 = vld [vmem:[#allocation10 + $0x34] sm:$0xf]
    %v1363 = vld [vmem:[#allocation10 + $0x38] sm:$0xf]
    %v1364 = vld [vmem:[#allocation10 + $0x3c] sm:$0xf]
    %v1365 = vld [vmem:[#allocation10 + $0x40] sm:$0xf]
    %v1366 = vld [vmem:[#allocation10 + $0x44] sm:$0xf]
    %v1367 = vld [vmem:[#allocation10 + $0x48] sm:$0xf]
    %v1368 = vld [vmem:[#allocation10 + $0x4c] sm:$0xf]
    %v1369 = vld [vmem:[#allocation10 + $0x50] sm:$0xf]
    %v1370 = vld [vmem:[#allocation10 + $0x54] sm:$0xf]
    %v1371 = vld [vmem:[#allocation10 + $0x58] sm:$0xf]
    %v1372 = vld [vmem:[#allocation10 + $0x5c] sm:$0xf]
    %v1373 = vld [vmem:[#allocation10 + $0x60] sm:$0xf]
    %v1374 = vld [vmem:[#allocation10 + $0x64] sm:$0xf]
    %v1375 = vld [vmem:[#allocation10 + $0x68] sm:$0xf]
    %v1376 = vld [vmem:[#allocation10 + $0x6c] sm:$0xf]
    %v1377 = vld [vmem:[#allocation10 + $0x70] sm:$0xf]
    %v1378 = vld [vmem:[#allocation10 + $0x74] sm:$0xf]
    %v1379 = vld [vmem:[#allocation10 + $0x78] sm:$0xf]
    %v1380 = vld [vmem:[#allocation10 + $0x7c] sm:$0xf]
    %v1381 = vld [vmem:[#allocation13 + $0x18] ss:$0 sm:$0xff]
    %v1414 = vunpack.c.l.b16 %v1349
    %v1415 = vunpack.c.l.b16 %v1350
    %v1416 = vunpack.c.l.b16 %v1351
    %v1417 = vunpack.c.l.b16 %v1352
    %v1418 = vunpack.c.l.b16 %v1353
    %v1419 = vunpack.c.l.b16 %v1354
    %v1420 = vunpack.c.l.b16 %v1355
    %v1421 = vunpack.c.l.b16 %v1356
    %v1422 = vunpack.c.l.b16 %v1357
    %v1423 = vunpack.c.l.b16 %v1358
    %v1424 = vunpack.c.l.b16 %v1359
    %v1425 = vunpack.c.l.b16 %v1360
    %v1426 = vunpack.c.l.b16 %v1361
    %v1427 = vunpack.c.l.b16 %v1362
    %v1428 = vunpack.c.l.b16 %v1363
    %v1429 = vunpack.c.l.b16 %v1364
    %v1430 = vunpack.c.l.b16 %v1365
    %v1431 = vunpack.c.l.b16 %v1366
    %v1432 = vunpack.c.l.b16 %v1367
    %v1433 = vunpack.c.l.b16 %v1368
    %v1434 = vunpack.c.l.b16 %v1369
    %v1435 = vunpack.c.l.b16 %v1370
    %v1436 = vunpack.c.l.b16 %v1371
    %v1437 = vunpack.c.l.b16 %v1372
    %v1438 = vunpack.c.l.b16 %v1373
    %v1439 = vunpack.c.l.b16 %v1374
    %v1440 = vunpack.c.l.b16 %v1375
    %v1441 = vunpack.c.l.b16 %v1376
    %v1442 = vunpack.c.l.b16 %v1377
    %v1443 = vunpack.c.l.b16 %v1378
    %v1444 = vunpack.c.l.b16 %v1379
    %v1445 = vunpack.c.l.b16 %v1380
    %v1446 = vpack.c.b16 %v1415, %v1414
    %v1447 = vpack.c.b16 %v1417, %v1416
    %v1448 = vpack.c.b16 %v1419, %v1418
    %v1449 = vpack.c.b16 %v1421, %v1420
    %v1450 = vpack.c.b16 %v1423, %v1422
    %v1451 = vpack.c.b16 %v1425, %v1424
    %v1452 = vpack.c.b16 %v1427, %v1426
    %v1453 = vpack.c.b16 %v1429, %v1428
    %v1454 = vpack.c.b16 %v1431, %v1430
    %v1455 = vpack.c.b16 %v1433, %v1432
    %v1456 = vpack.c.b16 %v1435, %v1434
    %v1457 = vpack.c.b16 %v1437, %v1436
    %v1458 = vpack.c.b16 %v1439, %v1438
    %v1459 = vpack.c.b16 %v1441, %v1440
    %v1460 = vpack.c.b16 %v1443, %v1442
    %v1461 = vpack.c.b16 %v1445, %v1444
    %1478 = vmatprep.subr.bf16.mxu0 0
    %1479 = vmatpush1.bf16.msra.mxu0 %v1446
    %1480 = vmatprep.subr.bf16.mxu0 0
    %1481 = vmatpush1.bf16.msra.mxu0 %v1447
    %1482 = vmatprep.subr.bf16.mxu0 0
    %1483 = vmatpush1.bf16.msra.mxu0 %v1448
    %1484 = vmatprep.subr.bf16.mxu0 0
    %1485 = vmatpush1.bf16.msra.mxu0 %v1449
    %1486 = vmatprep.subr.bf16.mxu0 0
    %1487 = vmatpush1.bf16.msra.mxu0 %v1450
    %1488 = vmatprep.subr.bf16.mxu0 0
    %1489 = vmatpush1.bf16.msra.mxu0 %v1451
    %1490 = vmatprep.subr.bf16.mxu0 0
    %1491 = vmatpush1.bf16.msra.mxu0 %v1452
    %1492 = vmatprep.subr.bf16.mxu0 0
    %1493 = vmatpush1.bf16.msra.mxu0 %v1453
    %1494 = vmatprep.subr.bf16.mxu0 0
    %1495 = vmatpush1.bf16.msra.mxu0 %v1454
    %1496 = vmatprep.subr.bf16.mxu0 0
    %1497 = vmatpush1.bf16.msra.mxu0 %v1455
    %1498 = vmatprep.subr.bf16.mxu0 0
    %1499 = vmatpush1.bf16.msra.mxu0 %v1456
    %1500 = vmatprep.subr.bf16.mxu0 0
    %1501 = vmatpush1.bf16.msra.mxu0 %v1457
    %1502 = vmatprep.subr.bf16.mxu0 0
    %1503 = vmatpush1.bf16.msra.mxu0 %v1458
    %1504 = vmatprep.subr.bf16.mxu0 0
    %1505 = vmatpush1.bf16.msra.mxu0 %v1459
    %1506 = vmatprep.subr.bf16.mxu0 0
    %1507 = vmatpush1.bf16.msra.mxu0 %v1460
    %1508 = vmatprep.subr.bf16.mxu0 0
    %1509 = vmatpush1.bf16.msra.mxu0 %v1461
    %1510 = vmatprep.mubr.bf16.mxu0 %v1348
    %1511 = vmatmul.mubr.bf16.gmra.mrb[0].mxu0 %v1347
    %v1512 = vpop.f32.mrb[0].mxu0
    %v1513 = vadd.f32 %v1381, %v1512
    %v1514 = vpop.f32.mrb[0].mxu0
    %v1515 = vpop.f32.mrb[0].mxu0
    %v1516 = vadd.f32 %v1381, %v1515
    %v1517 = vpop.f32.mrb[0].mxu0
    %1518 = vdwg.mxu0
    %v1519 = vadd.f32 %v1513, %v1156
    %v1520 = vadd.f32 %v1516, %v1157
    %v1521 = vld [vmem:[#allocation13 + $0x19] ss:$0 sm:$0xff]
    %v1522 = vld [vmem:[#allocation13 + $0x1a] ss:$0 sm:$0xff]
    %1523 = vadd.xlane.f32.xlu0 %v1519
    %v1524 = vpop.xlane.xlu0 %1523
    %1525 = vadd.xlane.f32.xlu0 %v1520
    %v1526 = vpop.xlane.xlu0 %1525
    %v1527 = vmul.f32 %v1524, %v233
    %v1528 = vmul.f32 %v1526, %v233
    %v1529 = vsub.f32 %v1519, %v1527
    %v1530 = vsub.f32 %v1520, %v1528
    %v1531 = vmul.f32 %v1529, %v1529
    %v1532 = vmul.f32 %v1530, %v1530
    %1533 = vadd.xlane.f32.xlu0 %v1531
    %v1534 = vpop.xlane.xlu0 %1533
    %1535 = vadd.xlane.f32.xlu0 %v1532
    %v1536 = vpop.xlane.xlu0 %1535
    %v1537 = vmul.f32 %v1534, %v233
    %v1538 = vmul.f32 %v1536, %v233
    %v1539 = vadd.f32 %v1537, 1e-12
    %v1540 = vadd.f32 %v1538, 1e-12
    %v1541 = vrsqrt.pop %v1539
    %v1542 = vrsqrt.pop %v1540
    %v1543 = vmul.f32 %v1529, %v1541
    %v1544 = vmul.f32 %v1530, %v1542
    %v1545 = vmul.f32 %v1543, %v1521
    %v1546 = vmul.f32 %v1544, %v1521
    %v1547 = vadd.f32 %v1545, %v1522
    %v1548 = vadd.f32 %v1546, %v1522
    %v1549 = vpack.c.bf16 %v1548, %v1547
    %s1550 = scalar_lea.vmem [#allocation5], 192
    %v1551 = vld [vmem:[%s1550] sm:$0xff]
    %v1552 = vld [vmem:[%s1550 + $0x8] sm:$0xf]
    %v1553 = vld [vmem:[%s1550 + $0xc] sm:$0xff]
    %v1554 = vld [vmem:[%s1550 + $0x14] sm:$0xf]
    %v1555 = vld [vmem:[%s1550 + $0x18] sm:$0xff]
    %v1556 = vld [vmem:[%s1550 + $0x20] sm:$0xf]
    %v1557 = vld [vmem:[%s1550 + $0x24] sm:$0xff]
    %v1558 = vld [vmem:[%s1550 + $0x2c] sm:$0xf]
    %v1559 = vld [vmem:[%s1550 + $0x30] sm:$0xff]
    %v1560 = vld [vmem:[%s1550 + $0x38] sm:$0xf]
    %v1561 = vld [vmem:[%s1550 + $0x3c] sm:$0xff]
    %v1562 = vld [vmem:[%s1550 + $0x44] sm:$0xf]
    %v1563 = vld [vmem:[%s1550 + $0x48] sm:$0xff]
    %v1564 = vld [vmem:[%s1550 + $0x50] sm:$0xf]
    %v1565 = vld [vmem:[%s1550 + $0x54] sm:$0xff]
    %v1566 = vld [vmem:[%s1550 + $0x5c] sm:$0xf]
    %v1567 = vld [vmem:[%s1550 + $0x60] sm:$0xff]
    %v1568 = vld [vmem:[%s1550 + $0x68] sm:$0xf]
    %v1569 = vld [vmem:[%s1550 + $0x6c] sm:$0xff]
    %v1570 = vld [vmem:[%s1550 + $0x74] sm:$0xf]
    %v1571 = vld [vmem:[%s1550 + $0x78] sm:$0xff]
    %v1572 = vld [vmem:[%s1550 + $0x80] sm:$0xf]
    %v1573 = vld [vmem:[%s1550 + $0x84] sm:$0xff]
    %v1574 = vld [vmem:[%s1550 + $0x8c] sm:$0xf]
    %v1575 = vld [vmem:[%s1550 + $0x90] sm:$0xff]
    %v1576 = vld [vmem:[%s1550 + $0x98] sm:$0xf]
    %v1577 = vld [vmem:[%s1550 + $0x9c] sm:$0xff]
    %v1578 = vld [vmem:[%s1550 + $0xa4] sm:$0xf]
    %v1579 = vld [vmem:[%s1550 + $0xa8] sm:$0xff]
    %v1580 = vld [vmem:[%s1550 + $0xb0] sm:$0xf]
    %v1581 = vld [vmem:[%s1550 + $0xb4] sm:$0xff]
    %v1582 = vld [vmem:[%s1550 + $0xbc] sm:$0xf]
    %s1583 = scalar_lea.vmem [#allocation13], 27
    %v1584 = vld [vmem:[%s1583] ss:$8 sm:$0x7]
    %v1586 = vlaneseq
    %v1587 = vshrl.u32 %v1586, 7
    %v1588 = vsub.s32 0, %v1587
    %v1589 = vrot.slane %v1584, %v1588
    %v1590 = vlaneseq
    %v1591 = vshrl.u32 %v1590, 7
    %v1592 = vsub.s32 1, %v1591
    %v1593 = vrot.slane %v1584, %v1592
    %v1594 = vlaneseq
    %v1595 = vshrl.u32 %v1594, 7
    %v1596 = vsub.s32 2, %v1595
    %v1597 = vrot.slane %v1584, %v1596
    %v1633 = vunpack.c.l.b16 %v1551
    %v1634 = vunpack.c.h.b16 %v1551
    %v1635 = vunpack.c.l.b16 %v1552
    %v1636 = vunpack.c.l.b16 %v1553
    %v1637 = vunpack.c.h.b16 %v1553
    %v1638 = vunpack.c.l.b16 %v1554
    %v1639 = vunpack.c.l.b16 %v1555
    %v1640 = vunpack.c.h.b16 %v1555
    %v1641 = vunpack.c.l.b16 %v1556
    %v1642 = vunpack.c.l.b16 %v1557
    %v1643 = vunpack.c.h.b16 %v1557
    %v1644 = vunpack.c.l.b16 %v1558
    %v1645 = vunpack.c.l.b16 %v1559
    %v1646 = vunpack.c.h.b16 %v1559
    %v1647 = vunpack.c.l.b16 %v1560
    %v1648 = vunpack.c.l.b16 %v1561
    %v1649 = vunpack.c.h.b16 %v1561
    %v1650 = vunpack.c.l.b16 %v1562
    %v1651 = vunpack.c.l.b16 %v1563
    %v1652 = vunpack.c.h.b16 %v1563
    %v1653 = vunpack.c.l.b16 %v1564
    %v1654 = vunpack.c.l.b16 %v1565
    %v1655 = vunpack.c.h.b16 %v1565
    %v1656 = vunpack.c.l.b16 %v1566
    %v1657 = vunpack.c.l.b16 %v1567
    %v1658 = vunpack.c.h.b16 %v1567
    %v1659 = vunpack.c.l.b16 %v1568
    %v1660 = vunpack.c.l.b16 %v1569
    %v1661 = vunpack.c.h.b16 %v1569
    %v1662 = vunpack.c.l.b16 %v1570
    %v1663 = vunpack.c.l.b16 %v1571
    %v1664 = vunpack.c.h.b16 %v1571
    %v1665 = vunpack.c.l.b16 %v1572
    %v1666 = vunpack.c.l.b16 %v1573
    %v1667 = vunpack.c.h.b16 %v1573
    %v1668 = vunpack.c.l.b16 %v1574
    %v1669 = vunpack.c.l.b16 %v1575
    %v1670 = vunpack.c.h.b16 %v1575
    %v1671 = vunpack.c.l.b16 %v1576
    %v1672 = vunpack.c.l.b16 %v1577
    %v1673 = vunpack.c.h.b16 %v1577
    %v1674 = vunpack.c.l.b16 %v1578
    %v1675 = vunpack.c.l.b16 %v1579
    %v1676 = vunpack.c.h.b16 %v1579
    %v1677 = vunpack.c.l.b16 %v1580
    %v1678 = vunpack.c.l.b16 %v1581
    %v1679 = vunpack.c.h.b16 %v1581
    %v1680 = vunpack.c.l.b16 %v1582
    %v1681 = vpack.c.b16 %v1636, %v1633
    %v1682 = vpack.c.b16 %v1637, %v1634
    %v1683 = vpack.c.b16 %v1638, %v1635
    %v1684 = vpack.c.b16 %v1642, %v1639
    %v1685 = vpack.c.b16 %v1643, %v1640
    %v1686 = vpack.c.b16 %v1644, %v1641
    %v1687 = vpack.c.b16 %v1648, %v1645
    %v1688 = vpack.c.b16 %v1649, %v1646
    %v1689 = vpack.c.b16 %v1650, %v1647
    %v1690 = vpack.c.b16 %v1654, %v1651
    %v1691 = vpack.c.b16 %v1655, %v1652
    %v1692 = vpack.c.b16 %v1656, %v1653
    %v1693 = vpack.c.b16 %v1660, %v1657
    %v1694 = vpack.c.b16 %v1661, %v1658
    %v1695 = vpack.c.b16 %v1662, %v1659
    %v1696 = vpack.c.b16 %v1666, %v1663
    %v1697 = vpack.c.b16 %v1667, %v1664
    %v1698 = vpack.c.b16 %v1668, %v1665
    %v1699 = vpack.c.b16 %v1672, %v1669
    %v1700 = vpack.c.b16 %v1673, %v1670
    %v1701 = vpack.c.b16 %v1674, %v1671
    %v1702 = vpack.c.b16 %v1678, %v1675
    %v1703 = vpack.c.b16 %v1679, %v1676
    %v1704 = vpack.c.b16 %v1680, %v1677
    %1729 = vmatprep.subr.bf16.mxu0 %v1682
    %1730 = vmatpush1.bf16.msra.mxu0 %v1681
    %1731 = vmatprep.subr.bf16.mxu0 %v1685
    %1732 = vmatpush1.bf16.msra.mxu0 %v1684
    %1733 = vmatprep.subr.bf16.mxu0 %v1688
    %1734 = vmatpush1.bf16.msra.mxu0 %v1687
    %1735 = vmatprep.subr.bf16.mxu0 %v1691
    %1736 = vmatpush1.bf16.msra.mxu0 %v1690
    %1737 = vmatprep.subr.bf16.mxu0 %v1694
    %1738 = vmatpush1.bf16.msra.mxu0 %v1693
    %1739 = vmatprep.subr.bf16.mxu0 %v1697
    %1740 = vmatpush1.bf16.msra.mxu0 %v1696
    %1741 = vmatprep.subr.bf16.mxu0 %v1700
    %1742 = vmatpush1.bf16.msra.mxu0 %v1699
    %1743 = vmatprep.subr.bf16.mxu0 %v1703
    %1744 = vmatpush1.bf16.msra.mxu0 %v1702
    %1745 = vmatprep.subr.bf16.mxu0 0
    %1746 = vmatpush1.bf16.msra.mxu0 0
    %1747 = vmatprep.subr.bf16.mxu0 0
    %1748 = vmatpush1.bf16.msra.mxu0 0
    %1749 = vmatprep.subr.bf16.mxu0 0
    %1750 = vmatpush1.bf16.msra.mxu0 0
    %1751 = vmatprep.subr.bf16.mxu0 0
    %1752 = vmatpush1.bf16.msra.mxu0 0
    %1753 = vmatprep.subr.bf16.mxu0 0
    %1754 = vmatpush1.bf16.msra.mxu0 0
    %1755 = vmatprep.subr.bf16.mxu0 0
    %1756 = vmatpush1.bf16.msra.mxu0 0
    %1757 = vmatprep.subr.bf16.mxu0 0
    %1758 = vmatpush1.bf16.msra.mxu0 0
    %1759 = vmatprep.subr.bf16.mxu0 0
    %1760 = vmatpush1.bf16.msra.mxu0 0
    %1761 = vmatprep.mubr.bf16.mxu0 0
    %1762 = vmatmul.mubr.bf16.gmra.mrb[0].mxu0 %v1549
    %v1763 = vpop.f32.mrb[0].mxu0
    %v1764 = vadd.f32 %v1589, %v1763
    %v1765 = vpop.f32.mrb[0].mxu0
    %v1766 = vadd.f32 %v1593, %v1765
    %v1767 = vpop.f32.mrb[0].mxu0
    %v1768 = vadd.f32 %v1589, %v1767
    %v1769 = vpop.f32.mrb[0].mxu0
    %v1770 = vadd.f32 %v1593, %v1769
    %1771 = vdwg.mxu0
    %1772 = vmatprep.subr.bf16.mxu0 0
    %1773 = vmatpush1.bf16.msra.mxu0 %v1683
    %1774 = vmatprep.subr.bf16.mxu0 0
    %1775 = vmatpush1.bf16.msra.mxu0 %v1686
    %1776 = vmatprep.subr.bf16.mxu0 0
    %1777 = vmatpush1.bf16.msra.mxu0 %v1689
    %1778 = vmatprep.subr.bf16.mxu0 0
    %1779 = vmatpush1.bf16.msra.mxu0 %v1692
    %1780 = vmatprep.subr.bf16.mxu0 0
    %1781 = vmatpush1.bf16.msra.mxu0 %v1695
    %1782 = vmatprep.subr.bf16.mxu0 0
    %1783 = vmatpush1.bf16.msra.mxu0 %v1698
    %1784 = vmatprep.subr.bf16.mxu0 0
    %1785 = vmatpush1.bf16.msra.mxu0 %v1701
    %1786 = vmatprep.subr.bf16.mxu0 0
    %1787 = vmatpush1.bf16.msra.mxu0 %v1704
    %1788 = vmatprep.subr.bf16.mxu0 0
    %1789 = vmatpush1.bf16.msra.mxu0 0
    %1790 = vmatprep.subr.bf16.mxu0 0
    %1791 = vmatpush1.bf16.msra.mxu0 0
    %1792 = vmatprep.subr.bf16.mxu0 0
    %1793 = vmatpush1.bf16.msra.mxu0 0
    %1794 = vmatprep.subr.bf16.mxu0 0
    %1795 = vmatpush1.bf16.msra.mxu0 0
    %1796 = vmatprep.subr.bf16.mxu0 0
    %1797 = vmatpush1.bf16.msra.mxu0 0
    %1798 = vmatprep.subr.bf16.mxu0 0
    %1799 = vmatpush1.bf16.msra.mxu0 0
    %1800 = vmatprep.subr.bf16.mxu0 0
    %1801 = vmatpush1.bf16.msra.mxu0 0
    %1802 = vmatprep.subr.bf16.mxu0 0
    %1803 = vmatpush1.bf16.msra.mxu0 0
    %1804 = vmatprep.mubr.bf16.mxu0 0
    %1805 = vmatmul.mubr.bf16.gmra.mrb[0].mxu0 %v1549
    %v1806 = vpop.f32.mrb[0].mxu0
    %v1807 = vadd.f32 %v1597, %v1806
    %v1808 = vpop.f32.mrb[0].mxu0
    %v1809 = vpop.f32.mrb[0].mxu0
    %v1810 = vadd.f32 %v1597, %v1809
    %v1811 = vpop.f32.mrb[0].mxu0
    %1812 = vdwg.mxu0
    %v1813 = vpack.c.bf16 %v1768, %v1764
    %v1814 = vpack.c.bf16 %v1770, %v1766
    %v1815 = vpack.c.bf16 %v1810, %v1807
    %v1817 = vunpack.c.l.b16 %v1813
    %v1818 = vunpack.c.h.b16 %v1813
    %v1819 = vpack.c.b16 %v1817, %v1817
    %v1820 = vpack.c.b16 %v1818, %v1818
    %v1822 = vunpack.c.l.b16 %v1814
    %v1823 = vunpack.c.h.b16 %v1814
    %v1824 = vpack.c.b16 %v1822, %v1822
    %v1825 = vpack.c.b16 %v1823, %v1823
    %v1827 = vunpack.c.l.b16 %v1815
    %v1828 = vunpack.c.h.b16 %v1815
    %v1829 = vpack.c.b16 %v1827, %v1827
    %v1830 = vpack.c.b16 %v1828, %v1828
    %v1832 = vsel %vm179, %v1819, 0
    %v1835 = vsel %vm179, %v1824, 0
    %1837 = vmatprep.subr.bf16.mxu0 0
    %1838 = vmatpush1.bf16.xpose.msra.mxu0 %v1835
    %1839 = vmatprep.subr.bf16.mxu0 0
    %1840 = vmatpush1.bf16.xpose.msra.mxu0 0
    %1841 = vmatprep.subr.bf16.mxu0 0
    %1842 = vmatpush1.bf16.xpose.msra.mxu0 0
    %1843 = vmatprep.subr.bf16.mxu0 0
    %1844 = vmatpush1.bf16.xpose.msra.mxu0 0
    %1845 = vmatprep.subr.bf16.mxu0 0
    %1846 = vmatpush1.bf16.xpose.msra.mxu0 0
    %1847 = vmatprep.subr.bf16.mxu0 0
    %1848 = vmatpush1.bf16.xpose.msra.mxu0 0
    %1849 = vmatprep.subr.bf16.mxu0 0
    %1850 = vmatpush1.bf16.xpose.msra.mxu0 0
    %1851 = vmatprep.subr.bf16.mxu0 0
    %1852 = vmatpush1.bf16.xpose.msra.mxu0 0
    %1853 = vmatprep.subr.bf16.mxu0 0
    %1854 = vmatpush1.bf16.xpose.msra.mxu0 0
    %1855 = vmatprep.subr.bf16.mxu0 0
    %1856 = vmatpush1.bf16.xpose.msra.mxu0 0
    %1857 = vmatprep.subr.bf16.mxu0 0
    %1858 = vmatpush1.bf16.xpose.msra.mxu0 0
    %1859 = vmatprep.subr.bf16.mxu0 0
    %1860 = vmatpush1.bf16.xpose.msra.mxu0 0
    %1861 = vmatprep.subr.bf16.mxu0 0
    %1862 = vmatpush1.bf16.xpose.msra.mxu0 0
    %1863 = vmatprep.subr.bf16.mxu0 0
    %1864 = vmatpush1.bf16.xpose.msra.mxu0 0
    %1865 = vmatprep.subr.bf16.mxu0 0
    %1866 = vmatpush1.bf16.xpose.msra.mxu0 0
    %1867 = vmatprep.subr.bf16.mxu0 0
    %1868 = vmatpush1.bf16.xpose.msra.mxu0 0
    %1869 = vmatprep.mubr.bf16.mxu0 0
    %1870 = vmatmul.mubr.bf16.gmra.mrb[0].mxu0 %v1832
    %v1871 = vpop.f32.mrb[0].mxu0
    %v1872 = vadd.f32 0.0, %v1871
    %v1873 = vpop.f32.mrb[0].mxu0
    %v1874 = vpop.f32.mrb[0].mxu0
    %v1875 = vpop.f32.mrb[0].mxu0
    %1876 = vdwg.mxu0
    %v1878 = vsel %vm179, %v1820, 0
    %v1881 = vsel %vm179, %v1825, 0
    %1883 = vmatprep.subr.bf16.mxu0 0
    %1884 = vmatpush1.bf16.xpose.msra.mxu0 %v1881
    %1885 = vmatprep.subr.bf16.mxu0 0
    %1886 = vmatpush1.bf16.xpose.msra.mxu0 0
    %1887 = vmatprep.subr.bf16.mxu0 0
    %1888 = vmatpush1.bf16.xpose.msra.mxu0 0
    %1889 = vmatprep.subr.bf16.mxu0 0
    %1890 = vmatpush1.bf16.xpose.msra.mxu0 0
    %1891 = vmatprep.subr.bf16.mxu0 0
    %1892 = vmatpush1.bf16.xpose.msra.mxu0 0
    %1893 = vmatprep.subr.bf16.mxu0 0
    %1894 = vmatpush1.bf16.xpose.msra.mxu0 0
    %1895 = vmatprep.subr.bf16.mxu0 0
    %1896 = vmatpush1.bf16.xpose.msra.mxu0 0
    %1897 = vmatprep.subr.bf16.mxu0 0
    %1898 = vmatpush1.bf16.xpose.msra.mxu0 0
    %1899 = vmatprep.subr.bf16.mxu0 0
    %1900 = vmatpush1.bf16.xpose.msra.mxu0 0
    %1901 = vmatprep.subr.bf16.mxu0 0
    %1902 = vmatpush1.bf16.xpose.msra.mxu0 0
    %1903 = vmatprep.subr.bf16.mxu0 0
    %1904 = vmatpush1.bf16.xpose.msra.mxu0 0
    %1905 = vmatprep.subr.bf16.mxu0 0
    %1906 = vmatpush1.bf16.xpose.msra.mxu0 0
    %1907 = vmatprep.subr.bf16.mxu0 0
    %1908 = vmatpush1.bf16.xpose.msra.mxu0 0
    %1909 = vmatprep.subr.bf16.mxu0 0
    %1910 = vmatpush1.bf16.xpose.msra.mxu0 0
    %1911 = vmatprep.subr.bf16.mxu0 0
    %1912 = vmatpush1.bf16.xpose.msra.mxu0 0
    %1913 = vmatprep.subr.bf16.mxu0 0
    %1914 = vmatpush1.bf16.xpose.msra.mxu0 0
    %1915 = vmatprep.mubr.bf16.mxu0 0
    %1916 = vmatmul.mubr.bf16.gmra.mrb[0].mxu0 %v1878
    %v1917 = vpop.f32.mrb[0].mxu0
    %v1918 = vadd.f32 0.0, %v1917
    %v1919 = vpop.f32.mrb[0].mxu0
    %v1920 = vpop.f32.mrb[0].mxu0
    %v1921 = vpop.f32.mrb[0].mxu0
    %1922 = vdwg.mxu0
    %v1923 = vmul.f32 %v1872, 0.125
    %v1924 = vmul.f32 %v1918, 0.125
    %v1925 = vadd.f32 %v1923, %v285
    %v1926 = vadd.f32 %v1924, %v289
    %v1927 = vsel %vm669, %v1925, -inf
    %1928 = vmax.xlane.f32.xlu0 %v1927
    %v1929 = vpop.xlane.xlu0 %1928
    %v1930 = vsel %vm669, %v1926, -inf
    %1931 = vmax.xlane.f32.xlu0 %v1930
    %v1932 = vpop.xlane.xlu0 %1931
    %v1933 = vsub.f32 %v1925, %v1929
    %v1934 = vsub.f32 %v1926, %v1932
    %v1935 = vmul.f32 %v1933, 1.442695
    %v1936 = vpow.pop %v1935
    %v1937 = vmul.f32 %v1934, 1.442695
    %v1938 = vpow.pop %v1937
    %v1939 = vsel %vm669, %v1936, 0.0
    %1940 = vadd.xlane.f32.xlu0 %v1939
    %v1941 = vpop.xlane.xlu0 %1940
    %v1942 = vsel %vm669, %v1938, 0.0
    %1943 = vadd.xlane.f32.xlu0 %v1942
    %v1944 = vpop.xlane.xlu0 %1943
    %v1945 = vrcp.pop %v1941
    %v1946 = vrcp.pop %v1944
    %v1947 = vmul.f32 %v1936, %v1945
    %v1948 = vmul.f32 %v1938, %v1946
    %v1949 = vpack.c.bf16 %v1947, %v1947
    %v1950 = vpack.c.bf16 %v1948, %v1948
    %v1952 = vsel %vm669, %v1949, 0
    %v1955 = vsel %vm697, %v1829, 0
    %1957 = vmatprep.subr.bf16.mxu0 0
    %1958 = vmatpush1.bf16.msra.mxu0 %v1955
    %1959 = vmatprep.subr.bf16.mxu0 0
    %1960 = vmatpush1.bf16.msra.mxu0 0
    %1961 = vmatprep.subr.bf16.mxu0 0
    %1962 = vmatpush1.bf16.msra.mxu0 0
    %1963 = vmatprep.subr.bf16.mxu0 0
    %1964 = vmatpush1.bf16.msra.mxu0 0
    %1965 = vmatprep.subr.bf16.mxu0 0
    %1966 = vmatpush1.bf16.msra.mxu0 0
    %1967 = vmatprep.subr.bf16.mxu0 0
    %1968 = vmatpush1.bf16.msra.mxu0 0
    %1969 = vmatprep.subr.bf16.mxu0 0
    %1970 = vmatpush1.bf16.msra.mxu0 0
    %1971 = vmatprep.subr.bf16.mxu0 0
    %1972 = vmatpush1.bf16.msra.mxu0 0
    %1973 = vmatprep.subr.bf16.mxu0 0
    %1974 = vmatpush1.bf16.msra.mxu0 0
    %1975 = vmatprep.subr.bf16.mxu0 0
    %1976 = vmatpush1.bf16.msra.mxu0 0
    %1977 = vmatprep.subr.bf16.mxu0 0
    %1978 = vmatpush1.bf16.msra.mxu0 0
    %1979 = vmatprep.subr.bf16.mxu0 0
    %1980 = vmatpush1.bf16.msra.mxu0 0
    %1981 = vmatprep.subr.bf16.mxu0 0
    %1982 = vmatpush1.bf16.msra.mxu0 0
    %1983 = vmatprep.subr.bf16.mxu0 0
    %1984 = vmatpush1.bf16.msra.mxu0 0
    %1985 = vmatprep.subr.bf16.mxu0 0
    %1986 = vmatpush1.bf16.msra.mxu0 0
    %1987 = vmatprep.subr.bf16.mxu0 0
    %1988 = vmatpush1.bf16.msra.mxu0 0
    %1989 = vmatprep.mubr.bf16.mxu0 0
    %1990 = vmatmul.mubr.bf16.gmra.mrb[0].mxu0 %v1952
    %v1991 = vpop.f32.mrb[0].mxu0
    %v1992 = vadd.f32 0.0, %v1991
    %v1993 = vpop.f32.mrb[0].mxu0
    %v1994 = vpop.f32.mrb[0].mxu0
    %v1995 = vpop.f32.mrb[0].mxu0
    %1996 = vdwg.mxu0
    %v1998 = vsel %vm669, %v1950, 0
    %v2001 = vsel %vm697, %v1830, 0
    %2003 = vmatprep.subr.bf16.mxu0 0
    %2004 = vmatpush1.bf16.msra.mxu0 %v2001
    %2005 = vmatprep.subr.bf16.mxu0 0
    %2006 = vmatpush1.bf16.msra.mxu0 0
    %2007 = vmatprep.subr.bf16.mxu0 0
    %2008 = vmatpush1.bf16.msra.mxu0 0
    %2009 = vmatprep.subr.bf16.mxu0 0
    %2010 = vmatpush1.bf16.msra.mxu0 0
    %2011 = vmatprep.subr.bf16.mxu0 0
    %2012 = vmatpush1.bf16.msra.mxu0 0
    %2013 = vmatprep.subr.bf16.mxu0 0
    %2014 = vmatpush1.bf16.msra.mxu0 0
    %2015 = vmatprep.subr.bf16.mxu0 0
    %2016 = vmatpush1.bf16.msra.mxu0 0
    %2017 = vmatprep.subr.bf16.mxu0 0
    %2018 = vmatpush1.bf16.msra.mxu0 0
    %2019 = vmatprep.subr.bf16.mxu0 0
    %2020 = vmatpush1.bf16.msra.mxu0 0
    %2021 = vmatprep.subr.bf16.mxu0 0
    %2022 = vmatpush1.bf16.msra.mxu0 0
    %2023 = vmatprep.subr.bf16.mxu0 0
    %2024 = vmatpush1.bf16.msra.mxu0 0
    %2025 = vmatprep.subr.bf16.mxu0 0
    %2026 = vmatpush1.bf16.msra.mxu0 0
    %2027 = vmatprep.subr.bf16.mxu0 0
    %2028 = vmatpush1.bf16.msra.mxu0 0
    %2029 = vmatprep.subr.bf16.mxu0 0
    %2030 = vmatpush1.bf16.msra.mxu0 0
    %2031 = vmatprep.subr.bf16.mxu0 0
    %2032 = vmatpush1.bf16.msra.mxu0 0
    %2033 = vmatprep.subr.bf16.mxu0 0
    %2034 = vmatpush1.bf16.msra.mxu0 0
    %2035 = vmatprep.mubr.bf16.mxu0 0
    %2036 = vmatmul.mubr.bf16.gmra.mrb[0].mxu0 %v1998
    %v2037 = vpop.f32.mrb[0].mxu0
    %v2038 = vadd.f32 0.0, %v2037
    %v2039 = vpop.f32.mrb[0].mxu0
    %v2040 = vpop.f32.mrb[0].mxu0
    %v2041 = vpop.f32.mrb[0].mxu0
    %2042 = vdwg.mxu0
    %2043 = vrot.lane.b32.xlu0 %v1819, 64
    %v2044 = vpop.permute.xlu0 %2043
    %2045 = vrot.lane.b32.xlu0 %v1824, 64
    %v2046 = vpop.permute.xlu0 %2045
    %v2048 = vsel %vm179, %v2044, 0
    %v2051 = vsel %vm179, %v2046, 0
    %2053 = vmatprep.subr.bf16.mxu0 0
    %2054 = vmatpush1.bf16.xpose.msra.mxu0 %v2051
    %2055 = vmatprep.subr.bf16.mxu0 0
    %2056 = vmatpush1.bf16.xpose.msra.mxu0 0
    %2057 = vmatprep.subr.bf16.mxu0 0
    %2058 = vmatpush1.bf16.xpose.msra.mxu0 0
    %2059 = vmatprep.subr.bf16.mxu0 0
    %2060 = vmatpush1.bf16.xpose.msra.mxu0 0
    %2061 = vmatprep.subr.bf16.mxu0 0
    %2062 = vmatpush1.bf16.xpose.msra.mxu0 0
    %2063 = vmatprep.subr.bf16.mxu0 0
    %2064 = vmatpush1.bf16.xpose.msra.mxu0 0
    %2065 = vmatprep.subr.bf16.mxu0 0
    %2066 = vmatpush1.bf16.xpose.msra.mxu0 0
    %2067 = vmatprep.subr.bf16.mxu0 0
    %2068 = vmatpush1.bf16.xpose.msra.mxu0 0
    %2069 = vmatprep.subr.bf16.mxu0 0
    %2070 = vmatpush1.bf16.xpose.msra.mxu0 0
    %2071 = vmatprep.subr.bf16.mxu0 0
    %2072 = vmatpush1.bf16.xpose.msra.mxu0 0
    %2073 = vmatprep.subr.bf16.mxu0 0
    %2074 = vmatpush1.bf16.xpose.msra.mxu0 0
    %2075 = vmatprep.subr.bf16.mxu0 0
    %2076 = vmatpush1.bf16.xpose.msra.mxu0 0
    %2077 = vmatprep.subr.bf16.mxu0 0
    %2078 = vmatpush1.bf16.xpose.msra.mxu0 0
    %2079 = vmatprep.subr.bf16.mxu0 0
    %2080 = vmatpush1.bf16.xpose.msra.mxu0 0
    %2081 = vmatprep.subr.bf16.mxu0 0
    %2082 = vmatpush1.bf16.xpose.msra.mxu0 0
    %2083 = vmatprep.subr.bf16.mxu0 0
    %2084 = vmatpush1.bf16.xpose.msra.mxu0 0
    %2085 = vmatprep.mubr.bf16.mxu0 0
    %2086 = vmatmul.mubr.bf16.gmra.mrb[0].mxu0 %v2048
    %v2087 = vpop.f32.mrb[0].mxu0
    %v2088 = vadd.f32 0.0, %v2087
    %v2089 = vpop.f32.mrb[0].mxu0
    %v2090 = vpop.f32.mrb[0].mxu0
    %v2091 = vpop.f32.mrb[0].mxu0
    %2092 = vdwg.mxu0
    %2093 = vrot.lane.b32.xlu0 %v1820, 64
    %v2094 = vpop.permute.xlu0 %2093
    %2095 = vrot.lane.b32.xlu0 %v1825, 64
    %v2096 = vpop.permute.xlu0 %2095
    %v2098 = vsel %vm179, %v2094, 0
    %v2101 = vsel %vm179, %v2096, 0
    %2103 = vmatprep.subr.bf16.mxu0 0
    %2104 = vmatpush1.bf16.xpose.msra.mxu0 %v2101
    %2105 = vmatprep.subr.bf16.mxu0 0
    %2106 = vmatpush1.bf16.xpose.msra.mxu0 0
    %2107 = vmatprep.subr.bf16.mxu0 0
    %2108 = vmatpush1.bf16.xpose.msra.mxu0 0
    %2109 = vmatprep.subr.bf16.mxu0 0
    %2110 = vmatpush1.bf16.xpose.msra.mxu0 0
    %2111 = vmatprep.subr.bf16.mxu0 0
    %2112 = vmatpush1.bf16.xpose.msra.mxu0 0
    %2113 = vmatprep.subr.bf16.mxu0 0
    %2114 = vmatpush1.bf16.xpose.msra.mxu0 0
    %2115 = vmatprep.subr.bf16.mxu0 0
    %2116 = vmatpush1.bf16.xpose.msra.mxu0 0
    %2117 = vmatprep.subr.bf16.mxu0 0
    %2118 = vmatpush1.bf16.xpose.msra.mxu0 0
    %2119 = vmatprep.subr.bf16.mxu0 0
    %2120 = vmatpush1.bf16.xpose.msra.mxu0 0
    %2121 = vmatprep.subr.bf16.mxu0 0
    %2122 = vmatpush1.bf16.xpose.msra.mxu0 0
    %2123 = vmatprep.subr.bf16.mxu0 0
    %2124 = vmatpush1.bf16.xpose.msra.mxu0 0
    %2125 = vmatprep.subr.bf16.mxu0 0
    %2126 = vmatpush1.bf16.xpose.msra.mxu0 0
    %2127 = vmatprep.subr.bf16.mxu0 0
    %2128 = vmatpush1.bf16.xpose.msra.mxu0 0
    %2129 = vmatprep.subr.bf16.mxu0 0
    %2130 = vmatpush1.bf16.xpose.msra.mxu0 0
    %2131 = vmatprep.subr.bf16.mxu0 0
    %2132 = vmatpush1.bf16.xpose.msra.mxu0 0
    %2133 = vmatprep.subr.bf16.mxu0 0
    %2134 = vmatpush1.bf16.xpose.msra.mxu0 0
    %2135 = vmatprep.mubr.bf16.mxu0 0
    %2136 = vmatmul.mubr.bf16.gmra.mrb[0].mxu0 %v2098
    %v2137 = vpop.f32.mrb[0].mxu0
    %v2138 = vadd.f32 0.0, %v2137
    %v2139 = vpop.f32.mrb[0].mxu0
    %v2140 = vpop.f32.mrb[0].mxu0
    %v2141 = vpop.f32.mrb[0].mxu0
    %2142 = vdwg.mxu0
    %v2143 = vmul.f32 %v2088, 0.125
    %v2144 = vmul.f32 %v2138, 0.125
    %v2145 = vadd.f32 %v2143, %v285
    %v2146 = vadd.f32 %v2144, %v289
    %v2147 = vsel %vm669, %v2145, -inf
    %2148 = vmax.xlane.f32.xlu0 %v2147
    %v2149 = vpop.xlane.xlu0 %2148
    %v2150 = vsel %vm669, %v2146, -inf
    %2151 = vmax.xlane.f32.xlu0 %v2150
    %v2152 = vpop.xlane.xlu0 %2151
    %v2153 = vsub.f32 %v2145, %v2149
    %v2154 = vsub.f32 %v2146, %v2152
    %v2155 = vmul.f32 %v2153, 1.442695
    %v2156 = vpow.pop %v2155
    %v2157 = vmul.f32 %v2154, 1.442695
    %v2158 = vpow.pop %v2157
    %v2159 = vsel %vm669, %v2156, 0.0
    %2160 = vadd.xlane.f32.xlu0 %v2159
    %v2161 = vpop.xlane.xlu0 %2160
    %v2162 = vsel %vm669, %v2158, 0.0
    %2163 = vadd.xlane.f32.xlu0 %v2162
    %v2164 = vpop.xlane.xlu0 %2163
    %v2165 = vrcp.pop %v2161
    %v2166 = vrcp.pop %v2164
    %v2167 = vmul.f32 %v2156, %v2165
    %v2168 = vmul.f32 %v2158, %v2166
    %v2169 = vpack.c.bf16 %v2167, %v2167
    %v2170 = vpack.c.bf16 %v2168, %v2168
    %2171 = vrot.lane.b32.xlu0 %v1829, 64
    %v2172 = vpop.permute.xlu0 %2171
    %v2174 = vsel %vm669, %v2169, 0
    %v2177 = vsel %vm697, %v2172, 0
    %2179 = vmatprep.subr.bf16.mxu0 0
    %2180 = vmatpush1.bf16.msra.mxu0 %v2177
    %2181 = vmatprep.subr.bf16.mxu0 0
    %2182 = vmatpush1.bf16.msra.mxu0 0
    %2183 = vmatprep.subr.bf16.mxu0 0
    %2184 = vmatpush1.bf16.msra.mxu0 0
    %2185 = vmatprep.subr.bf16.mxu0 0
    %2186 = vmatpush1.bf16.msra.mxu0 0
    %2187 = vmatprep.subr.bf16.mxu0 0
    %2188 = vmatpush1.bf16.msra.mxu0 0
    %2189 = vmatprep.subr.bf16.mxu0 0
    %2190 = vmatpush1.bf16.msra.mxu0 0
    %2191 = vmatprep.subr.bf16.mxu0 0
    %2192 = vmatpush1.bf16.msra.mxu0 0
    %2193 = vmatprep.subr.bf16.mxu0 0
    %2194 = vmatpush1.bf16.msra.mxu0 0
    %2195 = vmatprep.subr.bf16.mxu0 0
    %2196 = vmatpush1.bf16.msra.mxu0 0
    %2197 = vmatprep.subr.bf16.mxu0 0
    %2198 = vmatpush1.bf16.msra.mxu0 0
    %2199 = vmatprep.subr.bf16.mxu0 0
    %2200 = vmatpush1.bf16.msra.mxu0 0
    %2201 = vmatprep.subr.bf16.mxu0 0
    %2202 = vmatpush1.bf16.msra.mxu0 0
    %2203 = vmatprep.subr.bf16.mxu0 0
    %2204 = vmatpush1.bf16.msra.mxu0 0
    %2205 = vmatprep.subr.bf16.mxu0 0
    %2206 = vmatpush1.bf16.msra.mxu0 0
    %2207 = vmatprep.subr.bf16.mxu0 0
    %2208 = vmatpush1.bf16.msra.mxu0 0
    %2209 = vmatprep.subr.bf16.mxu0 0
    %2210 = vmatpush1.bf16.msra.mxu0 0
    %2211 = vmatprep.mubr.bf16.mxu0 0
    %2212 = vmatmul.mubr.bf16.gmra.mrb[0].mxu0 %v2174
    %v2213 = vpop.f32.mrb[0].mxu0
    %v2214 = vadd.f32 0.0, %v2213
    %v2215 = vpop.f32.mrb[0].mxu0
    %v2216 = vpop.f32.mrb[0].mxu0
    %v2217 = vpop.f32.mrb[0].mxu0
    %2218 = vdwg.mxu0
    %2219 = vrot.lane.b32.xlu0 %v1830, 64
    %v2220 = vpop.permute.xlu0 %2219
    %v2222 = vsel %vm669, %v2170, 0
    %v2225 = vsel %vm697, %v2220, 0
    %2227 = vmatprep.subr.bf16.mxu0 0
    %2228 = vmatpush1.bf16.msra.mxu0 %v2225
    %2229 = vmatprep.subr.bf16.mxu0 0
    %2230 = vmatpush1.bf16.msra.mxu0 0
    %2231 = vmatprep.subr.bf16.mxu0 0
    %2232 = vmatpush1.bf16.msra.mxu0 0
    %2233 = vmatprep.subr.bf16.mxu0 0
    %2234 = vmatpush1.bf16.msra.mxu0 0
    %2235 = vmatprep.subr.bf16.mxu0 0
    %2236 = vmatpush1.bf16.msra.mxu0 0
    %2237 = vmatprep.subr.bf16.mxu0 0
    %2238 = vmatpush1.bf16.msra.mxu0 0
    %2239 = vmatprep.subr.bf16.mxu0 0
    %2240 = vmatpush1.bf16.msra.mxu0 0
    %2241 = vmatprep.subr.bf16.mxu0 0
    %2242 = vmatpush1.bf16.msra.mxu0 0
    %2243 = vmatprep.subr.bf16.mxu0 0
    %2244 = vmatpush1.bf16.msra.mxu0 0
    %2245 = vmatprep.subr.bf16.mxu0 0
    %2246 = vmatpush1.bf16.msra.mxu0 0
    %2247 = vmatprep.subr.bf16.mxu0 0
    %2248 = vmatpush1.bf16.msra.mxu0 0
    %2249 = vmatprep.subr.bf16.mxu0 0
    %2250 = vmatpush1.bf16.msra.mxu0 0
    %2251 = vmatprep.subr.bf16.mxu0 0
    %2252 = vmatpush1.bf16.msra.mxu0 0
    %2253 = vmatprep.subr.bf16.mxu0 0
    %2254 = vmatpush1.bf16.msra.mxu0 0
    %2255 = vmatprep.subr.bf16.mxu0 0
    %2256 = vmatpush1.bf16.msra.mxu0 0
    %2257 = vmatprep.subr.bf16.mxu0 0
    %2258 = vmatpush1.bf16.msra.mxu0 0
    %2259 = vmatprep.mubr.bf16.mxu0 0
    %2260 = vmatmul.mubr.bf16.gmra.mrb[0].mxu0 %v2222
    %v2261 = vpop.f32.mrb[0].mxu0
    %v2262 = vadd.f32 0.0, %v2261
    %v2263 = vpop.f32.mrb[0].mxu0
    %v2264 = vpop.f32.mrb[0].mxu0
    %v2265 = vpop.f32.mrb[0].mxu0
    %2266 = vdwg.mxu0
    %2269 = vrot.lane.b32.xlu0 %v2214, 64
    %v2270 = vpop.permute.xlu0 %2269
    %2271 = vrot.lane.b32.xlu0 %v2262, 64
    %v2272 = vpop.permute.xlu0 %2271
    %v2275 = vsel %vm179, %v1992, %v2270
    %v2276 = vsel %vm179, %v2038, %v2272
    %v2277 = vpack.c.bf16 %v2276, %v2275
    %s2278 = scalar_lea.vmem [#allocation7], 64
    %v2279 = vld [vmem:[%s2278] sm:$0xf]
    %v2280 = vld [vmem:[%s2278 + $0x4] sm:$0xf]
    %v2281 = vld [vmem:[%s2278 + $0x8] sm:$0xf]
    %v2282 = vld [vmem:[%s2278 + $0xc] sm:$0xf]
    %v2283 = vld [vmem:[%s2278 + $0x10] sm:$0xf]
    %v2284 = vld [vmem:[%s2278 + $0x14] sm:$0xf]
    %v2285 = vld [vmem:[%s2278 + $0x18] sm:$0xf]
    %v2286 = vld [vmem:[%s2278 + $0x1c] sm:$0xf]
    %v2287 = vld [vmem:[%s2278 + $0x20] sm:$0xf]
    %v2288 = vld [vmem:[%s2278 + $0x24] sm:$0xf]
    %v2289 = vld [vmem:[%s2278 + $0x28] sm:$0xf]
    %v2290 = vld [vmem:[%s2278 + $0x2c] sm:$0xf]
    %v2291 = vld [vmem:[%s2278 + $0x30] sm:$0xf]
    %v2292 = vld [vmem:[%s2278 + $0x34] sm:$0xf]
    %v2293 = vld [vmem:[%s2278 + $0x38] sm:$0xf]
    %v2294 = vld [vmem:[%s2278 + $0x3c] sm:$0xf]
    %v2295 = vld [vmem:[#allocation13 + $0x1c] ss:$0 sm:$0xff]
    %v2312 = vunpack.c.l.b16 %v2279
    %v2313 = vunpack.c.l.b16 %v2280
    %v2314 = vunpack.c.l.b16 %v2281
    %v2315 = vunpack.c.l.b16 %v2282
    %v2316 = vunpack.c.l.b16 %v2283
    %v2317 = vunpack.c.l.b16 %v2284
    %v2318 = vunpack.c.l.b16 %v2285
    %v2319 = vunpack.c.l.b16 %v2286
    %v2320 = vunpack.c.l.b16 %v2287
    %v2321 = vunpack.c.l.b16 %v2288
    %v2322 = vunpack.c.l.b16 %v2289
    %v2323 = vunpack.c.l.b16 %v2290
    %v2324 = vunpack.c.l.b16 %v2291
    %v2325 = vunpack.c.l.b16 %v2292
    %v2326 = vunpack.c.l.b16 %v2293
    %v2327 = vunpack.c.l.b16 %v2294
    %v2328 = vpack.c.b16 %v2313, %v2312
    %v2329 = vpack.c.b16 %v2315, %v2314
    %v2330 = vpack.c.b16 %v2317, %v2316
    %v2331 = vpack.c.b16 %v2319, %v2318
    %v2332 = vpack.c.b16 %v2321, %v2320
    %v2333 = vpack.c.b16 %v2323, %v2322
    %v2334 = vpack.c.b16 %v2325, %v2324
    %v2335 = vpack.c.b16 %v2327, %v2326
    %2344 = vmatprep.subr.bf16.mxu0 0
    %2345 = vmatpush1.bf16.msra.mxu0 %v2328
    %2346 = vmatprep.subr.bf16.mxu0 0
    %2347 = vmatpush1.bf16.msra.mxu0 %v2329
    %2348 = vmatprep.subr.bf16.mxu0 0
    %2349 = vmatpush1.bf16.msra.mxu0 %v2330
    %2350 = vmatprep.subr.bf16.mxu0 0
    %2351 = vmatpush1.bf16.msra.mxu0 %v2331
    %2352 = vmatprep.subr.bf16.mxu0 0
    %2353 = vmatpush1.bf16.msra.mxu0 %v2332
    %2354 = vmatprep.subr.bf16.mxu0 0
    %2355 = vmatpush1.bf16.msra.mxu0 %v2333
    %2356 = vmatprep.subr.bf16.mxu0 0
    %2357 = vmatpush1.bf16.msra.mxu0 %v2334
    %2358 = vmatprep.subr.bf16.mxu0 0
    %2359 = vmatpush1.bf16.msra.mxu0 %v2335
    %2360 = vmatprep.subr.bf16.mxu0 0
    %2361 = vmatpush1.bf16.msra.mxu0 0
    %2362 = vmatprep.subr.bf16.mxu0 0
    %2363 = vmatpush1.bf16.msra.mxu0 0
    %2364 = vmatprep.subr.bf16.mxu0 0
    %2365 = vmatpush1.bf16.msra.mxu0 0
    %2366 = vmatprep.subr.bf16.mxu0 0
    %2367 = vmatpush1.bf16.msra.mxu0 0
    %2368 = vmatprep.subr.bf16.mxu0 0
    %2369 = vmatpush1.bf16.msra.mxu0 0
    %2370 = vmatprep.subr.bf16.mxu0 0
    %2371 = vmatpush1.bf16.msra.mxu0 0
    %2372 = vmatprep.subr.bf16.mxu0 0
    %2373 = vmatpush1.bf16.msra.mxu0 0
    %2374 = vmatprep.subr.bf16.mxu0 0
    %2375 = vmatpush1.bf16.msra.mxu0 0
    %2376 = vmatprep.mubr.bf16.mxu0 0
    %2377 = vmatmul.mubr.bf16.gmra.mrb[0].mxu0 %v2277
    %v2378 = vpop.f32.mrb[0].mxu0
    %v2379 = vadd.f32 %v2295, %v2378
    %v2380 = vpop.f32.mrb[0].mxu0
    %v2381 = vpop.f32.mrb[0].mxu0
    %v2382 = vadd.f32 %v2295, %v2381
    %v2383 = vpop.f32.mrb[0].mxu0
    %2384 = vdwg.mxu0
    %v2385 = vadd.f32 %v2379, %v1547
    %v2386 = vadd.f32 %v2382, %v1548
    %v2387 = vld [vmem:[#allocation13 + $0x1d] ss:$0 sm:$0xff]
    %v2388 = vld [vmem:[#allocation13 + $0x1e] ss:$0 sm:$0xff]
    %2389 = vadd.xlane.f32.xlu0 %v2385
    %v2390 = vpop.xlane.xlu0 %2389
    %2391 = vadd.xlane.f32.xlu0 %v2386
    %v2392 = vpop.xlane.xlu0 %2391
    %v2393 = vmul.f32 %v2390, %v233
    %v2394 = vmul.f32 %v2392, %v233
    %v2395 = vsub.f32 %v2385, %v2393
    %v2396 = vsub.f32 %v2386, %v2394
    %v2397 = vmul.f32 %v2395, %v2395
    %v2398 = vmul.f32 %v2396, %v2396
    %2399 = vadd.xlane.f32.xlu0 %v2397
    %v2400 = vpop.xlane.xlu0 %2399
    %2401 = vadd.xlane.f32.xlu0 %v2398
    %v2402 = vpop.xlane.xlu0 %2401
    %v2403 = vmul.f32 %v2400, %v233
    %v2404 = vmul.f32 %v2402, %v233
    %v2405 = vadd.f32 %v2403, 1e-12
    %v2406 = vadd.f32 %v2404, 1e-12
    %v2407 = vrsqrt.pop %v2405
    %v2408 = vrsqrt.pop %v2406
    %v2409 = vmul.f32 %v2395, %v2407
    %v2410 = vmul.f32 %v2396, %v2408
    %v2411 = vmul.f32 %v2409, %v2387
    %v2412 = vmul.f32 %v2410, %v2387
    %v2413 = vadd.f32 %v2411, %v2388
    %v2414 = vadd.f32 %v2412, %v2388
    %v2415 = vpack.c.bf16 %v2414, %v2413
    %s2416 = scalar_lea.vmem [#allocation8], 128
    %v2417 = vld [vmem:[%s2416] sm:$0xff]
    %v2418 = vld [vmem:[%s2416 + $0x8] sm:$0xff]
    %v2419 = vld [vmem:[%s2416 + $0x10] sm:$0xff]
    %v2420 = vld [vmem:[%s2416 + $0x18] sm:$0xff]
    %v2421 = vld [vmem:[%s2416 + $0x20] sm:$0xff]
    %v2422 = vld [vmem:[%s2416 + $0x28] sm:$0xff]
    %v2423 = vld [vmem:[%s2416 + $0x30] sm:$0xff]
    %v2424 = vld [vmem:[%s2416 + $0x38] sm:$0xff]
    %v2425 = vld [vmem:[%s2416 + $0x40] sm:$0xff]
    %v2426 = vld [vmem:[%s2416 + $0x48] sm:$0xff]
    %v2427 = vld [vmem:[%s2416 + $0x50] sm:$0xff]
    %v2428 = vld [vmem:[%s2416 + $0x58] sm:$0xff]
    %v2429 = vld [vmem:[%s2416 + $0x60] sm:$0xff]
    %v2430 = vld [vmem:[%s2416 + $0x68] sm:$0xff]
    %v2431 = vld [vmem:[%s2416 + $0x70] sm:$0xff]
    %v2432 = vld [vmem:[%s2416 + $0x78] sm:$0xff]
    %s2433 = scalar_lea.vmem [#allocation13], 31
    %v2434 = vld [vmem:[%s2433] ss:$8 sm:$0x3]
    %v2436 = vlaneseq
    %v2437 = vshrl.u32 %v2436, 7
    %v2438 = vsub.s32 0, %v2437
    %v2439 = vrot.slane %v2434, %v2438
    %v2440 = vlaneseq
    %v2441 = vshrl.u32 %v2440, 7
    %v2442 = vsub.s32 1, %v2441
    %v2443 = vrot.slane %v2434, %v2442
    %v2462 = vunpack.c.l.b16 %v2417
    %v2463 = vunpack.c.h.b16 %v2417
    %v2464 = vunpack.c.l.b16 %v2418
    %v2465 = vunpack.c.h.b16 %v2418
    %v2466 = vunpack.c.l.b16 %v2419
    %v2467 = vunpack.c.h.b16 %v2419
    %v2468 = vunpack.c.l.b16 %v2420
    %v2469 = vunpack.c.h.b16 %v2420
    %v2470 = vunpack.c.l.b16 %v2421
    %v2471 = vunpack.c.h.b16 %v2421
    %v2472 = vunpack.c.l.b16 %v2422
    %v2473 = vunpack.c.h.b16 %v2422
    %v2474 = vunpack.c.l.b16 %v2423
    %v2475 = vunpack.c.h.b16 %v2423
    %v2476 = vunpack.c.l.b16 %v2424
    %v2477 = vunpack.c.h.b16 %v2424
    %v2478 = vunpack.c.l.b16 %v2425
    %v2479 = vunpack.c.h.b16 %v2425
    %v2480 = vunpack.c.l.b16 %v2426
    %v2481 = vunpack.c.h.b16 %v2426
    %v2482 = vunpack.c.l.b16 %v2427
    %v2483 = vunpack.c.h.b16 %v2427
    %v2484 = vunpack.c.l.b16 %v2428
    %v2485 = vunpack.c.h.b16 %v2428
    %v2486 = vunpack.c.l.b16 %v2429
    %v2487 = vunpack.c.h.b16 %v2429
    %v2488 = vunpack.c.l.b16 %v2430
    %v2489 = vunpack.c.h.b16 %v2430
    %v2490 = vunpack.c.l.b16 %v2431
    %v2491 = vunpack.c.h.b16 %v2431
    %v2492 = vunpack.c.l.b16 %v2432
    %v2493 = vunpack.c.h.b16 %v2432
    %v2494 = vpack.c.b16 %v2464, %v2462
    %v2495 = vpack.c.b16 %v2465, %v2463
    %v2496 = vpack.c.b16 %v2468, %v2466
    %v2497 = vpack.c.b16 %v2469, %v2467
    %v2498 = vpack.c.b16 %v2472, %v2470
    %v2499 = vpack.c.b16 %v2473, %v2471
    %v2500 = vpack.c.b16 %v2476, %v2474
    %v2501 = vpack.c.b16 %v2477, %v2475
    %v2502 = vpack.c.b16 %v2480, %v2478
    %v2503 = vpack.c.b16 %v2481, %v2479
    %v2504 = vpack.c.b16 %v2484, %v2482
    %v2505 = vpack.c.b16 %v2485, %v2483
    %v2506 = vpack.c.b16 %v2488, %v2486
    %v2507 = vpack.c.b16 %v2489, %v2487
    %v2508 = vpack.c.b16 %v2492, %v2490
    %v2509 = vpack.c.b16 %v2493, %v2491
    %2526 = vmatprep.subr.bf16.mxu0 %v2495
    %2527 = vmatpush1.bf16.msra.mxu0 %v2494
    %2528 = vmatprep.subr.bf16.mxu0 %v2497
    %2529 = vmatpush1.bf16.msra.mxu0 %v2496
    %2530 = vmatprep.subr.bf16.mxu0 %v2499
    %2531 = vmatpush1.bf16.msra.mxu0 %v2498
    %2532 = vmatprep.subr.bf16.mxu0 %v2501
    %2533 = vmatpush1.bf16.msra.mxu0 %v2500
    %2534 = vmatprep.subr.bf16.mxu0 %v2503
    %2535 = vmatpush1.bf16.msra.mxu0 %v2502
    %2536 = vmatprep.subr.bf16.mxu0 %v2505
    %2537 = vmatpush1.bf16.msra.mxu0 %v2504
    %2538 = vmatprep.subr.bf16.mxu0 %v2507
    %2539 = vmatpush1.bf16.msra.mxu0 %v2506
    %2540 = vmatprep.subr.bf16.mxu0 %v2509
    %2541 = vmatpush1.bf16.msra.mxu0 %v2508
    %2542 = vmatprep.subr.bf16.mxu0 0
    %2543 = vmatpush1.bf16.msra.mxu0 0
    %2544 = vmatprep.subr.bf16.mxu0 0
    %2545 = vmatpush1.bf16.msra.mxu0 0
    %2546 = vmatprep.subr.bf16.mxu0 0
    %2547 = vmatpush1.bf16.msra.mxu0 0
    %2548 = vmatprep.subr.bf16.mxu0 0
    %2549 = vmatpush1.bf16.msra.mxu0 0
    %2550 = vmatprep.subr.bf16.mxu0 0
    %2551 = vmatpush1.bf16.msra.mxu0 0
    %2552 = vmatprep.subr.bf16.mxu0 0
    %2553 = vmatpush1.bf16.msra.mxu0 0
    %2554 = vmatprep.subr.bf16.mxu0 0
    %2555 = vmatpush1.bf16.msra.mxu0 0
    %2556 = vmatprep.subr.bf16.mxu0 0
    %2557 = vmatpush1.bf16.msra.mxu0 0
    %2558 = vmatprep.mubr.bf16.mxu0 0
    %2559 = vmatmul.mubr.bf16.gmra.mrb[0].mxu0 %v2415
    %v2560 = vpop.f32.mrb[0].mxu0
    %v2561 = vadd.f32 %v2439, %v2560
    %v2562 = vpop.f32.mrb[0].mxu0
    %v2563 = vadd.f32 %v2443, %v2562
    %v2564 = vpop.f32.mrb[0].mxu0
    %v2565 = vadd.f32 %v2439, %v2564
    %v2566 = vpop.f32.mrb[0].mxu0
    %v2567 = vadd.f32 %v2443, %v2566
    %2568 = vdwg.mxu0
    %v2569 = vmul.f32 %v2561, 0.5
    %v2570 = vmul.f32 %v2563, 0.5
    %v2571 = vmul.f32 %v2565, 0.5
    %v2572 = vmul.f32 %v2567, 0.5
    %v2573 = vmul.f32 %v2561, 0.044715
    %v2574 = vmul.f32 %v2563, 0.044715
    %v2575 = vmul.f32 %v2565, 0.044715
    %v2576 = vmul.f32 %v2567, 0.044715
    %v2577 = vmul.f32 %v2573, %v2561
    %v2578 = vmul.f32 %v2574, %v2563
    %v2579 = vmul.f32 %v2575, %v2565
    %v2580 = vmul.f32 %v2576, %v2567
    %v2581 = vmul.f32 %v2577, %v2561
    %v2582 = vmul.f32 %v2578, %v2563
    %v2583 = vmul.f32 %v2579, %v2565
    %v2584 = vmul.f32 %v2580, %v2567
    %v2585 = vadd.f32 %v2561, %v2581
    %v2586 = vadd.f32 %v2563, %v2582
    %v2587 = vadd.f32 %v2565, %v2583
    %v2588 = vadd.f32 %v2567, %v2584
    %v2589 = vmul.f32 %v2585, 0.7978846
    %v2590 = vmul.f32 %v2586, 0.7978846
    %v2591 = vmul.f32 %v2587, 0.7978846
    %v2592 = vmul.f32 %v2588, 0.7978846
    %v2593 = vtanh.pop %v2589
    %v2594 = vtanh.pop %v2590
    %v2595 = vtanh.pop %v2591
    %v2596 = vtanh.pop %v2592
    %v2597 = vadd.f32 %v2593, 1.0
    %v2598 = vadd.f32 %v2594, 1.0
    %v2599 = vadd.f32 %v2595, 1.0
    %v2600 = vadd.f32 %v2596, 1.0
    %v2601 = vmul.f32 %v2569, %v2597
    %v2602 = vmul.f32 %v2570, %v2598
    %v2603 = vmul.f32 %v2571, %v2599
    %v2604 = vmul.f32 %v2572, %v2600
    %v2605 = vpack.c.bf16 %v2603, %v2601
    %v2606 = vpack.c.bf16 %v2604, %v2602
    %s2607 = scalar_lea.vmem [#allocation10], 128
    %v2608 = vld [vmem:[%s2607] sm:$0xf]
    %v2609 = vld [vmem:[%s2607 + $0x4] sm:$0xf]
    %v2610 = vld [vmem:[%s2607 + $0x8] sm:$0xf]
    %v2611 = vld [vmem:[%s2607 + $0xc] sm:$0xf]
    %v2612 = vld [vmem:[%s2607 + $0x10] sm:$0xf]
    %v2613 = vld [vmem:[%s2607 + $0x14] sm:$0xf]
    %v2614 = vld [vmem:[%s2607 + $0x18] sm:$0xf]
    %v2615 = vld [vmem:[%s2607 + $0x1c] sm:$0xf]
    %v2616 = vld [vmem:[%s2607 + $0x20] sm:$0xf]
    %v2617 = vld [vmem:[%s2607 + $0x24] sm:$0xf]
    %v2618 = vld [vmem:[%s2607 + $0x28] sm:$0xf]
    %v2619 = vld [vmem:[%s2607 + $0x2c] sm:$0xf]
    %v2620 = vld [vmem:[%s2607 + $0x30] sm:$0xf]
    %v2621 = vld [vmem:[%s2607 + $0x34] sm:$0xf]
    %v2622 = vld [vmem:[%s2607 + $0x38] sm:$0xf]
    %v2623 = vld [vmem:[%s2607 + $0x3c] sm:$0xf]
    %v2624 = vld [vmem:[%s2607 + $0x40] sm:$0xf]
    %v2625 = vld [vmem:[%s2607 + $0x44] sm:$0xf]
    %v2626 = vld [vmem:[%s2607 + $0x48] sm:$0xf]
    %v2627 = vld [vmem:[%s2607 + $0x4c] sm:$0xf]
    %v2628 = vld [vmem:[%s2607 + $0x50] sm:$0xf]
    %v2629 = vld [vmem:[%s2607 + $0x54] sm:$0xf]
    %v2630 = vld [vmem:[%s2607 + $0x58] sm:$0xf]
    %v2631 = vld [vmem:[%s2607 + $0x5c] sm:$0xf]
    %v2632 = vld [vmem:[%s2607 + $0x60] sm:$0xf]
    %v2633 = vld [vmem:[%s2607 + $0x64] sm:$0xf]
    %v2634 = vld [vmem:[%s2607 + $0x68] sm:$0xf]
    %v2635 = vld [vmem:[%s2607 + $0x6c] sm:$0xf]
    %v2636 = vld [vmem:[%s2607 + $0x70] sm:$0xf]
    %v2637 = vld [vmem:[%s2607 + $0x74] sm:$0xf]
    %v2638 = vld [vmem:[%s2607 + $0x78] sm:$0xf]
    %v2639 = vld [vmem:[%s2607 + $0x7c] sm:$0xf]
    %v2640 = vld [vmem:[#allocation13 + $0x30] ss:$0 sm:$0xff]
    %v2673 = vunpack.c.l.b16 %v2608
    %v2674 = vunpack.c.l.b16 %v2609
    %v2675 = vunpack.c.l.b16 %v2610
    %v2676 = vunpack.c.l.b16 %v2611
    %v2677 = vunpack.c.l.b16 %v2612
    %v2678 = vunpack.c.l.b16 %v2613
    %v2679 = vunpack.c.l.b16 %v2614
    %v2680 = vunpack.c.l.b16 %v2615
    %v2681 = vunpack.c.l.b16 %v2616
    %v2682 = vunpack.c.l.b16 %v2617
    %v2683 = vunpack.c.l.b16 %v2618
    %v2684 = vunpack.c.l.b16 %v2619
    %v2685 = vunpack.c.l.b16 %v2620
    %v2686 = vunpack.c.l.b16 %v2621
    %v2687 = vunpack.c.l.b16 %v2622
    %v2688 = vunpack.c.l.b16 %v2623
    %v2689 = vunpack.c.l.b16 %v2624
    %v2690 = vunpack.c.l.b16 %v2625
    %v2691 = vunpack.c.l.b16 %v2626
    %v2692 = vunpack.c.l.b16 %v2627
    %v2693 = vunpack.c.l.b16 %v2628
    %v2694 = vunpack.c.l.b16 %v2629
    %v2695 = vunpack.c.l.b16 %v2630
    %v2696 = vunpack.c.l.b16 %v2631
    %v2697 = vunpack.c.l.b16 %v2632
    %v2698 = vunpack.c.l.b16 %v2633
    %v2699 = vunpack.c.l.b16 %v2634
    %v2700 = vunpack.c.l.b16 %v2635
    %v2701 = vunpack.c.l.b16 %v2636
    %v2702 = vunpack.c.l.b16 %v2637
    %v2703 = vunpack.c.l.b16 %v2638
    %v2704 = vunpack.c.l.b16 %v2639
    %v2705 = vpack.c.b16 %v2674, %v2673
    %v2706 = vpack.c.b16 %v2676, %v2675
    %v2707 = vpack.c.b16 %v2678, %v2677
    %v2708 = vpack.c.b16 %v2680, %v2679
    %v2709 = vpack.c.b16 %v2682, %v2681
    %v2710 = vpack.c.b16 %v2684, %v2683
    %v2711 = vpack.c.b16 %v2686, %v2685
    %v2712 = vpack.c.b16 %v2688, %v2687
    %v2713 = vpack.c.b16 %v2690, %v2689
    %v2714 = vpack.c.b16 %v2692, %v2691
    %v2715 = vpack.c.b16 %v2694, %v2693
    %v2716 = vpack.c.b16 %v2696, %v2695
    %v2717 = vpack.c.b16 %v2698, %v2697
    %v2718 = vpack.c.b16 %v2700, %v2699
    %v2719 = vpack.c.b16 %v2702, %v2701
    %v2720 = vpack.c.b16 %v2704, %v2703
    %2737 = vmatprep.subr.bf16.mxu0 0
    %2738 = vmatpush1.bf16.msra.mxu0 %v2705
    %2739 = vmatprep.subr.bf16.mxu0 0
    %2740 = vmatpush1.bf16.msra.mxu0 %v2706
    %2741 = vmatprep.subr.bf16.mxu0 0
    %2742 = vmatpush1.bf16.msra.mxu0 %v2707
    %2743 = vmatprep.subr.bf16.mxu0 0
    %2744 = vmatpush1.bf16.msra.mxu0 %v2708
    %2745 = vmatprep.subr.bf16.mxu0 0
    %2746 = vmatpush1.bf16.msra.mxu0 %v2709
    %2747 = vmatprep.subr.bf16.mxu0 0
    %2748 = vmatpush1.bf16.msra.mxu0 %v2710
    %2749 = vmatprep.subr.bf16.mxu0 0
    %2750 = vmatpush1.bf16.msra.mxu0 %v2711
    %2751 = vmatprep.subr.bf16.mxu0 0
    %2752 = vmatpush1.bf16.msra.mxu0 %v2712
    %2753 = vmatprep.subr.bf16.mxu0 0
    %2754 = vmatpush1.bf16.msra.mxu0 %v2713
    %2755 = vmatprep.subr.bf16.mxu0 0
    %2756 = vmatpush1.bf16.msra.mxu0 %v2714
    %2757 = vmatprep.subr.bf16.mxu0 0
    %2758 = vmatpush1.bf16.msra.mxu0 %v2715
    %2759 = vmatprep.subr.bf16.mxu0 0
    %2760 = vmatpush1.bf16.msra.mxu0 %v2716
    %2761 = vmatprep.subr.bf16.mxu0 0
    %2762 = vmatpush1.bf16.msra.mxu0 %v2717
    %2763 = vmatprep.subr.bf16.mxu0 0
    %2764 = vmatpush1.bf16.msra.mxu0 %v2718
    %2765 = vmatprep.subr.bf16.mxu0 0
    %2766 = vmatpush1.bf16.msra.mxu0 %v2719
    %2767 = vmatprep.subr.bf16.mxu0 0
    %2768 = vmatpush1.bf16.msra.mxu0 %v2720
    %2769 = vmatprep.mubr.bf16.mxu0 %v2606
    %2770 = vmatmul.mubr.bf16.gmra.mrb[0].mxu0 %v2605
    %v2771 = vpop.f32.mrb[0].mxu0
    %v2772 = vadd.f32 %v2640, %v2771
    %v2773 = vpop.f32.mrb[0].mxu0
    %v2774 = vpop.f32.mrb[0].mxu0
    %v2775 = vadd.f32 %v2640, %v2774
    %v2776 = vpop.f32.mrb[0].mxu0
    %2777 = vdwg.mxu0
    %v2778 = vadd.f32 %v2772, %v2413
    %v2779 = vadd.f32 %v2775, %v2414
    %v2780 = vld [vmem:[#allocation13 + $0x31] ss:$0 sm:$0xff]
    %v2781 = vld [vmem:[#allocation13 + $0x32] ss:$0 sm:$0xff]
    %2782 = vadd.xlane.f32.xlu0 %v2778
    %v2783 = vpop.xlane.xlu0 %2782
    %2784 = vadd.xlane.f32.xlu0 %v2779
    %v2785 = vpop.xlane.xlu0 %2784
    %v2786 = vmul.f32 %v2783, %v233
    %v2787 = vmul.f32 %v2785, %v233
    %v2788 = vsub.f32 %v2778, %v2786
    %v2789 = vsub.f32 %v2779, %v2787
    %v2790 = vmul.f32 %v2788, %v2788
    %v2791 = vmul.f32 %v2789, %v2789
    %2792 = vadd.xlane.f32.xlu0 %v2790
    %v2793 = vpop.xlane.xlu0 %2792
    %2794 = vadd.xlane.f32.xlu0 %v2791
    %v2795 = vpop.xlane.xlu0 %2794
    %v2796 = vmul.f32 %v2793, %v233
    %v2797 = vmul.f32 %v2795, %v233
    %v2798 = vadd.f32 %v2796, 1e-12
    %v2799 = vadd.f32 %v2797, 1e-12
    %v2800 = vrsqrt.pop %v2798
    %v2801 = vrsqrt.pop %v2799
    %v2802 = vmul.f32 %v2788, %v2800
    %v2803 = vmul.f32 %v2789, %v2801
    %v2804 = vmul.f32 %v2802, %v2780
    %v2805 = vmul.f32 %v2803, %v2780
    %v2806 = vadd.f32 %v2804, %v2781
    %v2807 = vadd.f32 %v2805, %v2781
    %v2808 = vpack.c.bf16 %v2806, %v2806
    %v2809 = vpack.c.bf16 %v2807, %v2807
    %v2810 = vld [vmem:[#allocation11] sm:$0xf]
    %v2811 = vld [vmem:[#allocation11 + $0x4] sm:$0xf]
    %v2812 = vld [vmem:[#allocation11 + $0x8] sm:$0xf]
    %v2813 = vld [vmem:[#allocation11 + $0xc] sm:$0xf]
    %v2814 = vld [vmem:[#allocation11 + $0x10] sm:$0xf]
    %v2815 = vld [vmem:[#allocation11 + $0x14] sm:$0xf]
    %v2816 = vld [vmem:[#allocation11 + $0x18] sm:$0xf]
    %v2817 = vld [vmem:[#allocation11 + $0x1c] sm:$0xf]
    %v2818 = vld [vmem:[#allocation11 + $0x20] sm:$0xf]
    %v2819 = vld [vmem:[#allocation11 + $0x24] sm:$0xf]
    %v2820 = vld [vmem:[#allocation11 + $0x28] sm:$0xf]
    %v2821 = vld [vmem:[#allocation11 + $0x2c] sm:$0xf]
    %v2822 = vld [vmem:[#allocation11 + $0x30] sm:$0xf]
    %v2823 = vld [vmem:[#allocation11 + $0x34] sm:$0xf]
    %v2824 = vld [vmem:[#allocation11 + $0x38] sm:$0xf]
    %v2825 = vld [vmem:[#allocation11 + $0x3c] sm:$0xf]
    %v2826 = vld [vmem:[#allocation13 + $0x2] ss:$0 sm:$0xff]
    %v2829 = vunpack.c.l.b16 %v2808
    %v2830 = vunpack.c.l.b16 %v2809
    %v2831 = vrot.slane %v2830, 7
    %vm2832 = vcmask 1041409
    %v2833 = vsel %vm2832, %v2831, %v2829
    %v2834 = vpack.c.b16 %v2833, %v2833
    %v2852 = vunpack.c.l.b16 %v2810
    %v2853 = vunpack.c.l.b16 %v2811
    %v2854 = vunpack.c.l.b16 %v2812
    %v2855 = vunpack.c.l.b16 %v2813
    %v2856 = vunpack.c.l.b16 %v2814
    %v2857 = vunpack.c.l.b16 %v2815
    %v2858 = vunpack.c.l.b16 %v2816
    %v2859 = vunpack.c.l.b16 %v2817
    %v2860 = vunpack.c.l.b16 %v2818
    %v2861 = vunpack.c.l.b16 %v2819
    %v2862 = vunpack.c.l.b16 %v2820
    %v2863 = vunpack.c.l.b16 %v2821
    %v2864 = vunpack.c.l.b16 %v2822
    %v2865 = vunpack.c.l.b16 %v2823
    %v2866 = vunpack.c.l.b16 %v2824
    %v2867 = vunpack.c.l.b16 %v2825
    %v2868 = vpack.c.b16 %v2853, %v2852
    %v2869 = vpack.c.b16 %v2855, %v2854
    %v2870 = vpack.c.b16 %v2857, %v2856
    %v2871 = vpack.c.b16 %v2859, %v2858
    %v2872 = vpack.c.b16 %v2861, %v2860
    %v2873 = vpack.c.b16 %v2863, %v2862
    %v2874 = vpack.c.b16 %v2865, %v2864
    %v2875 = vpack.c.b16 %v2867, %v2866
    %2884 = vmatprep.subr.bf16.mxu0 0
    %2885 = vmatpush1.bf16.msra.mxu0 %v2868
    %2886 = vmatprep.subr.bf16.mxu0 0
    %2887 = vmatpush1.bf16.msra.mxu0 %v2869
    %2888 = vmatprep.subr.bf16.mxu0 0
    %2889 = vmatpush1.bf16.msra.mxu0 %v2870
    %2890 = vmatprep.subr.bf16.mxu0 0
    %2891 = vmatpush1.bf16.msra.mxu0 %v2871
    %2892 = vmatprep.subr.bf16.mxu0 0
    %2893 = vmatpush1.bf16.msra.mxu0 %v2872
    %2894 = vmatprep.subr.bf16.mxu0 0
    %2895 = vmatpush1.bf16.msra.mxu0 %v2873
    %2896 = vmatprep.subr.bf16.mxu0 0
    %2897 = vmatpush1.bf16.msra.mxu0 %v2874
    %2898 = vmatprep.subr.bf16.mxu0 0
    %2899 = vmatpush1.bf16.msra.mxu0 %v2875
    %2900 = vmatprep.subr.bf16.mxu0 0
    %2901 = vmatpush1.bf16.msra.mxu0 0
    %2902 = vmatprep.subr.bf16.mxu0 0
    %2903 = vmatpush1.bf16.msra.mxu0 0
    %2904 = vmatprep.subr.bf16.mxu0 0
    %2905 = vmatpush1.bf16.msra.mxu0 0
    %2906 = vmatprep.subr.bf16.mxu0 0
    %2907 = vmatpush1.bf16.msra.mxu0 0
    %2908 = vmatprep.subr.bf16.mxu0 0
    %2909 = vmatpush1.bf16.msra.mxu0 0
    %2910 = vmatprep.subr.bf16.mxu0 0
    %2911 = vmatpush1.bf16.msra.mxu0 0
    %2912 = vmatprep.subr.bf16.mxu0 0
    %2913 = vmatpush1.bf16.msra.mxu0 0
    %2914 = vmatprep.subr.bf16.mxu0 0
    %2915 = vmatpush1.bf16.msra.mxu0 0
    %2916 = vmatprep.mubr.bf16.mxu0 0
    %2917 = vmatmul.mubr.bf16.gmra.mrb[0].mxu0 %v2834
    %v2918 = vpop.f32.mrb[0].mxu0
    %v2919 = vadd.f32 %v2826, %v2918
    %v2920 = vpop.f32.mrb[0].mxu0
    %v2921 = vpop.f32.mrb[0].mxu0
    %v2922 = vpop.f32.mrb[0].mxu0
    %2923 = vdwg.mxu0
    %2924 = vst [vmem:[#allocation14] sm:$0x3] %v2919
    // Predicated region
    $region70: #{bert_classifier_forward.1} parent=1 // pred_check
      _
    $region71: #{bert_classifier_forward.1} parent=1 // pred_check_branch
      %2926 = sbr.rel (0) target = $region73
    $region72: #{bert_classifier_forward.1} parent=1 // pred_region
      %s2928 = ssub.s32 32, 32
      %2929 = vsyncadd [#allocation4], %s2928
      %s2931 = sshll.u32 [#allocation14], 4
      %s2932 = int_to_ptr.vmem [resolvable:$true] %s2931
      %2934 = dma.vmem_to_hbm [thread:$0]  %s2932, 32, %s10, [#allocation4]
    $region73: #{bert_classifier_forward.1} parent=1 // pred_fallthru
      _
    // Predicated region
    $region74: #{bert_classifier_forward.1} parent=1 // pred_check
      _
    $region75: #{bert_classifier_forward.1} parent=1 // pred_check_branch
      %2936 = sbr.rel (0) target = $region77
    $region76: #{bert_classifier_forward.1} parent=1 // pred_region
      %2937 = dma.done [#allocation4], 32
    $region77: #{bert_classifier_forward.1} parent=1 // pred_fallthru
      _
    %2938 = vsyncpa [#allocation3], 1
    %2939 = vsyncpa [#allocation6], 1
    %2940 = vsyncpa [#allocation9], 1
    %2941 = vsyncpa [#allocation12], 1
    %2942 = vsyncpa [#allocation4], 1

</llo_original>
